<compile_context>
chip_gen: v7x
topology: tpu7x:2x2x1
jax: 0.10.0
libtpu: 0.0.40
codegen_flags: <defaults>
</compile_context>

<pallas_src>
import jax
import jax.numpy as jnp
from jax.experimental import pallas as pl
from jax.experimental.pallas import tpu as pltpu


def _one_conv_fc_kernel(x_ref, wconv_ref, wfc_ref, bias_ref, out_ref):
    # x_ref:     (TB, C, HW)  VMEM   batch tile, NCHW order (pixel = lane axis)
    # wconv_ref: (1, C)       VMEM   1x1-conv weight, lane-dense row
    # wfc_ref:   (1, HW)      VMEM   fc weight, lane-dense row
    # bias_ref:  (1,)         SMEM   folded bias: bconv*sum(wfc) + bfc
    # out_ref:   (TB, 1)      VMEM   per-step output block
    x = x_ref[...]                                              # (TB, C, HW)
    wfc = wfc_ref[...]                                          # (1, HW)

    # Pixel reduction on the lane axis: s[b, c] = sum_p x[b, c, p] * wfc[p]
    s = jnp.sum(x * wfc[:, None, :], axis=-1)                   # (TB, C)
    # Channel reduction with the 1x1-conv weight.
    val = jnp.sum(s * wconv_ref[...], axis=-1, keepdims=True)   # (TB, 1)

    out_ref[...] = (val + bias_ref[0]).astype(out_ref.dtype)


def one_conv_fc(x_nchw, w_conv, b_conv, w_fc, b_fc, *, batch_block=None):
    """x_nchw: (B, C, H, W); returns (B, 1), matching the PyTorch module."""
    B, C, H, W = x_nchw.shape
    HW = H * W

    # Free reshape: NCHW -> (B, C, HW).  No transpose, no extra HBM pass.
    x = x_nchw.reshape(B, C, HW).astype(jnp.float32)
    wconv_row = w_conv.reshape(1, C).astype(jnp.float32)          # lane-dense
    wfc_row = w_fc.reshape(1, HW).astype(jnp.float32)             # lane-dense
    # Fold the conv bias through the fc into a single scalar.
    bias_total = (b_conv.reshape(()) * jnp.sum(w_fc) +
                  b_fc.reshape(())).reshape(1).astype(jnp.float32)

    # Batch tile: whole batch for small B; cap at 4 so the double-buffered
    # input (~4.3 MiB per batch element, lane-padded) stays well inside VMEM
    # on every generation (v7x has only 64 MiB per TC).
    if batch_block is None:
        batch_block = min(B, 4)
    TB = batch_block
    grid = (pl.cdiv(B, TB),)

    return pl.pallas_call(
        _one_conv_fc_kernel,
        out_shape=jax.ShapeDtypeStruct((B, 1), jnp.float32),
        grid=grid,
        in_specs=[
            pl.BlockSpec((TB, C, HW), lambda b: (b, 0, 0)),        # x tile
            pl.BlockSpec((1, C), lambda b: (0, 0)),                # conv weight
            pl.BlockSpec((1, HW), lambda b: (0, 0)),               # fc weight
            pl.BlockSpec(memory_space=pltpu.MemorySpace.SMEM),     # folded bias
        ],
        out_specs=pl.BlockSpec((TB, 1), lambda b: (b, 0)),         # per-step out
        compiler_params=pltpu.CompilerParams(
            dimension_semantics=("parallel",),        # megacore-shard the batch
            vmem_limit_bytes=48 * 1024 * 1024,        # TB=4 double-buffered fits
        ),
    )(x, wconv_row, wfc_row, bias_total)


def one_conv_fc_reference(x_nchw, w_conv, b_conv, w_fc, b_fc):
    """Pure-JAX reference mirroring the PyTorch forward exactly."""
    B = x_nchw.shape[0]
    conv = jnp.einsum('bchw,c->bhw', x_nchw, w_conv) + b_conv   # (B, H, W)
    flat = conv.reshape(B, -1)                                  # (B, H*W)
    return flat @ w_fc.reshape(-1, 1) + b_fc                    # (B, 1)


if __name__ == "__main__":
    # Shapes fixed by the module definition: in_channels=192, fc expects 52*52.
    B, C, H, W = 2, 192, 52, 52

    key = jax.random.PRNGKey(0)
    kx, kwc, kbc, kwf, kbf = jax.random.split(key, 5)

    x = jax.random.normal(kx, (B, C, H, W), dtype=jnp.float32)
    # Conv2d(192, 1, kernel_size=1): weight (1, 192, 1, 1) -> (C,), bias (1,)
    w_conv = jax.random.normal(kwc, (C,), dtype=jnp.float32) * 0.05
    b_conv = jax.random.normal(kbc, (1,), dtype=jnp.float32) * 0.05
    # Linear(52*52, 1): weight (1, 2704) -> (H*W,), bias (1,)
    w_fc = jax.random.normal(kwf, (H * W,), dtype=jnp.float32) * 0.02
    b_fc = jax.random.normal(kbf, (1,), dtype=jnp.float32) * 0.02

    out = one_conv_fc(x, w_conv, b_conv, w_fc, b_fc)
    out = jax.block_until_ready(out)

    ref = one_conv_fc_reference(x, w_conv, b_conv, w_fc, b_fc)
    assert out.shape == (B, 1), out.shape
    assert jnp.allclose(out, ref, rtol=1e-3, atol=1e-3), (out, ref)

    print("KERNEL_OK")
</pallas_src>

<mosaic_0001>
module attributes {stable_mosaic.version = 11 : i64} {
  func.func @_one_conv_fc_kernel(%arg0: i32, %arg1: memref<2x192x2704xf32, #tpu.memory_space<vmem>>, %arg2: memref<1x192xf32, #tpu.memory_space<vmem>>, %arg3: memref<1x2704xf32, #tpu.memory_space<vmem>>, %arg4: memref<1xf32, #tpu.memory_space<smem>>, %arg5: memref<2x1xf32, #tpu.memory_space<vmem>>) attributes {dimension_semantics = [#tpu.dimension_semantics<parallel>], iteration_bounds = array<i64: 1>, scalar_prefetch = 0 : i64, scratch_operands = 0 : i64, tpu.core_type = #tpu.core_type<tc>, window_params = [{transform_indices = @transform_0, window_bounds = array<i64: 2, 192, 2704>}, {pipeline_mode = #tpu.pipeline_mode<synchronous>, transform_indices = @transform_1, window_bounds = array<i64: 1, 192>}, {pipeline_mode = #tpu.pipeline_mode<synchronous>, transform_indices = @transform_2, window_bounds = array<i64: 1, 2704>}, {transform_indices = @transform_3, window_bounds = array<i64: 1>}, {transform_indices = @transform_4, window_bounds = array<i64: 2, 1>}]} {
    %c0 = arith.constant 0 : index
    %c0_0 = arith.constant 0 : index
    %c0_1 = arith.constant 0 : index
    %0 = vector.load %arg1[%c0, %c0_0, %c0_1] : memref<2x192x2704xf32, #tpu.memory_space<vmem>>, vector<2x192x2704xf32>
    %c0_2 = arith.constant 0 : index
    %c0_3 = arith.constant 0 : index
    %1 = vector.load %arg3[%c0_2, %c0_3] : memref<1x2704xf32, #tpu.memory_space<vmem>>, vector<1x2704xf32>
    %2 = vector.shape_cast %1 : vector<1x2704xf32> to vector<1x1x2704xf32>
    %3 = vector.broadcast %2 : vector<1x1x2704xf32> to vector<2x192x2704xf32>
    %4 = arith.mulf %0, %3 : vector<2x192x2704xf32>
    %cst = arith.constant dense<0.000000e+00> : vector<2x192xf32>
    %5 = vector.multi_reduction <add>, %4, %cst [2] : vector<2x192x2704xf32> to vector<2x192xf32>
    %c0_4 = arith.constant 0 : index
    %c0_5 = arith.constant 0 : index
    %6 = vector.load %arg2[%c0_4, %c0_5] : memref<1x192xf32, #tpu.memory_space<vmem>>, vector<1x192xf32>
    %7 = vector.broadcast %6 : vector<1x192xf32> to vector<2x192xf32>
    %8 = arith.mulf %5, %7 : vector<2x192xf32>
    %cst_6 = arith.constant dense<0.000000e+00> : vector<2xf32>
    %9 = vector.multi_reduction <add>, %8, %cst_6 [1] : vector<2x192xf32> to vector<2xf32>
    %10 = vector.shape_cast %9 : vector<2xf32> to vector<2x1xf32>
    %c0_7 = arith.constant 0 : index
    %11 = memref.load %arg4[%c0_7] : memref<1xf32, #tpu.memory_space<smem>>
    %12 = vector.broadcast %11 : f32 to vector<2x1xf32>
    %13 = arith.addf %10, %12 : vector<2x1xf32>
    %c0_8 = arith.constant 0 : index
    %c0_9 = arith.constant 0 : index
    %14 = vector.load %arg5[%c0_8, %c0_9] : memref<2x1xf32, #tpu.memory_space<vmem>>, vector<2x1xf32>
    tpu.vector_store %arg5[%c0_8, %c0_9], %13 {strides = array<i32>} : memref<2x1xf32, #tpu.memory_space<vmem>>, vector<2x1xf32>,
    return
  }
  func.func @transform_0(%arg0: i32) -> (i32, i32, i32) {
    %c0_i32 = arith.constant 0 : i32
    %c0_i32_0 = arith.constant 0 : i32
    %c0_i32_1 = arith.constant 0 : i32
    return %arg0, %c0_i32, %c0_i32_0 : i32, i32, i32
  }
  func.func @transform_1(%arg0: i32) -> (i32, i32) {
    %c0_i32 = arith.constant 0 : i32
    %c0_i32_0 = arith.constant 0 : i32
    %c0_i32_1 = arith.constant 0 : i32
    return %c0_i32, %c0_i32_0 : i32, i32
  }
  func.func @transform_2(%arg0: i32) -> (i32, i32) {
    %c0_i32 = arith.constant 0 : i32
    %c0_i32_0 = arith.constant 0 : i32
    %c0_i32_1 = arith.constant 0 : i32
    return %c0_i32, %c0_i32_0 : i32, i32
  }
  func.func @transform_3(%arg0: i32) -> i32 {
    %c0_i32 = arith.constant 0 : i32
    %c0_i32_0 = arith.constant 0 : i32
    return %c0_i32 : i32
  }
  func.func @transform_4(%arg0: i32) -> (i32, i32) {
    %c0_i32 = arith.constant 0 : i32
    %c0_i32_0 = arith.constant 0 : i32
    return %arg0, %c0_i32 : i32, i32
  }
}

</mosaic_0001>

<llo_original>
// kernel: tpu_custom_call.1
$region0: #{tpu_custom_call.1}
  #allocation0 [shape = 'u32[]', space=smem, size = 0x4, offset = 0x4, fixed_abs, tag = 'smem constant byte address 0x4 - core index']
  #allocation1 [shape = 'u32[144,128]{1,0:T(1,128)}', space=vmem, size = 0x12000, scoped, tag = 'internal scratch']
  #allocation2 [shape = 'f32[1]{0:T(128)S(6)}', space=smem, size = 0x200, scoped, tag = 'scoped memory for tpu_custom_call.1']
  %s0 = inlined_call_operand.hbm [shape: f32[2,192,2704], index: 0, kind: input, shape index: {}]
  %s1 = inlined_call_operand.hbm [shape: f32[1,192], index: 1, kind: input, shape index: {}]
  %s2 = inlined_call_operand.hbm [shape: f32[1,2704], index: 2, kind: input, shape index: {}]
  %s3 = inlined_call_operand.<no memory space> [shape: f32[1], index: 3, kind: input, shape index: {}]
  %s4 = inlined_call_operand.vmem [shape: f32[2,1], index: 4, kind: output, shape index: {}]
  %s5 = sld [smem:[#allocation0]]
  $region38: #{tpu_custom_call.1} parent=0
    _
  %s7 = ssub.s32 1, %s5
  %s8 = scalar_select 0, %s7, %s5
  %9 = sst [smem:[#allocation2]] %s3
  $region1: #{tpu_custom_call.1} parent=0
    #allocation3 [shape = 'u8[4325376]{0}', space=vmem, size = 0x420000, scoped, tag = 'input window, operand 0, single buffered']
    #allocation4 [shape = 's32[1]{0}', space=sflag, size = 0x4, scoped, tag = 'scoped memory for tpu_custom_call.1']
    #allocation5 [shape = 'u8[1024]{0}', space=vmem, size = 0x400, scoped, tag = 'input window, operand 1, single buffered']
    #allocation6 [shape = 's32[1]{0}', space=sflag, size = 0x4, scoped, tag = 'scoped memory for tpu_custom_call.1']
    #allocation7 [shape = 'u8[11264]{0}', space=vmem, size = 0x2c00, scoped, tag = 'input window, operand 2, single buffered']
    %10 = vsyncpa [#allocation4], 0
    %11 = vsyncpa [#allocation6], 0
    // Predicated region
    $region2: #{tpu_custom_call.1} parent=1 // pred_check
      _
    $region3: #{tpu_custom_call.1} parent=1 // pred_check_branch
      %13 = sbr.rel (0) target = $region5
    $region4: #{tpu_custom_call.1} parent=1 // pred_region
      %s15 = ssub.s32 135168, 135168
      %16 = vsyncadd [#allocation4], %s15
      %s17 = sshll.u32 [#allocation3], 4
      %s18 = int_to_ptr.vmem [resolvable:$true] %s17
      %23 = dma.hbm_to_vmem [thread:$0]  %s0, 135168, %s18, [#allocation4], 2816, 2816, 176
    $region5: #{tpu_custom_call.1} parent=1 // pred_fallthru
      _
    // Predicated region
    $region6: #{tpu_custom_call.1} parent=1 // pred_check
      _
    $region7: #{tpu_custom_call.1} parent=1 // pred_check_branch
      %25 = sbr.rel (0) target = $region9
    $region8: #{tpu_custom_call.1} parent=1 // pred_region
      %s27 = ssub.s32 32, 32
      %28 = vsyncadd [#allocation6], %s27
      %s30 = sshll.u32 [#allocation5], 4
      %s31 = int_to_ptr.vmem [resolvable:$true] %s30
      %33 = dma.hbm_to_vmem [thread:$0]  %s1, 32, %s31, [#allocation6]
    $region9: #{tpu_custom_call.1} parent=1 // pred_fallthru
      _
    // Predicated region
    $region10: #{tpu_custom_call.1} parent=1 // pred_check
      _
    $region11: #{tpu_custom_call.1} parent=1 // pred_check_branch
      %35 = sbr.rel (0) target = $region13
    $region12: #{tpu_custom_call.1} parent=1 // pred_region
      %s37 = ssub.s32 352, 352
      %38 = vsyncadd [#allocation6], %s37
      %s40 = sshll.u32 [#allocation7], 4
      %s41 = int_to_ptr.vmem [resolvable:$true] %s40
      %43 = dma.hbm_to_vmem [thread:$0]  %s2, 352, %s41, [#allocation6]
    $region13: #{tpu_custom_call.1} parent=1 // pred_fallthru
      _
    // Predicated region
    $region14: #{tpu_custom_call.1} parent=1 // pred_check
      _
    $region15: #{tpu_custom_call.1} parent=1 // pred_check_branch
      %45 = sbr.rel (0) target = $region17
    $region16: #{tpu_custom_call.1} parent=1 // pred_region
      _
    $region17: #{tpu_custom_call.1} parent=1 // pred_fallthru
      _
    // Predicated region
    $region18: #{tpu_custom_call.1} parent=1 // pred_check
      _
    $region19: #{tpu_custom_call.1} parent=1 // pred_check_branch
      %47 = sbr.rel (0) target = $region21
    $region20: #{tpu_custom_call.1} parent=1 // pred_region
      %48 = dma.done [#allocation4], 135168
    $region21: #{tpu_custom_call.1} parent=1 // pred_fallthru
      _
    // Predicated region
    $region22: #{tpu_custom_call.1} parent=1 // pred_check
      _
    $region23: #{tpu_custom_call.1} parent=1 // pred_check_branch
      %50 = sbr.rel (0) target = $region25
    $region24: #{tpu_custom_call.1} parent=1 // pred_region
      %51 = dma.done [#allocation6], 32
    $region25: #{tpu_custom_call.1} parent=1 // pred_fallthru
      _
    // Predicated region
    $region26: #{tpu_custom_call.1} parent=1 // pred_check
      _
    $region27: #{tpu_custom_call.1} parent=1 // pred_check_branch
      %53 = sbr.rel (0) target = $region29
    $region28: #{tpu_custom_call.1} parent=1 // pred_region
      %54 = dma.done [#allocation6], 352
    $region29: #{tpu_custom_call.1} parent=1 // pred_fallthru
      _
    %v55 = vld [vmem:[#allocation3] sm:$0xff]
    %v56 = vld [vmem:[#allocation3 + $0x8] sm:$0xff]
    %v57 = vld [vmem:[#allocation3 + $0x10] sm:$0xff]
    %v58 = vld [vmem:[#allocation3 + $0x18] sm:$0xff]
    %v59 = vld [vmem:[#allocation3 + $0x20] sm:$0xff]
    %v60 = vld [vmem:[#allocation3 + $0x28] sm:$0xff]
    %v61 = vld [vmem:[#allocation3 + $0x30] sm:$0xff]
    %v62 = vld [vmem:[#allocation3 + $0x38] sm:$0xff]
    %v63 = vld [vmem:[#allocation3 + $0x40] sm:$0xff]
    %v64 = vld [vmem:[#allocation3 + $0x48] sm:$0xff]
    %v65 = vld [vmem:[#allocation3 + $0x50] sm:$0xff]
    %v66 = vld [vmem:[#allocation3 + $0x58] sm:$0xff]
    %v67 = vld [vmem:[#allocation3 + $0x60] sm:$0xff]
    %v68 = vld [vmem:[#allocation3 + $0x68] sm:$0xff]
    %v69 = vld [vmem:[#allocation3 + $0x70] sm:$0xff]
    %v70 = vld [vmem:[#allocation3 + $0x78] sm:$0xff]
    %v71 = vld [vmem:[#allocation3 + $0x80] sm:$0xff]
    %v72 = vld [vmem:[#allocation3 + $0x88] sm:$0xff]
    %v73 = vld [vmem:[#allocation3 + $0x90] sm:$0xff]
    %v74 = vld [vmem:[#allocation3 + $0x98] sm:$0xff]
    %v75 = vld [vmem:[#allocation3 + $0xa0] sm:$0xff]
    %v76 = vld [vmem:[#allocation3 + $0xa8] sm:$0xff]
    %v77 = vld [vmem:[#allocation3 + $0xb0] sm:$0xff]
    %v78 = vld [vmem:[#allocation3 + $0xb8] sm:$0xff]
    %v79 = vld [vmem:[#allocation3 + $0xc0] sm:$0xff]
    %v80 = vld [vmem:[#allocation3 + $0xc8] sm:$0xff]
    %v81 = vld [vmem:[#allocation3 + $0xd0] sm:$0xff]
    %v82 = vld [vmem:[#allocation3 + $0xd8] sm:$0xff]
    %v83 = vld [vmem:[#allocation3 + $0xe0] sm:$0xff]
    %v84 = vld [vmem:[#allocation3 + $0xe8] sm:$0xff]
    %v85 = vld [vmem:[#allocation3 + $0xf0] sm:$0xff]
    %v86 = vld [vmem:[#allocation3 + $0xf8] sm:$0xff]
    %v87 = vld [vmem:[#allocation3 + $0x100] sm:$0xff]
    %v88 = vld [vmem:[#allocation3 + $0x108] sm:$0xff]
    %v89 = vld [vmem:[#allocation3 + $0x110] sm:$0xff]
    %v90 = vld [vmem:[#allocation3 + $0x118] sm:$0xff]
    %v91 = vld [vmem:[#allocation3 + $0x120] sm:$0xff]
    %v92 = vld [vmem:[#allocation3 + $0x128] sm:$0xff]
    %v93 = vld [vmem:[#allocation3 + $0x130] sm:$0xff]
    %v94 = vld [vmem:[#allocation3 + $0x138] sm:$0xff]
    %v95 = vld [vmem:[#allocation3 + $0x140] sm:$0xff]
    %v96 = vld [vmem:[#allocation3 + $0x148] sm:$0xff]
    %v97 = vld [vmem:[#allocation3 + $0x150] sm:$0xff]
    %v98 = vld [vmem:[#allocation3 + $0x158] sm:$0xff]
    %v99 = vld [vmem:[#allocation3 + $0x160] sm:$0xff]
    %v100 = vld [vmem:[#allocation3 + $0x168] sm:$0xff]
    %v101 = vld [vmem:[#allocation3 + $0x170] sm:$0xff]
    %v102 = vld [vmem:[#allocation3 + $0x178] sm:$0xff]
    %v103 = vld [vmem:[#allocation3 + $0x180] sm:$0xff]
    %v104 = vld [vmem:[#allocation3 + $0x188] sm:$0xff]
    %v105 = vld [vmem:[#allocation3 + $0x190] sm:$0xff]
    %v106 = vld [vmem:[#allocation3 + $0x198] sm:$0xff]
    %v107 = vld [vmem:[#allocation3 + $0x1a0] sm:$0xff]
    %v108 = vld [vmem:[#allocation3 + $0x1a8] sm:$0xff]
    %v109 = vld [vmem:[#allocation3 + $0x1b0] sm:$0xff]
    %v110 = vld [vmem:[#allocation3 + $0x1b8] sm:$0xff]
    %v111 = vld [vmem:[#allocation3 + $0x1c0] sm:$0xff]
    %v112 = vld [vmem:[#allocation3 + $0x1c8] sm:$0xff]
    %v113 = vld [vmem:[#allocation3 + $0x1d0] sm:$0xff]
    %v114 = vld [vmem:[#allocation3 + $0x1d8] sm:$0xff]
    %v115 = vld [vmem:[#allocation3 + $0x1e0] sm:$0xff]
    %v116 = vld [vmem:[#allocation3 + $0x1e8] sm:$0xff]
    %v117 = vld [vmem:[#allocation3 + $0x1f0] sm:$0xff]
    %v118 = vld [vmem:[#allocation3 + $0x1f8] sm:$0xff]
    %v119 = vld [vmem:[#allocation3 + $0x200] sm:$0xff]
    %v120 = vld [vmem:[#allocation3 + $0x208] sm:$0xff]
    %v121 = vld [vmem:[#allocation3 + $0x210] sm:$0xff]
    %v122 = vld [vmem:[#allocation3 + $0x218] sm:$0xff]
    %v123 = vld [vmem:[#allocation3 + $0x220] sm:$0xff]
    %v124 = vld [vmem:[#allocation3 + $0x228] sm:$0xff]
    %v125 = vld [vmem:[#allocation3 + $0x230] sm:$0xff]
    %v126 = vld [vmem:[#allocation3 + $0x238] sm:$0xff]
    %v127 = vld [vmem:[#allocation3 + $0x240] sm:$0xff]
    %v128 = vld [vmem:[#allocation3 + $0x248] sm:$0xff]
    %v129 = vld [vmem:[#allocation3 + $0x250] sm:$0xff]
    %v130 = vld [vmem:[#allocation3 + $0x258] sm:$0xff]
    %v131 = vld [vmem:[#allocation3 + $0x260] sm:$0xff]
    %v132 = vld [vmem:[#allocation3 + $0x268] sm:$0xff]
    %v133 = vld [vmem:[#allocation3 + $0x270] sm:$0xff]
    %v134 = vld [vmem:[#allocation3 + $0x278] sm:$0xff]
    %v135 = vld [vmem:[#allocation3 + $0x280] sm:$0xff]
    %v136 = vld [vmem:[#allocation3 + $0x288] sm:$0xff]
    %v137 = vld [vmem:[#allocation3 + $0x290] sm:$0xff]
    %v138 = vld [vmem:[#allocation3 + $0x298] sm:$0xff]
    %v139 = vld [vmem:[#allocation3 + $0x2a0] sm:$0xff]
    %v140 = vld [vmem:[#allocation3 + $0x2a8] sm:$0xff]
    %v141 = vld [vmem:[#allocation3 + $0x2b0] sm:$0xff]
    %v142 = vld [vmem:[#allocation3 + $0x2b8] sm:$0xff]
    %v143 = vld [vmem:[#allocation3 + $0x2c0] sm:$0xff]
    %v144 = vld [vmem:[#allocation3 + $0x2c8] sm:$0xff]
    %v145 = vld [vmem:[#allocation3 + $0x2d0] sm:$0xff]
    %v146 = vld [vmem:[#allocation3 + $0x2d8] sm:$0xff]
    %v147 = vld [vmem:[#allocation3 + $0x2e0] sm:$0xff]
    %v148 = vld [vmem:[#allocation3 + $0x2e8] sm:$0xff]
    %v149 = vld [vmem:[#allocation3 + $0x2f0] sm:$0xff]
    %v150 = vld [vmem:[#allocation3 + $0x2f8] sm:$0xff]
    %v151 = vld [vmem:[#allocation3 + $0x300] sm:$0xff]
    %v152 = vld [vmem:[#allocation3 + $0x308] sm:$0xff]
    %v153 = vld [vmem:[#allocation3 + $0x310] sm:$0xff]
    %v154 = vld [vmem:[#allocation3 + $0x318] sm:$0xff]
    %v155 = vld [vmem:[#allocation3 + $0x320] sm:$0xff]
    %v156 = vld [vmem:[#allocation3 + $0x328] sm:$0xff]
    %v157 = vld [vmem:[#allocation3 + $0x330] sm:$0xff]
    %v158 = vld [vmem:[#allocation3 + $0x338] sm:$0xff]
    %v159 = vld [vmem:[#allocation3 + $0x340] sm:$0xff]
    %v160 = vld [vmem:[#allocation3 + $0x348] sm:$0xff]
    %v161 = vld [vmem:[#allocation3 + $0x350] sm:$0xff]
    %v162 = vld [vmem:[#allocation3 + $0x358] sm:$0xff]
    %v163 = vld [vmem:[#allocation3 + $0x360] sm:$0xff]
    %v164 = vld [vmem:[#allocation3 + $0x368] sm:$0xff]
    %v165 = vld [vmem:[#allocation3 + $0x370] sm:$0xff]
    %v166 = vld [vmem:[#allocation3 + $0x378] sm:$0xff]
    %v167 = vld [vmem:[#allocation3 + $0x380] sm:$0xff]
    %v168 = vld [vmem:[#allocation3 + $0x388] sm:$0xff]
    %v169 = vld [vmem:[#allocation3 + $0x390] sm:$0xff]
    %v170 = vld [vmem:[#allocation3 + $0x398] sm:$0xff]
    %v171 = vld [vmem:[#allocation3 + $0x3a0] sm:$0xff]
    %v172 = vld [vmem:[#allocation3 + $0x3a8] sm:$0xff]
    %v173 = vld [vmem:[#allocation3 + $0x3b0] sm:$0xff]
    %v174 = vld [vmem:[#allocation3 + $0x3b8] sm:$0xff]
    %v175 = vld [vmem:[#allocation3 + $0x3c0] sm:$0xff]
    %v176 = vld [vmem:[#allocation3 + $0x3c8] sm:$0xff]
    %v177 = vld [vmem:[#allocation3 + $0x3d0] sm:$0xff]
    %v178 = vld [vmem:[#allocation3 + $0x3d8] sm:$0xff]
    %v179 = vld [vmem:[#allocation3 + $0x3e0] sm:$0xff]
    %v180 = vld [vmem:[#allocation3 + $0x3e8] sm:$0xff]
    %v181 = vld [vmem:[#allocation3 + $0x3f0] sm:$0xff]
    %v182 = vld [vmem:[#allocation3 + $0x3f8] sm:$0xff]
    %v183 = vld [vmem:[#allocation3 + $0x400] sm:$0xff]
    %v184 = vld [vmem:[#allocation3 + $0x408] sm:$0xff]
    %v185 = vld [vmem:[#allocation3 + $0x410] sm:$0xff]
    %v186 = vld [vmem:[#allocation3 + $0x418] sm:$0xff]
    %v187 = vld [vmem:[#allocation3 + $0x420] sm:$0xff]
    %v188 = vld [vmem:[#allocation3 + $0x428] sm:$0xff]
    %v189 = vld [vmem:[#allocation3 + $0x430] sm:$0xff]
    %v190 = vld [vmem:[#allocation3 + $0x438] sm:$0xff]
    %v191 = vld [vmem:[#allocation3 + $0x440] sm:$0xff]
    %v192 = vld [vmem:[#allocation3 + $0x448] sm:$0xff]
    %v193 = vld [vmem:[#allocation3 + $0x450] sm:$0xff]
    %v194 = vld [vmem:[#allocation3 + $0x458] sm:$0xff]
    %v195 = vld [vmem:[#allocation3 + $0x460] sm:$0xff]
    %v196 = vld [vmem:[#allocation3 + $0x468] sm:$0xff]
    %v197 = vld [vmem:[#allocation3 + $0x470] sm:$0xff]
    %v198 = vld [vmem:[#allocation3 + $0x478] sm:$0xff]
    %v199 = vld [vmem:[#allocation3 + $0x480] sm:$0xff]
    %v200 = vld [vmem:[#allocation3 + $0x488] sm:$0xff]
    %v201 = vld [vmem:[#allocation3 + $0x490] sm:$0xff]
    %v202 = vld [vmem:[#allocation3 + $0x498] sm:$0xff]
    %v203 = vld [vmem:[#allocation3 + $0x4a0] sm:$0xff]
    %v204 = vld [vmem:[#allocation3 + $0x4a8] sm:$0xff]
    %v205 = vld [vmem:[#allocation3 + $0x4b0] sm:$0xff]
    %v206 = vld [vmem:[#allocation3 + $0x4b8] sm:$0xff]
    %v207 = vld [vmem:[#allocation3 + $0x4c0] sm:$0xff]
    %v208 = vld [vmem:[#allocation3 + $0x4c8] sm:$0xff]
    %v209 = vld [vmem:[#allocation3 + $0x4d0] sm:$0xff]
    %v210 = vld [vmem:[#allocation3 + $0x4d8] sm:$0xff]
    %v211 = vld [vmem:[#allocation3 + $0x4e0] sm:$0xff]
    %v212 = vld [vmem:[#allocation3 + $0x4e8] sm:$0xff]
    %v213 = vld [vmem:[#allocation3 + $0x4f0] sm:$0xff]
    %v214 = vld [vmem:[#allocation3 + $0x4f8] sm:$0xff]
    %v215 = vld [vmem:[#allocation3 + $0x500] sm:$0xff]
    %v216 = vld [vmem:[#allocation3 + $0x508] sm:$0xff]
    %v217 = vld [vmem:[#allocation3 + $0x510] sm:$0xff]
    %v218 = vld [vmem:[#allocation3 + $0x518] sm:$0xff]
    %v219 = vld [vmem:[#allocation3 + $0x520] sm:$0xff]
    %v220 = vld [vmem:[#allocation3 + $0x528] sm:$0xff]
    %v221 = vld [vmem:[#allocation3 + $0x530] sm:$0xff]
    %v222 = vld [vmem:[#allocation3 + $0x538] sm:$0xff]
    %v223 = vld [vmem:[#allocation3 + $0x540] sm:$0xff]
    %v224 = vld [vmem:[#allocation3 + $0x548] sm:$0xff]
    %v225 = vld [vmem:[#allocation3 + $0x550] sm:$0xff]
    %v226 = vld [vmem:[#allocation3 + $0x558] sm:$0xff]
    %v227 = vld [vmem:[#allocation3 + $0x560] sm:$0xff]
    %v228 = vld [vmem:[#allocation3 + $0x568] sm:$0xff]
    %v229 = vld [vmem:[#allocation3 + $0x570] sm:$0xff]
    %v230 = vld [vmem:[#allocation3 + $0x578] sm:$0xff]
    %v231 = vld [vmem:[#allocation3 + $0x580] sm:$0xff]
    %v232 = vld [vmem:[#allocation3 + $0x588] sm:$0xff]
    %v233 = vld [vmem:[#allocation3 + $0x590] sm:$0xff]
    %v234 = vld [vmem:[#allocation3 + $0x598] sm:$0xff]
    %v235 = vld [vmem:[#allocation3 + $0x5a0] sm:$0xff]
    %v236 = vld [vmem:[#allocation3 + $0x5a8] sm:$0xff]
    %v237 = vld [vmem:[#allocation3 + $0x5b0] sm:$0xff]
    %v238 = vld [vmem:[#allocation3 + $0x5b8] sm:$0xff]
    %v239 = vld [vmem:[#allocation3 + $0x5c0] sm:$0xff]
    %v240 = vld [vmem:[#allocation3 + $0x5c8] sm:$0xff]
    %v241 = vld [vmem:[#allocation3 + $0x5d0] sm:$0xff]
    %v242 = vld [vmem:[#allocation3 + $0x5d8] sm:$0xff]
    %v243 = vld [vmem:[#allocation3 + $0x5e0] sm:$0xff]
    %v244 = vld [vmem:[#allocation3 + $0x5e8] sm:$0xff]
    %v245 = vld [vmem:[#allocation3 + $0x5f0] sm:$0xff]
    %v246 = vld [vmem:[#allocation3 + $0x5f8] sm:$0xff]
    %v247 = vld [vmem:[#allocation3 + $0x600] sm:$0xff]
    %v248 = vld [vmem:[#allocation3 + $0x608] sm:$0xff]
    %v249 = vld [vmem:[#allocation3 + $0x610] sm:$0xff]
    %v250 = vld [vmem:[#allocation3 + $0x618] sm:$0xff]
    %v251 = vld [vmem:[#allocation3 + $0x620] sm:$0xff]
    %v252 = vld [vmem:[#allocation3 + $0x628] sm:$0xff]
    %v253 = vld [vmem:[#allocation3 + $0x630] sm:$0xff]
    %v254 = vld [vmem:[#allocation3 + $0x638] sm:$0xff]
    %v255 = vld [vmem:[#allocation3 + $0x640] sm:$0xff]
    %v256 = vld [vmem:[#allocation3 + $0x648] sm:$0xff]
    %v257 = vld [vmem:[#allocation3 + $0x650] sm:$0xff]
    %v258 = vld [vmem:[#allocation3 + $0x658] sm:$0xff]
    %v259 = vld [vmem:[#allocation3 + $0x660] sm:$0xff]
    %v260 = vld [vmem:[#allocation3 + $0x668] sm:$0xff]
    %v261 = vld [vmem:[#allocation3 + $0x670] sm:$0xff]
    %v262 = vld [vmem:[#allocation3 + $0x678] sm:$0xff]
    %v263 = vld [vmem:[#allocation3 + $0x680] sm:$0xff]
    %v264 = vld [vmem:[#allocation3 + $0x688] sm:$0xff]
    %v265 = vld [vmem:[#allocation3 + $0x690] sm:$0xff]
    %v266 = vld [vmem:[#allocation3 + $0x698] sm:$0xff]
    %v267 = vld [vmem:[#allocation3 + $0x6a0] sm:$0xff]
    %v268 = vld [vmem:[#allocation3 + $0x6a8] sm:$0xff]
    %v269 = vld [vmem:[#allocation3 + $0x6b0] sm:$0xff]
    %v270 = vld [vmem:[#allocation3 + $0x6b8] sm:$0xff]
    %v271 = vld [vmem:[#allocation3 + $0x6c0] sm:$0xff]
    %v272 = vld [vmem:[#allocation3 + $0x6c8] sm:$0xff]
    %v273 = vld [vmem:[#allocation3 + $0x6d0] sm:$0xff]
    %v274 = vld [vmem:[#allocation3 + $0x6d8] sm:$0xff]
    %v275 = vld [vmem:[#allocation3 + $0x6e0] sm:$0xff]
    %v276 = vld [vmem:[#allocation3 + $0x6e8] sm:$0xff]
    %v277 = vld [vmem:[#allocation3 + $0x6f0] sm:$0xff]
    %v278 = vld [vmem:[#allocation3 + $0x6f8] sm:$0xff]
    %v279 = vld [vmem:[#allocation3 + $0x700] sm:$0xff]
    %v280 = vld [vmem:[#allocation3 + $0x708] sm:$0xff]
    %v281 = vld [vmem:[#allocation3 + $0x710] sm:$0xff]
    %v282 = vld [vmem:[#allocation3 + $0x718] sm:$0xff]
    %v283 = vld [vmem:[#allocation3 + $0x720] sm:$0xff]
    %v284 = vld [vmem:[#allocation3 + $0x728] sm:$0xff]
    %v285 = vld [vmem:[#allocation3 + $0x730] sm:$0xff]
    %v286 = vld [vmem:[#allocation3 + $0x738] sm:$0xff]
    %v287 = vld [vmem:[#allocation3 + $0x740] sm:$0xff]
    %v288 = vld [vmem:[#allocation3 + $0x748] sm:$0xff]
    %v289 = vld [vmem:[#allocation3 + $0x750] sm:$0xff]
    %v290 = vld [vmem:[#allocation3 + $0x758] sm:$0xff]
    %v291 = vld [vmem:[#allocation3 + $0x760] sm:$0xff]
    %v292 = vld [vmem:[#allocation3 + $0x768] sm:$0xff]
    %v293 = vld [vmem:[#allocation3 + $0x770] sm:$0xff]
    %v294 = vld [vmem:[#allocation3 + $0x778] sm:$0xff]
    %v295 = vld [vmem:[#allocation3 + $0x780] sm:$0xff]
    %v296 = vld [vmem:[#allocation3 + $0x788] sm:$0xff]
    %v297 = vld [vmem:[#allocation3 + $0x790] sm:$0xff]
    %v298 = vld [vmem:[#allocation3 + $0x798] sm:$0xff]
    %v299 = vld [vmem:[#allocation3 + $0x7a0] sm:$0xff]
    %v300 = vld [vmem:[#allocation3 + $0x7a8] sm:$0xff]
    %v301 = vld [vmem:[#allocation3 + $0x7b0] sm:$0xff]
    %v302 = vld [vmem:[#allocation3 + $0x7b8] sm:$0xff]
    %v303 = vld [vmem:[#allocation3 + $0x7c0] sm:$0xff]
    %v304 = vld [vmem:[#allocation3 + $0x7c8] sm:$0xff]
    %v305 = vld [vmem:[#allocation3 + $0x7d0] sm:$0xff]
    %v306 = vld [vmem:[#allocation3 + $0x7d8] sm:$0xff]
    %v307 = vld [vmem:[#allocation3 + $0x7e0] sm:$0xff]
    %v308 = vld [vmem:[#allocation3 + $0x7e8] sm:$0xff]
    %v309 = vld [vmem:[#allocation3 + $0x7f0] sm:$0xff]
    %v310 = vld [vmem:[#allocation3 + $0x7f8] sm:$0xff]
    %v311 = vld [vmem:[#allocation3 + $0x800] sm:$0xff]
    %v312 = vld [vmem:[#allocation3 + $0x808] sm:$0xff]
    %v313 = vld [vmem:[#allocation3 + $0x810] sm:$0xff]
    %v314 = vld [vmem:[#allocation3 + $0x818] sm:$0xff]
    %v315 = vld [vmem:[#allocation3 + $0x820] sm:$0xff]
    %v316 = vld [vmem:[#allocation3 + $0x828] sm:$0xff]
    %v317 = vld [vmem:[#allocation3 + $0x830] sm:$0xff]
    %v318 = vld [vmem:[#allocation3 + $0x838] sm:$0xff]
    %v319 = vld [vmem:[#allocation3 + $0x840] sm:$0xff]
    %v320 = vld [vmem:[#allocation3 + $0x848] sm:$0xff]
    %v321 = vld [vmem:[#allocation3 + $0x850] sm:$0xff]
    %v322 = vld [vmem:[#allocation3 + $0x858] sm:$0xff]
    %v323 = vld [vmem:[#allocation3 + $0x860] sm:$0xff]
    %v324 = vld [vmem:[#allocation3 + $0x868] sm:$0xff]
    %v325 = vld [vmem:[#allocation3 + $0x870] sm:$0xff]
    %v326 = vld [vmem:[#allocation3 + $0x878] sm:$0xff]
    %v327 = vld [vmem:[#allocation3 + $0x880] sm:$0xff]
    %v328 = vld [vmem:[#allocation3 + $0x888] sm:$0xff]
    %v329 = vld [vmem:[#allocation3 + $0x890] sm:$0xff]
    %v330 = vld [vmem:[#allocation3 + $0x898] sm:$0xff]
    %v331 = vld [vmem:[#allocation3 + $0x8a0] sm:$0xff]
    %v332 = vld [vmem:[#allocation3 + $0x8a8] sm:$0xff]
    %v333 = vld [vmem:[#allocation3 + $0x8b0] sm:$0xff]
    %v334 = vld [vmem:[#allocation3 + $0x8b8] sm:$0xff]
    %v335 = vld [vmem:[#allocation3 + $0x8c0] sm:$0xff]
    %v336 = vld [vmem:[#allocation3 + $0x8c8] sm:$0xff]
    %v337 = vld [vmem:[#allocation3 + $0x8d0] sm:$0xff]
    %v338 = vld [vmem:[#allocation3 + $0x8d8] sm:$0xff]
    %v339 = vld [vmem:[#allocation3 + $0x8e0] sm:$0xff]
    %v340 = vld [vmem:[#allocation3 + $0x8e8] sm:$0xff]
    %v341 = vld [vmem:[#allocation3 + $0x8f0] sm:$0xff]
    %v342 = vld [vmem:[#allocation3 + $0x8f8] sm:$0xff]
    %v343 = vld [vmem:[#allocation3 + $0x900] sm:$0xff]
    %v344 = vld [vmem:[#allocation3 + $0x908] sm:$0xff]
    %v345 = vld [vmem:[#allocation3 + $0x910] sm:$0xff]
    %v346 = vld [vmem:[#allocation3 + $0x918] sm:$0xff]
    %v347 = vld [vmem:[#allocation3 + $0x920] sm:$0xff]
    %v348 = vld [vmem:[#allocation3 + $0x928] sm:$0xff]
    %v349 = vld [vmem:[#allocation3 + $0x930] sm:$0xff]
    %v350 = vld [vmem:[#allocation3 + $0x938] sm:$0xff]
    %v351 = vld [vmem:[#allocation3 + $0x940] sm:$0xff]
    %v352 = vld [vmem:[#allocation3 + $0x948] sm:$0xff]
    %v353 = vld [vmem:[#allocation3 + $0x950] sm:$0xff]
    %v354 = vld [vmem:[#allocation3 + $0x958] sm:$0xff]
    %v355 = vld [vmem:[#allocation3 + $0x960] sm:$0xff]
    %v356 = vld [vmem:[#allocation3 + $0x968] sm:$0xff]
    %v357 = vld [vmem:[#allocation3 + $0x970] sm:$0xff]
    %v358 = vld [vmem:[#allocation3 + $0x978] sm:$0xff]
    %v359 = vld [vmem:[#allocation3 + $0x980] sm:$0xff]
    %v360 = vld [vmem:[#allocation3 + $0x988] sm:$0xff]
    %v361 = vld [vmem:[#allocation3 + $0x990] sm:$0xff]
    %v362 = vld [vmem:[#allocation3 + $0x998] sm:$0xff]
    %v363 = vld [vmem:[#allocation3 + $0x9a0] sm:$0xff]
    %v364 = vld [vmem:[#allocation3 + $0x9a8] sm:$0xff]
    %v365 = vld [vmem:[#allocation3 + $0x9b0] sm:$0xff]
    %v366 = vld [vmem:[#allocation3 + $0x9b8] sm:$0xff]
    %v367 = vld [vmem:[#allocation3 + $0x9c0] sm:$0xff]
    %v368 = vld [vmem:[#allocation3 + $0x9c8] sm:$0xff]
    %v369 = vld [vmem:[#allocation3 + $0x9d0] sm:$0xff]
    %v370 = vld [vmem:[#allocation3 + $0x9d8] sm:$0xff]
    %v371 = vld [vmem:[#allocation3 + $0x9e0] sm:$0xff]
    %v372 = vld [vmem:[#allocation3 + $0x9e8] sm:$0xff]
    %v373 = vld [vmem:[#allocation3 + $0x9f0] sm:$0xff]
    %v374 = vld [vmem:[#allocation3 + $0x9f8] sm:$0xff]
    %v375 = vld [vmem:[#allocation3 + $0xa00] sm:$0xff]
    %v376 = vld [vmem:[#allocation3 + $0xa08] sm:$0xff]
    %v377 = vld [vmem:[#allocation3 + $0xa10] sm:$0xff]
    %v378 = vld [vmem:[#allocation3 + $0xa18] sm:$0xff]
    %v379 = vld [vmem:[#allocation3 + $0xa20] sm:$0xff]
    %v380 = vld [vmem:[#allocation3 + $0xa28] sm:$0xff]
    %v381 = vld [vmem:[#allocation3 + $0xa30] sm:$0xff]
    %v382 = vld [vmem:[#allocation3 + $0xa38] sm:$0xff]
    %v383 = vld [vmem:[#allocation3 + $0xa40] sm:$0xff]
    %v384 = vld [vmem:[#allocation3 + $0xa48] sm:$0xff]
    %v385 = vld [vmem:[#allocation3 + $0xa50] sm:$0xff]
    %v386 = vld [vmem:[#allocation3 + $0xa58] sm:$0xff]
    %v387 = vld [vmem:[#allocation3 + $0xa60] sm:$0xff]
    %v388 = vld [vmem:[#allocation3 + $0xa68] sm:$0xff]
    %v389 = vld [vmem:[#allocation3 + $0xa70] sm:$0xff]
    %v390 = vld [vmem:[#allocation3 + $0xa78] sm:$0xff]
    %v391 = vld [vmem:[#allocation3 + $0xa80] sm:$0xff]
    %v392 = vld [vmem:[#allocation3 + $0xa88] sm:$0xff]
    %v393 = vld [vmem:[#allocation3 + $0xa90] sm:$0xff]
    %v394 = vld [vmem:[#allocation3 + $0xa98] sm:$0xff]
    %v395 = vld [vmem:[#allocation3 + $0xaa0] sm:$0xff]
    %v396 = vld [vmem:[#allocation3 + $0xaa8] sm:$0xff]
    %v397 = vld [vmem:[#allocation3 + $0xab0] sm:$0xff]
    %v398 = vld [vmem:[#allocation3 + $0xab8] sm:$0xff]
    %v399 = vld [vmem:[#allocation3 + $0xac0] sm:$0xff]
    %v400 = vld [vmem:[#allocation3 + $0xac8] sm:$0xff]
    %v401 = vld [vmem:[#allocation3 + $0xad0] sm:$0xff]
    %v402 = vld [vmem:[#allocation3 + $0xad8] sm:$0xff]
    %v403 = vld [vmem:[#allocation3 + $0xae0] sm:$0xff]
    %v404 = vld [vmem:[#allocation3 + $0xae8] sm:$0xff]
    %v405 = vld [vmem:[#allocation3 + $0xaf0] sm:$0xff]
    %v406 = vld [vmem:[#allocation3 + $0xaf8] sm:$0xff]
    %v407 = vld [vmem:[#allocation3 + $0xb00] sm:$0xff]
    %v408 = vld [vmem:[#allocation3 + $0xb08] sm:$0xff]
    %v409 = vld [vmem:[#allocation3 + $0xb10] sm:$0xff]
    %v410 = vld [vmem:[#allocation3 + $0xb18] sm:$0xff]
    %v411 = vld [vmem:[#allocation3 + $0xb20] sm:$0xff]
    %v412 = vld [vmem:[#allocation3 + $0xb28] sm:$0xff]
    %v413 = vld [vmem:[#allocation3 + $0xb30] sm:$0xff]
    %v414 = vld [vmem:[#allocation3 + $0xb38] sm:$0xff]
    %v415 = vld [vmem:[#allocation3 + $0xb40] sm:$0xff]
    %v416 = vld [vmem:[#allocation3 + $0xb48] sm:$0xff]
    %v417 = vld [vmem:[#allocation3 + $0xb50] sm:$0xff]
    %v418 = vld [vmem:[#allocation3 + $0xb58] sm:$0xff]
    %v419 = vld [vmem:[#allocation3 + $0xb60] sm:$0xff]
    %v420 = vld [vmem:[#allocation3 + $0xb68] sm:$0xff]
    %v421 = vld [vmem:[#allocation3 + $0xb70] sm:$0xff]
    %v422 = vld [vmem:[#allocation3 + $0xb78] sm:$0xff]
    %v423 = vld [vmem:[#allocation3 + $0xb80] sm:$0xff]
    %v424 = vld [vmem:[#allocation3 + $0xb88] sm:$0xff]
    %v425 = vld [vmem:[#allocation3 + $0xb90] sm:$0xff]
    %v426 = vld [vmem:[#allocation3 + $0xb98] sm:$0xff]
    %v427 = vld [vmem:[#allocation3 + $0xba0] sm:$0xff]
    %v428 = vld [vmem:[#allocation3 + $0xba8] sm:$0xff]
    %v429 = vld [vmem:[#allocation3 + $0xbb0] sm:$0xff]
    %v430 = vld [vmem:[#allocation3 + $0xbb8] sm:$0xff]
    %v431 = vld [vmem:[#allocation3 + $0xbc0] sm:$0xff]
    %v432 = vld [vmem:[#allocation3 + $0xbc8] sm:$0xff]
    %v433 = vld [vmem:[#allocation3 + $0xbd0] sm:$0xff]
    %v434 = vld [vmem:[#allocation3 + $0xbd8] sm:$0xff]
    %v435 = vld [vmem:[#allocation3 + $0xbe0] sm:$0xff]
    %v436 = vld [vmem:[#allocation3 + $0xbe8] sm:$0xff]
    %v437 = vld [vmem:[#allocation3 + $0xbf0] sm:$0xff]
    %v438 = vld [vmem:[#allocation3 + $0xbf8] sm:$0xff]
    %v439 = vld [vmem:[#allocation3 + $0xc00] sm:$0xff]
    %v440 = vld [vmem:[#allocation3 + $0xc08] sm:$0xff]
    %v441 = vld [vmem:[#allocation3 + $0xc10] sm:$0xff]
    %v442 = vld [vmem:[#allocation3 + $0xc18] sm:$0xff]
    %v443 = vld [vmem:[#allocation3 + $0xc20] sm:$0xff]
    %v444 = vld [vmem:[#allocation3 + $0xc28] sm:$0xff]
    %v445 = vld [vmem:[#allocation3 + $0xc30] sm:$0xff]
    %v446 = vld [vmem:[#allocation3 + $0xc38] sm:$0xff]
    %v447 = vld [vmem:[#allocation3 + $0xc40] sm:$0xff]
    %v448 = vld [vmem:[#allocation3 + $0xc48] sm:$0xff]
    %v449 = vld [vmem:[#allocation3 + $0xc50] sm:$0xff]
    %v450 = vld [vmem:[#allocation3 + $0xc58] sm:$0xff]
    %v451 = vld [vmem:[#allocation3 + $0xc60] sm:$0xff]
    %v452 = vld [vmem:[#allocation3 + $0xc68] sm:$0xff]
    %v453 = vld [vmem:[#allocation3 + $0xc70] sm:$0xff]
    %v454 = vld [vmem:[#allocation3 + $0xc78] sm:$0xff]
    %v455 = vld [vmem:[#allocation3 + $0xc80] sm:$0xff]
    %v456 = vld [vmem:[#allocation3 + $0xc88] sm:$0xff]
    %v457 = vld [vmem:[#allocation3 + $0xc90] sm:$0xff]
    %v458 = vld [vmem:[#allocation3 + $0xc98] sm:$0xff]
    %v459 = vld [vmem:[#allocation3 + $0xca0] sm:$0xff]
    %v460 = vld [vmem:[#allocation3 + $0xca8] sm:$0xff]
    %v461 = vld [vmem:[#allocation3 + $0xcb0] sm:$0xff]
    %v462 = vld [vmem:[#allocation3 + $0xcb8] sm:$0xff]
    %v463 = vld [vmem:[#allocation3 + $0xcc0] sm:$0xff]
    %v464 = vld [vmem:[#allocation3 + $0xcc8] sm:$0xff]
    %v465 = vld [vmem:[#allocation3 + $0xcd0] sm:$0xff]
    %v466 = vld [vmem:[#allocation3 + $0xcd8] sm:$0xff]
    %v467 = vld [vmem:[#allocation3 + $0xce0] sm:$0xff]
    %v468 = vld [vmem:[#allocation3 + $0xce8] sm:$0xff]
    %v469 = vld [vmem:[#allocation3 + $0xcf0] sm:$0xff]
    %v470 = vld [vmem:[#allocation3 + $0xcf8] sm:$0xff]
    %v471 = vld [vmem:[#allocation3 + $0xd00] sm:$0xff]
    %v472 = vld [vmem:[#allocation3 + $0xd08] sm:$0xff]
    %v473 = vld [vmem:[#allocation3 + $0xd10] sm:$0xff]
    %v474 = vld [vmem:[#allocation3 + $0xd18] sm:$0xff]
    %v475 = vld [vmem:[#allocation3 + $0xd20] sm:$0xff]
    %v476 = vld [vmem:[#allocation3 + $0xd28] sm:$0xff]
    %v477 = vld [vmem:[#allocation3 + $0xd30] sm:$0xff]
    %v478 = vld [vmem:[#allocation3 + $0xd38] sm:$0xff]
    %v479 = vld [vmem:[#allocation3 + $0xd40] sm:$0xff]
    %v480 = vld [vmem:[#allocation3 + $0xd48] sm:$0xff]
    %v481 = vld [vmem:[#allocation3 + $0xd50] sm:$0xff]
    %v482 = vld [vmem:[#allocation3 + $0xd58] sm:$0xff]
    %v483 = vld [vmem:[#allocation3 + $0xd60] sm:$0xff]
    %v484 = vld [vmem:[#allocation3 + $0xd68] sm:$0xff]
    %v485 = vld [vmem:[#allocation3 + $0xd70] sm:$0xff]
    %v486 = vld [vmem:[#allocation3 + $0xd78] sm:$0xff]
    %v487 = vld [vmem:[#allocation3 + $0xd80] sm:$0xff]
    %v488 = vld [vmem:[#allocation3 + $0xd88] sm:$0xff]
    %v489 = vld [vmem:[#allocation3 + $0xd90] sm:$0xff]
    %v490 = vld [vmem:[#allocation3 + $0xd98] sm:$0xff]
    %v491 = vld [vmem:[#allocation3 + $0xda0] sm:$0xff]
    %v492 = vld [vmem:[#allocation3 + $0xda8] sm:$0xff]
    %v493 = vld [vmem:[#allocation3 + $0xdb0] sm:$0xff]
    %v494 = vld [vmem:[#allocation3 + $0xdb8] sm:$0xff]
    %v495 = vld [vmem:[#allocation3 + $0xdc0] sm:$0xff]
    %v496 = vld [vmem:[#allocation3 + $0xdc8] sm:$0xff]
    %v497 = vld [vmem:[#allocation3 + $0xdd0] sm:$0xff]
    %v498 = vld [vmem:[#allocation3 + $0xdd8] sm:$0xff]
    %v499 = vld [vmem:[#allocation3 + $0xde0] sm:$0xff]
    %v500 = vld [vmem:[#allocation3 + $0xde8] sm:$0xff]
    %v501 = vld [vmem:[#allocation3 + $0xdf0] sm:$0xff]
    %v502 = vld [vmem:[#allocation3 + $0xdf8] sm:$0xff]
    %v503 = vld [vmem:[#allocation3 + $0xe00] sm:$0xff]
    %v504 = vld [vmem:[#allocation3 + $0xe08] sm:$0xff]
    %v505 = vld [vmem:[#allocation3 + $0xe10] sm:$0xff]
    %v506 = vld [vmem:[#allocation3 + $0xe18] sm:$0xff]
    %v507 = vld [vmem:[#allocation3 + $0xe20] sm:$0xff]
    %v508 = vld [vmem:[#allocation3 + $0xe28] sm:$0xff]
    %v509 = vld [vmem:[#allocation3 + $0xe30] sm:$0xff]
    %v510 = vld [vmem:[#allocation3 + $0xe38] sm:$0xff]
    %v511 = vld [vmem:[#allocation3 + $0xe40] sm:$0xff]
    %v512 = vld [vmem:[#allocation3 + $0xe48] sm:$0xff]
    %v513 = vld [vmem:[#allocation3 + $0xe50] sm:$0xff]
    %v514 = vld [vmem:[#allocation3 + $0xe58] sm:$0xff]
    %v515 = vld [vmem:[#allocation3 + $0xe60] sm:$0xff]
    %v516 = vld [vmem:[#allocation3 + $0xe68] sm:$0xff]
    %v517 = vld [vmem:[#allocation3 + $0xe70] sm:$0xff]
    %v518 = vld [vmem:[#allocation3 + $0xe78] sm:$0xff]
    %v519 = vld [vmem:[#allocation3 + $0xe80] sm:$0xff]
    %v520 = vld [vmem:[#allocation3 + $0xe88] sm:$0xff]
    %v521 = vld [vmem:[#allocation3 + $0xe90] sm:$0xff]
    %v522 = vld [vmem:[#allocation3 + $0xe98] sm:$0xff]
    %v523 = vld [vmem:[#allocation3 + $0xea0] sm:$0xff]
    %v524 = vld [vmem:[#allocation3 + $0xea8] sm:$0xff]
    %v525 = vld [vmem:[#allocation3 + $0xeb0] sm:$0xff]
    %v526 = vld [vmem:[#allocation3 + $0xeb8] sm:$0xff]
    %v527 = vld [vmem:[#allocation3 + $0xec0] sm:$0xff]
    %v528 = vld [vmem:[#allocation3 + $0xec8] sm:$0xff]
    %v529 = vld [vmem:[#allocation3 + $0xed0] sm:$0xff]
    %v530 = vld [vmem:[#allocation3 + $0xed8] sm:$0xff]
    %v531 = vld [vmem:[#allocation3 + $0xee0] sm:$0xff]
    %v532 = vld [vmem:[#allocation3 + $0xee8] sm:$0xff]
    %v533 = vld [vmem:[#allocation3 + $0xef0] sm:$0xff]
    %v534 = vld [vmem:[#allocation3 + $0xef8] sm:$0xff]
    %v535 = vld [vmem:[#allocation3 + $0xf00] sm:$0xff]
    %v536 = vld [vmem:[#allocation3 + $0xf08] sm:$0xff]
    %v537 = vld [vmem:[#allocation3 + $0xf10] sm:$0xff]
    %v538 = vld [vmem:[#allocation3 + $0xf18] sm:$0xff]
    %v539 = vld [vmem:[#allocation3 + $0xf20] sm:$0xff]
    %v540 = vld [vmem:[#allocation3 + $0xf28] sm:$0xff]
    %v541 = vld [vmem:[#allocation3 + $0xf30] sm:$0xff]
    %v542 = vld [vmem:[#allocation3 + $0xf38] sm:$0xff]
    %v543 = vld [vmem:[#allocation3 + $0xf40] sm:$0xff]
    %v544 = vld [vmem:[#allocation3 + $0xf48] sm:$0xff]
    %v545 = vld [vmem:[#allocation3 + $0xf50] sm:$0xff]
    %v546 = vld [vmem:[#allocation3 + $0xf58] sm:$0xff]
    %v547 = vld [vmem:[#allocation3 + $0xf60] sm:$0xff]
    %v548 = vld [vmem:[#allocation3 + $0xf68] sm:$0xff]
    %v549 = vld [vmem:[#allocation3 + $0xf70] sm:$0xff]
    %v550 = vld [vmem:[#allocation3 + $0xf78] sm:$0xff]
    %v551 = vld [vmem:[#allocation3 + $0xf80] sm:$0xff]
    %v552 = vld [vmem:[#allocation3 + $0xf88] sm:$0xff]
    %v553 = vld [vmem:[#allocation3 + $0xf90] sm:$0xff]
    %v554 = vld [vmem:[#allocation3 + $0xf98] sm:$0xff]
    %v555 = vld [vmem:[#allocation3 + $0xfa0] sm:$0xff]
    %v556 = vld [vmem:[#allocation3 + $0xfa8] sm:$0xff]
    %v557 = vld [vmem:[#allocation3 + $0xfb0] sm:$0xff]
    %v558 = vld [vmem:[#allocation3 + $0xfb8] sm:$0xff]
    %v559 = vld [vmem:[#allocation3 + $0xfc0] sm:$0xff]
    %v560 = vld [vmem:[#allocation3 + $0xfc8] sm:$0xff]
    %v561 = vld [vmem:[#allocation3 + $0xfd0] sm:$0xff]
    %v562 = vld [vmem:[#allocation3 + $0xfd8] sm:$0xff]
    %v563 = vld [vmem:[#allocation3 + $0xfe0] sm:$0xff]
    %v564 = vld [vmem:[#allocation3 + $0xfe8] sm:$0xff]
    %v565 = vld [vmem:[#allocation3 + $0xff0] sm:$0xff]
    %v566 = vld [vmem:[#allocation3 + $0xff8] sm:$0xff]
    %v567 = vld [vmem:[#allocation3 + $0x1000] sm:$0xff]
    %v568 = vld [vmem:[#allocation3 + $0x1008] sm:$0xff]
    %v569 = vld [vmem:[#allocation3 + $0x1010] sm:$0xff]
    %v570 = vld [vmem:[#allocation3 + $0x1018] sm:$0xff]
    %v571 = vld [vmem:[#allocation3 + $0x1020] sm:$0xff]
    %v572 = vld [vmem:[#allocation3 + $0x1028] sm:$0xff]
    %v573 = vld [vmem:[#allocation3 + $0x1030] sm:$0xff]
    %v574 = vld [vmem:[#allocation3 + $0x1038] sm:$0xff]
    %v575 = vld [vmem:[#allocation3 + $0x1040] sm:$0xff]
    %v576 = vld [vmem:[#allocation3 + $0x1048] sm:$0xff]
    %v577 = vld [vmem:[#allocation3 + $0x1050] sm:$0xff]
    %v578 = vld [vmem:[#allocation3 + $0x1058] sm:$0xff]
    %v579 = vld [vmem:[#allocation3 + $0x1060] sm:$0xff]
    %v580 = vld [vmem:[#allocation3 + $0x1068] sm:$0xff]
    %v581 = vld [vmem:[#allocation3 + $0x1070] sm:$0xff]
    %v582 = vld [vmem:[#allocation3 + $0x1078] sm:$0xff]
    %v583 = vld [vmem:[#allocation3 + $0x1080] sm:$0xff]
    %v584 = vld [vmem:[#allocation3 + $0x1088] sm:$0xff]
    %v585 = vld [vmem:[#allocation3 + $0x1090] sm:$0xff]
    %v586 = vld [vmem:[#allocation3 + $0x1098] sm:$0xff]
    %v587 = vld [vmem:[#allocation3 + $0x10a0] sm:$0xff]
    %v588 = vld [vmem:[#allocation3 + $0x10a8] sm:$0xff]
    %v589 = vld [vmem:[#allocation3 + $0x10b0] sm:$0xff]
    %v590 = vld [vmem:[#allocation3 + $0x10b8] sm:$0xff]
    %v591 = vld [vmem:[#allocation3 + $0x10c0] sm:$0xff]
    %v592 = vld [vmem:[#allocation3 + $0x10c8] sm:$0xff]
    %v593 = vld [vmem:[#allocation3 + $0x10d0] sm:$0xff]
    %v594 = vld [vmem:[#allocation3 + $0x10d8] sm:$0xff]
    %v595 = vld [vmem:[#allocation3 + $0x10e0] sm:$0xff]
    %v596 = vld [vmem:[#allocation3 + $0x10e8] sm:$0xff]
    %v597 = vld [vmem:[#allocation3 + $0x10f0] sm:$0xff]
    %v598 = vld [vmem:[#allocation3 + $0x10f8] sm:$0xff]
    %v599 = vld [vmem:[#allocation3 + $0x1100] sm:$0xff]
    %v600 = vld [vmem:[#allocation3 + $0x1108] sm:$0xff]
    %v601 = vld [vmem:[#allocation3 + $0x1110] sm:$0xff]
    %v602 = vld [vmem:[#allocation3 + $0x1118] sm:$0xff]
    %v603 = vld [vmem:[#allocation3 + $0x1120] sm:$0xff]
    %v604 = vld [vmem:[#allocation3 + $0x1128] sm:$0xff]
    %v605 = vld [vmem:[#allocation3 + $0x1130] sm:$0xff]
    %v606 = vld [vmem:[#allocation3 + $0x1138] sm:$0xff]
    %v607 = vld [vmem:[#allocation3 + $0x1140] sm:$0xff]
    %v608 = vld [vmem:[#allocation3 + $0x1148] sm:$0xff]
    %v609 = vld [vmem:[#allocation3 + $0x1150] sm:$0xff]
    %v610 = vld [vmem:[#allocation3 + $0x1158] sm:$0xff]
    %v611 = vld [vmem:[#allocation3 + $0x1160] sm:$0xff]
    %v612 = vld [vmem:[#allocation3 + $0x1168] sm:$0xff]
    %v613 = vld [vmem:[#allocation3 + $0x1170] sm:$0xff]
    %v614 = vld [vmem:[#allocation3 + $0x1178] sm:$0xff]
    %v615 = vld [vmem:[#allocation3 + $0x1180] sm:$0xff]
    %v616 = vld [vmem:[#allocation3 + $0x1188] sm:$0xff]
    %v617 = vld [vmem:[#allocation3 + $0x1190] sm:$0xff]
    %v618 = vld [vmem:[#allocation3 + $0x1198] sm:$0xff]
    %v619 = vld [vmem:[#allocation3 + $0x11a0] sm:$0xff]
    %v620 = vld [vmem:[#allocation3 + $0x11a8] sm:$0xff]
    %v621 = vld [vmem:[#allocation3 + $0x11b0] sm:$0xff]
    %v622 = vld [vmem:[#allocation3 + $0x11b8] sm:$0xff]
    %v623 = vld [vmem:[#allocation3 + $0x11c0] sm:$0xff]
    %v624 = vld [vmem:[#allocation3 + $0x11c8] sm:$0xff]
    %v625 = vld [vmem:[#allocation3 + $0x11d0] sm:$0xff]
    %v626 = vld [vmem:[#allocation3 + $0x11d8] sm:$0xff]
    %v627 = vld [vmem:[#allocation3 + $0x11e0] sm:$0xff]
    %v628 = vld [vmem:[#allocation3 + $0x11e8] sm:$0xff]
    %v629 = vld [vmem:[#allocation3 + $0x11f0] sm:$0xff]
    %v630 = vld [vmem:[#allocation3 + $0x11f8] sm:$0xff]
    %v631 = vld [vmem:[#allocation3 + $0x1200] sm:$0xff]
    %v632 = vld [vmem:[#allocation3 + $0x1208] sm:$0xff]
    %v633 = vld [vmem:[#allocation3 + $0x1210] sm:$0xff]
    %v634 = vld [vmem:[#allocation3 + $0x1218] sm:$0xff]
    %v635 = vld [vmem:[#allocation3 + $0x1220] sm:$0xff]
    %v636 = vld [vmem:[#allocation3 + $0x1228] sm:$0xff]
    %v637 = vld [vmem:[#allocation3 + $0x1230] sm:$0xff]
    %v638 = vld [vmem:[#allocation3 + $0x1238] sm:$0xff]
    %v639 = vld [vmem:[#allocation3 + $0x1240] sm:$0xff]
    %v640 = vld [vmem:[#allocation3 + $0x1248] sm:$0xff]
    %v641 = vld [vmem:[#allocation3 + $0x1250] sm:$0xff]
    %v642 = vld [vmem:[#allocation3 + $0x1258] sm:$0xff]
    %v643 = vld [vmem:[#allocation3 + $0x1260] sm:$0xff]
    %v644 = vld [vmem:[#allocation3 + $0x1268] sm:$0xff]
    %v645 = vld [vmem:[#allocation3 + $0x1270] sm:$0xff]
    %v646 = vld [vmem:[#allocation3 + $0x1278] sm:$0xff]
    %v647 = vld [vmem:[#allocation3 + $0x1280] sm:$0xff]
    %v648 = vld [vmem:[#allocation3 + $0x1288] sm:$0xff]
    %v649 = vld [vmem:[#allocation3 + $0x1290] sm:$0xff]
    %v650 = vld [vmem:[#allocation3 + $0x1298] sm:$0xff]
    %v651 = vld [vmem:[#allocation3 + $0x12a0] sm:$0xff]
    %v652 = vld [vmem:[#allocation3 + $0x12a8] sm:$0xff]
    %v653 = vld [vmem:[#allocation3 + $0x12b0] sm:$0xff]
    %v654 = vld [vmem:[#allocation3 + $0x12b8] sm:$0xff]
    %v655 = vld [vmem:[#allocation3 + $0x12c0] sm:$0xff]
    %v656 = vld [vmem:[#allocation3 + $0x12c8] sm:$0xff]
    %v657 = vld [vmem:[#allocation3 + $0x12d0] sm:$0xff]
    %v658 = vld [vmem:[#allocation3 + $0x12d8] sm:$0xff]
    %v659 = vld [vmem:[#allocation3 + $0x12e0] sm:$0xff]
    %v660 = vld [vmem:[#allocation3 + $0x12e8] sm:$0xff]
    %v661 = vld [vmem:[#allocation3 + $0x12f0] sm:$0xff]
    %v662 = vld [vmem:[#allocation3 + $0x12f8] sm:$0xff]
    %v663 = vld [vmem:[#allocation3 + $0x1300] sm:$0xff]
    %v664 = vld [vmem:[#allocation3 + $0x1308] sm:$0xff]
    %v665 = vld [vmem:[#allocation3 + $0x1310] sm:$0xff]
    %v666 = vld [vmem:[#allocation3 + $0x1318] sm:$0xff]
    %v667 = vld [vmem:[#allocation3 + $0x1320] sm:$0xff]
    %v668 = vld [vmem:[#allocation3 + $0x1328] sm:$0xff]
    %v669 = vld [vmem:[#allocation3 + $0x1330] sm:$0xff]
    %v670 = vld [vmem:[#allocation3 + $0x1338] sm:$0xff]
    %v671 = vld [vmem:[#allocation3 + $0x1340] sm:$0xff]
    %v672 = vld [vmem:[#allocation3 + $0x1348] sm:$0xff]
    %v673 = vld [vmem:[#allocation3 + $0x1350] sm:$0xff]
    %v674 = vld [vmem:[#allocation3 + $0x1358] sm:$0xff]
    %v675 = vld [vmem:[#allocation3 + $0x1360] sm:$0xff]
    %v676 = vld [vmem:[#allocation3 + $0x1368] sm:$0xff]
    %v677 = vld [vmem:[#allocation3 + $0x1370] sm:$0xff]
    %v678 = vld [vmem:[#allocation3 + $0x1378] sm:$0xff]
    %v679 = vld [vmem:[#allocation3 + $0x1380] sm:$0xff]
    %v680 = vld [vmem:[#allocation3 + $0x1388] sm:$0xff]
    %v681 = vld [vmem:[#allocation3 + $0x1390] sm:$0xff]
    %v682 = vld [vmem:[#allocation3 + $0x1398] sm:$0xff]
    %v683 = vld [vmem:[#allocation3 + $0x13a0] sm:$0xff]
    %v684 = vld [vmem:[#allocation3 + $0x13a8] sm:$0xff]
    %v685 = vld [vmem:[#allocation3 + $0x13b0] sm:$0xff]
    %v686 = vld [vmem:[#allocation3 + $0x13b8] sm:$0xff]
    %v687 = vld [vmem:[#allocation3 + $0x13c0] sm:$0xff]
    %v688 = vld [vmem:[#allocation3 + $0x13c8] sm:$0xff]
    %v689 = vld [vmem:[#allocation3 + $0x13d0] sm:$0xff]
    %v690 = vld [vmem:[#allocation3 + $0x13d8] sm:$0xff]
    %v691 = vld [vmem:[#allocation3 + $0x13e0] sm:$0xff]
    %v692 = vld [vmem:[#allocation3 + $0x13e8] sm:$0xff]
    %v693 = vld [vmem:[#allocation3 + $0x13f0] sm:$0xff]
    %v694 = vld [vmem:[#allocation3 + $0x13f8] sm:$0xff]
    %v695 = vld [vmem:[#allocation3 + $0x1400] sm:$0xff]
    %v696 = vld [vmem:[#allocation3 + $0x1408] sm:$0xff]
    %v697 = vld [vmem:[#allocation3 + $0x1410] sm:$0xff]
    %v698 = vld [vmem:[#allocation3 + $0x1418] sm:$0xff]
    %v699 = vld [vmem:[#allocation3 + $0x1420] sm:$0xff]
    %v700 = vld [vmem:[#allocation3 + $0x1428] sm:$0xff]
    %v701 = vld [vmem:[#allocation3 + $0x1430] sm:$0xff]
    %v702 = vld [vmem:[#allocation3 + $0x1438] sm:$0xff]
    %v703 = vld [vmem:[#allocation3 + $0x1440] sm:$0xff]
    %v704 = vld [vmem:[#allocation3 + $0x1448] sm:$0xff]
    %v705 = vld [vmem:[#allocation3 + $0x1450] sm:$0xff]
    %v706 = vld [vmem:[#allocation3 + $0x1458] sm:$0xff]
    %v707 = vld [vmem:[#allocation3 + $0x1460] sm:$0xff]
    %v708 = vld [vmem:[#allocation3 + $0x1468] sm:$0xff]
    %v709 = vld [vmem:[#allocation3 + $0x1470] sm:$0xff]
    %v710 = vld [vmem:[#allocation3 + $0x1478] sm:$0xff]
    %v711 = vld [vmem:[#allocation3 + $0x1480] sm:$0xff]
    %v712 = vld [vmem:[#allocation3 + $0x1488] sm:$0xff]
    %v713 = vld [vmem:[#allocation3 + $0x1490] sm:$0xff]
    %v714 = vld [vmem:[#allocation3 + $0x1498] sm:$0xff]
    %v715 = vld [vmem:[#allocation3 + $0x14a0] sm:$0xff]
    %v716 = vld [vmem:[#allocation3 + $0x14a8] sm:$0xff]
    %v717 = vld [vmem:[#allocation3 + $0x14b0] sm:$0xff]
    %v718 = vld [vmem:[#allocation3 + $0x14b8] sm:$0xff]
    %v719 = vld [vmem:[#allocation3 + $0x14c0] sm:$0xff]
    %v720 = vld [vmem:[#allocation3 + $0x14c8] sm:$0xff]
    %v721 = vld [vmem:[#allocation3 + $0x14d0] sm:$0xff]
    %v722 = vld [vmem:[#allocation3 + $0x14d8] sm:$0xff]
    %v723 = vld [vmem:[#allocation3 + $0x14e0] sm:$0xff]
    %v724 = vld [vmem:[#allocation3 + $0x14e8] sm:$0xff]
    %v725 = vld [vmem:[#allocation3 + $0x14f0] sm:$0xff]
    %v726 = vld [vmem:[#allocation3 + $0x14f8] sm:$0xff]
    %v727 = vld [vmem:[#allocation3 + $0x1500] sm:$0xff]
    %v728 = vld [vmem:[#allocation3 + $0x1508] sm:$0xff]
    %v729 = vld [vmem:[#allocation3 + $0x1510] sm:$0xff]
    %v730 = vld [vmem:[#allocation3 + $0x1518] sm:$0xff]
    %v731 = vld [vmem:[#allocation3 + $0x1520] sm:$0xff]
    %v732 = vld [vmem:[#allocation3 + $0x1528] sm:$0xff]
    %v733 = vld [vmem:[#allocation3 + $0x1530] sm:$0xff]
    %v734 = vld [vmem:[#allocation3 + $0x1538] sm:$0xff]
    %v735 = vld [vmem:[#allocation3 + $0x1540] sm:$0xff]
    %v736 = vld [vmem:[#allocation3 + $0x1548] sm:$0xff]
    %v737 = vld [vmem:[#allocation3 + $0x1550] sm:$0xff]
    %v738 = vld [vmem:[#allocation3 + $0x1558] sm:$0xff]
    %v739 = vld [vmem:[#allocation3 + $0x1560] sm:$0xff]
    %v740 = vld [vmem:[#allocation3 + $0x1568] sm:$0xff]
    %v741 = vld [vmem:[#allocation3 + $0x1570] sm:$0xff]
    %v742 = vld [vmem:[#allocation3 + $0x1578] sm:$0xff]
    %v743 = vld [vmem:[#allocation3 + $0x1580] sm:$0xff]
    %v744 = vld [vmem:[#allocation3 + $0x1588] sm:$0xff]
    %v745 = vld [vmem:[#allocation3 + $0x1590] sm:$0xff]
    %v746 = vld [vmem:[#allocation3 + $0x1598] sm:$0xff]
    %v747 = vld [vmem:[#allocation3 + $0x15a0] sm:$0xff]
    %v748 = vld [vmem:[#allocation3 + $0x15a8] sm:$0xff]
    %v749 = vld [vmem:[#allocation3 + $0x15b0] sm:$0xff]
    %v750 = vld [vmem:[#allocation3 + $0x15b8] sm:$0xff]
    %v751 = vld [vmem:[#allocation3 + $0x15c0] sm:$0xff]
    %v752 = vld [vmem:[#allocation3 + $0x15c8] sm:$0xff]
    %v753 = vld [vmem:[#allocation3 + $0x15d0] sm:$0xff]
    %v754 = vld [vmem:[#allocation3 + $0x15d8] sm:$0xff]
    %v755 = vld [vmem:[#allocation3 + $0x15e0] sm:$0xff]
    %v756 = vld [vmem:[#allocation3 + $0x15e8] sm:$0xff]
    %v757 = vld [vmem:[#allocation3 + $0x15f0] sm:$0xff]
    %v758 = vld [vmem:[#allocation3 + $0x15f8] sm:$0xff]
    %v759 = vld [vmem:[#allocation3 + $0x1600] sm:$0xff]
    %v760 = vld [vmem:[#allocation3 + $0x1608] sm:$0xff]
    %v761 = vld [vmem:[#allocation3 + $0x1610] sm:$0xff]
    %v762 = vld [vmem:[#allocation3 + $0x1618] sm:$0xff]
    %v763 = vld [vmem:[#allocation3 + $0x1620] sm:$0xff]
    %v764 = vld [vmem:[#allocation3 + $0x1628] sm:$0xff]
    %v765 = vld [vmem:[#allocation3 + $0x1630] sm:$0xff]
    %v766 = vld [vmem:[#allocation3 + $0x1638] sm:$0xff]
    %v767 = vld [vmem:[#allocation3 + $0x1640] sm:$0xff]
    %v768 = vld [vmem:[#allocation3 + $0x1648] sm:$0xff]
    %v769 = vld [vmem:[#allocation3 + $0x1650] sm:$0xff]
    %v770 = vld [vmem:[#allocation3 + $0x1658] sm:$0xff]
    %v771 = vld [vmem:[#allocation3 + $0x1660] sm:$0xff]
    %v772 = vld [vmem:[#allocation3 + $0x1668] sm:$0xff]
    %v773 = vld [vmem:[#allocation3 + $0x1670] sm:$0xff]
    %v774 = vld [vmem:[#allocation3 + $0x1678] sm:$0xff]
    %v775 = vld [vmem:[#allocation3 + $0x1680] sm:$0xff]
    %v776 = vld [vmem:[#allocation3 + $0x1688] sm:$0xff]
    %v777 = vld [vmem:[#allocation3 + $0x1690] sm:$0xff]
    %v778 = vld [vmem:[#allocation3 + $0x1698] sm:$0xff]
    %v779 = vld [vmem:[#allocation3 + $0x16a0] sm:$0xff]
    %v780 = vld [vmem:[#allocation3 + $0x16a8] sm:$0xff]
    %v781 = vld [vmem:[#allocation3 + $0x16b0] sm:$0xff]
    %v782 = vld [vmem:[#allocation3 + $0x16b8] sm:$0xff]
    %v783 = vld [vmem:[#allocation3 + $0x16c0] sm:$0xff]
    %v784 = vld [vmem:[#allocation3 + $0x16c8] sm:$0xff]
    %v785 = vld [vmem:[#allocation3 + $0x16d0] sm:$0xff]
    %v786 = vld [vmem:[#allocation3 + $0x16d8] sm:$0xff]
    %v787 = vld [vmem:[#allocation3 + $0x16e0] sm:$0xff]
    %v788 = vld [vmem:[#allocation3 + $0x16e8] sm:$0xff]
    %v789 = vld [vmem:[#allocation3 + $0x16f0] sm:$0xff]
    %v790 = vld [vmem:[#allocation3 + $0x16f8] sm:$0xff]
    %v791 = vld [vmem:[#allocation3 + $0x1700] sm:$0xff]
    %v792 = vld [vmem:[#allocation3 + $0x1708] sm:$0xff]
    %v793 = vld [vmem:[#allocation3 + $0x1710] sm:$0xff]
    %v794 = vld [vmem:[#allocation3 + $0x1718] sm:$0xff]
    %v795 = vld [vmem:[#allocation3 + $0x1720] sm:$0xff]
    %v796 = vld [vmem:[#allocation3 + $0x1728] sm:$0xff]
    %v797 = vld [vmem:[#allocation3 + $0x1730] sm:$0xff]
    %v798 = vld [vmem:[#allocation3 + $0x1738] sm:$0xff]
    %v799 = vld [vmem:[#allocation3 + $0x1740] sm:$0xff]
    %v800 = vld [vmem:[#allocation3 + $0x1748] sm:$0xff]
    %v801 = vld [vmem:[#allocation3 + $0x1750] sm:$0xff]
    %v802 = vld [vmem:[#allocation3 + $0x1758] sm:$0xff]
    %v803 = vld [vmem:[#allocation3 + $0x1760] sm:$0xff]
    %v804 = vld [vmem:[#allocation3 + $0x1768] sm:$0xff]
    %v805 = vld [vmem:[#allocation3 + $0x1770] sm:$0xff]
    %v806 = vld [vmem:[#allocation3 + $0x1778] sm:$0xff]
    %v807 = vld [vmem:[#allocation3 + $0x1780] sm:$0xff]
    %v808 = vld [vmem:[#allocation3 + $0x1788] sm:$0xff]
    %v809 = vld [vmem:[#allocation3 + $0x1790] sm:$0xff]
    %v810 = vld [vmem:[#allocation3 + $0x1798] sm:$0xff]
    %v811 = vld [vmem:[#allocation3 + $0x17a0] sm:$0xff]
    %v812 = vld [vmem:[#allocation3 + $0x17a8] sm:$0xff]
    %v813 = vld [vmem:[#allocation3 + $0x17b0] sm:$0xff]
    %v814 = vld [vmem:[#allocation3 + $0x17b8] sm:$0xff]
    %v815 = vld [vmem:[#allocation3 + $0x17c0] sm:$0xff]
    %v816 = vld [vmem:[#allocation3 + $0x17c8] sm:$0xff]
    %v817 = vld [vmem:[#allocation3 + $0x17d0] sm:$0xff]
    %v818 = vld [vmem:[#allocation3 + $0x17d8] sm:$0xff]
    %v819 = vld [vmem:[#allocation3 + $0x17e0] sm:$0xff]
    %v820 = vld [vmem:[#allocation3 + $0x17e8] sm:$0xff]
    %v821 = vld [vmem:[#allocation3 + $0x17f0] sm:$0xff]
    %v822 = vld [vmem:[#allocation3 + $0x17f8] sm:$0xff]
    %v823 = vld [vmem:[#allocation3 + $0x1800] sm:$0xff]
    %v824 = vld [vmem:[#allocation3 + $0x1808] sm:$0xff]
    %v825 = vld [vmem:[#allocation3 + $0x1810] sm:$0xff]
    %v826 = vld [vmem:[#allocation3 + $0x1818] sm:$0xff]
    %v827 = vld [vmem:[#allocation3 + $0x1820] sm:$0xff]
    %v828 = vld [vmem:[#allocation3 + $0x1828] sm:$0xff]
    %v829 = vld [vmem:[#allocation3 + $0x1830] sm:$0xff]
    %v830 = vld [vmem:[#allocation3 + $0x1838] sm:$0xff]
    %v831 = vld [vmem:[#allocation3 + $0x1840] sm:$0xff]
    %v832 = vld [vmem:[#allocation3 + $0x1848] sm:$0xff]
    %v833 = vld [vmem:[#allocation3 + $0x1850] sm:$0xff]
    %v834 = vld [vmem:[#allocation3 + $0x1858] sm:$0xff]
    %v835 = vld [vmem:[#allocation3 + $0x1860] sm:$0xff]
    %v836 = vld [vmem:[#allocation3 + $0x1868] sm:$0xff]
    %v837 = vld [vmem:[#allocation3 + $0x1870] sm:$0xff]
    %v838 = vld [vmem:[#allocation3 + $0x1878] sm:$0xff]
    %v839 = vld [vmem:[#allocation3 + $0x1880] sm:$0xff]
    %v840 = vld [vmem:[#allocation3 + $0x1888] sm:$0xff]
    %v841 = vld [vmem:[#allocation3 + $0x1890] sm:$0xff]
    %v842 = vld [vmem:[#allocation3 + $0x1898] sm:$0xff]
    %v843 = vld [vmem:[#allocation3 + $0x18a0] sm:$0xff]
    %v844 = vld [vmem:[#allocation3 + $0x18a8] sm:$0xff]
    %v845 = vld [vmem:[#allocation3 + $0x18b0] sm:$0xff]
    %v846 = vld [vmem:[#allocation3 + $0x18b8] sm:$0xff]
    %v847 = vld [vmem:[#allocation3 + $0x18c0] sm:$0xff]
    %v848 = vld [vmem:[#allocation3 + $0x18c8] sm:$0xff]
    %v849 = vld [vmem:[#allocation3 + $0x18d0] sm:$0xff]
    %v850 = vld [vmem:[#allocation3 + $0x18d8] sm:$0xff]
    %v851 = vld [vmem:[#allocation3 + $0x18e0] sm:$0xff]
    %v852 = vld [vmem:[#allocation3 + $0x18e8] sm:$0xff]
    %v853 = vld [vmem:[#allocation3 + $0x18f0] sm:$0xff]
    %v854 = vld [vmem:[#allocation3 + $0x18f8] sm:$0xff]
    %v855 = vld [vmem:[#allocation3 + $0x1900] sm:$0xff]
    %v856 = vld [vmem:[#allocation3 + $0x1908] sm:$0xff]
    %v857 = vld [vmem:[#allocation3 + $0x1910] sm:$0xff]
    %v858 = vld [vmem:[#allocation3 + $0x1918] sm:$0xff]
    %v859 = vld [vmem:[#allocation3 + $0x1920] sm:$0xff]
    %v860 = vld [vmem:[#allocation3 + $0x1928] sm:$0xff]
    %v861 = vld [vmem:[#allocation3 + $0x1930] sm:$0xff]
    %v862 = vld [vmem:[#allocation3 + $0x1938] sm:$0xff]
    %v863 = vld [vmem:[#allocation3 + $0x1940] sm:$0xff]
    %v864 = vld [vmem:[#allocation3 + $0x1948] sm:$0xff]
    %v865 = vld [vmem:[#allocation3 + $0x1950] sm:$0xff]
    %v866 = vld [vmem:[#allocation3 + $0x1958] sm:$0xff]
    %v867 = vld [vmem:[#allocation3 + $0x1960] sm:$0xff]
    %v868 = vld [vmem:[#allocation3 + $0x1968] sm:$0xff]
    %v869 = vld [vmem:[#allocation3 + $0x1970] sm:$0xff]
    %v870 = vld [vmem:[#allocation3 + $0x1978] sm:$0xff]
    %v871 = vld [vmem:[#allocation3 + $0x1980] sm:$0xff]
    %v872 = vld [vmem:[#allocation3 + $0x1988] sm:$0xff]
    %v873 = vld [vmem:[#allocation3 + $0x1990] sm:$0xff]
    %v874 = vld [vmem:[#allocation3 + $0x1998] sm:$0xff]
    %v875 = vld [vmem:[#allocation3 + $0x19a0] sm:$0xff]
    %v876 = vld [vmem:[#allocation3 + $0x19a8] sm:$0xff]
    %v877 = vld [vmem:[#allocation3 + $0x19b0] sm:$0xff]
    %v878 = vld [vmem:[#allocation3 + $0x19b8] sm:$0xff]
    %v879 = vld [vmem:[#allocation3 + $0x19c0] sm:$0xff]
    %v880 = vld [vmem:[#allocation3 + $0x19c8] sm:$0xff]
    %v881 = vld [vmem:[#allocation3 + $0x19d0] sm:$0xff]
    %v882 = vld [vmem:[#allocation3 + $0x19d8] sm:$0xff]
    %v883 = vld [vmem:[#allocation3 + $0x19e0] sm:$0xff]
    %v884 = vld [vmem:[#allocation3 + $0x19e8] sm:$0xff]
    %v885 = vld [vmem:[#allocation3 + $0x19f0] sm:$0xff]
    %v886 = vld [vmem:[#allocation3 + $0x19f8] sm:$0xff]
    %v887 = vld [vmem:[#allocation3 + $0x1a00] sm:$0xff]
    %v888 = vld [vmem:[#allocation3 + $0x1a08] sm:$0xff]
    %v889 = vld [vmem:[#allocation3 + $0x1a10] sm:$0xff]
    %v890 = vld [vmem:[#allocation3 + $0x1a18] sm:$0xff]
    %v891 = vld [vmem:[#allocation3 + $0x1a20] sm:$0xff]
    %v892 = vld [vmem:[#allocation3 + $0x1a28] sm:$0xff]
    %v893 = vld [vmem:[#allocation3 + $0x1a30] sm:$0xff]
    %v894 = vld [vmem:[#allocation3 + $0x1a38] sm:$0xff]
    %v895 = vld [vmem:[#allocation3 + $0x1a40] sm:$0xff]
    %v896 = vld [vmem:[#allocation3 + $0x1a48] sm:$0xff]
    %v897 = vld [vmem:[#allocation3 + $0x1a50] sm:$0xff]
    %v898 = vld [vmem:[#allocation3 + $0x1a58] sm:$0xff]
    %v899 = vld [vmem:[#allocation3 + $0x1a60] sm:$0xff]
    %v900 = vld [vmem:[#allocation3 + $0x1a68] sm:$0xff]
    %v901 = vld [vmem:[#allocation3 + $0x1a70] sm:$0xff]
    %v902 = vld [vmem:[#allocation3 + $0x1a78] sm:$0xff]
    %v903 = vld [vmem:[#allocation3 + $0x1a80] sm:$0xff]
    %v904 = vld [vmem:[#allocation3 + $0x1a88] sm:$0xff]
    %v905 = vld [vmem:[#allocation3 + $0x1a90] sm:$0xff]
    %v906 = vld [vmem:[#allocation3 + $0x1a98] sm:$0xff]
    %v907 = vld [vmem:[#allocation3 + $0x1aa0] sm:$0xff]
    %v908 = vld [vmem:[#allocation3 + $0x1aa8] sm:$0xff]
    %v909 = vld [vmem:[#allocation3 + $0x1ab0] sm:$0xff]
    %v910 = vld [vmem:[#allocation3 + $0x1ab8] sm:$0xff]
    %v911 = vld [vmem:[#allocation3 + $0x1ac0] sm:$0xff]
    %v912 = vld [vmem:[#allocation3 + $0x1ac8] sm:$0xff]
    %v913 = vld [vmem:[#allocation3 + $0x1ad0] sm:$0xff]
    %v914 = vld [vmem:[#allocation3 + $0x1ad8] sm:$0xff]
    %v915 = vld [vmem:[#allocation3 + $0x1ae0] sm:$0xff]
    %v916 = vld [vmem:[#allocation3 + $0x1ae8] sm:$0xff]
    %v917 = vld [vmem:[#allocation3 + $0x1af0] sm:$0xff]
    %v918 = vld [vmem:[#allocation3 + $0x1af8] sm:$0xff]
    %v919 = vld [vmem:[#allocation3 + $0x1b00] sm:$0xff]
    %v920 = vld [vmem:[#allocation3 + $0x1b08] sm:$0xff]
    %v921 = vld [vmem:[#allocation3 + $0x1b10] sm:$0xff]
    %v922 = vld [vmem:[#allocation3 + $0x1b18] sm:$0xff]
    %v923 = vld [vmem:[#allocation3 + $0x1b20] sm:$0xff]
    %v924 = vld [vmem:[#allocation3 + $0x1b28] sm:$0xff]
    %v925 = vld [vmem:[#allocation3 + $0x1b30] sm:$0xff]
    %v926 = vld [vmem:[#allocation3 + $0x1b38] sm:$0xff]
    %v927 = vld [vmem:[#allocation3 + $0x1b40] sm:$0xff]
    %v928 = vld [vmem:[#allocation3 + $0x1b48] sm:$0xff]
    %v929 = vld [vmem:[#allocation3 + $0x1b50] sm:$0xff]
    %v930 = vld [vmem:[#allocation3 + $0x1b58] sm:$0xff]
    %v931 = vld [vmem:[#allocation3 + $0x1b60] sm:$0xff]
    %v932 = vld [vmem:[#allocation3 + $0x1b68] sm:$0xff]
    %v933 = vld [vmem:[#allocation3 + $0x1b70] sm:$0xff]
    %v934 = vld [vmem:[#allocation3 + $0x1b78] sm:$0xff]
    %v935 = vld [vmem:[#allocation3 + $0x1b80] sm:$0xff]
    %v936 = vld [vmem:[#allocation3 + $0x1b88] sm:$0xff]
    %v937 = vld [vmem:[#allocation3 + $0x1b90] sm:$0xff]
    %v938 = vld [vmem:[#allocation3 + $0x1b98] sm:$0xff]
    %v939 = vld [vmem:[#allocation3 + $0x1ba0] sm:$0xff]
    %v940 = vld [vmem:[#allocation3 + $0x1ba8] sm:$0xff]
    %v941 = vld [vmem:[#allocation3 + $0x1bb0] sm:$0xff]
    %v942 = vld [vmem:[#allocation3 + $0x1bb8] sm:$0xff]
    %v943 = vld [vmem:[#allocation3 + $0x1bc0] sm:$0xff]
    %v944 = vld [vmem:[#allocation3 + $0x1bc8] sm:$0xff]
    %v945 = vld [vmem:[#allocation3 + $0x1bd0] sm:$0xff]
    %v946 = vld [vmem:[#allocation3 + $0x1bd8] sm:$0xff]
    %v947 = vld [vmem:[#allocation3 + $0x1be0] sm:$0xff]
    %v948 = vld [vmem:[#allocation3 + $0x1be8] sm:$0xff]
    %v949 = vld [vmem:[#allocation3 + $0x1bf0] sm:$0xff]
    %v950 = vld [vmem:[#allocation3 + $0x1bf8] sm:$0xff]
    %v951 = vld [vmem:[#allocation3 + $0x1c00] sm:$0xff]
    %v952 = vld [vmem:[#allocation3 + $0x1c08] sm:$0xff]
    %v953 = vld [vmem:[#allocation3 + $0x1c10] sm:$0xff]
    %v954 = vld [vmem:[#allocation3 + $0x1c18] sm:$0xff]
    %v955 = vld [vmem:[#allocation3 + $0x1c20] sm:$0xff]
    %v956 = vld [vmem:[#allocation3 + $0x1c28] sm:$0xff]
    %v957 = vld [vmem:[#allocation3 + $0x1c30] sm:$0xff]
    %v958 = vld [vmem:[#allocation3 + $0x1c38] sm:$0xff]
    %v959 = vld [vmem:[#allocation3 + $0x1c40] sm:$0xff]
    %v960 = vld [vmem:[#allocation3 + $0x1c48] sm:$0xff]
    %v961 = vld [vmem:[#allocation3 + $0x1c50] sm:$0xff]
    %v962 = vld [vmem:[#allocation3 + $0x1c58] sm:$0xff]
    %v963 = vld [vmem:[#allocation3 + $0x1c60] sm:$0xff]
    %v964 = vld [vmem:[#allocation3 + $0x1c68] sm:$0xff]
    %v965 = vld [vmem:[#allocation3 + $0x1c70] sm:$0xff]
    %v966 = vld [vmem:[#allocation3 + $0x1c78] sm:$0xff]
    %v967 = vld [vmem:[#allocation3 + $0x1c80] sm:$0xff]
    %v968 = vld [vmem:[#allocation3 + $0x1c88] sm:$0xff]
    %v969 = vld [vmem:[#allocation3 + $0x1c90] sm:$0xff]
    %v970 = vld [vmem:[#allocation3 + $0x1c98] sm:$0xff]
    %v971 = vld [vmem:[#allocation3 + $0x1ca0] sm:$0xff]
    %v972 = vld [vmem:[#allocation3 + $0x1ca8] sm:$0xff]
    %v973 = vld [vmem:[#allocation3 + $0x1cb0] sm:$0xff]
    %v974 = vld [vmem:[#allocation3 + $0x1cb8] sm:$0xff]
    %v975 = vld [vmem:[#allocation3 + $0x1cc0] sm:$0xff]
    %v976 = vld [vmem:[#allocation3 + $0x1cc8] sm:$0xff]
    %v977 = vld [vmem:[#allocation3 + $0x1cd0] sm:$0xff]
    %v978 = vld [vmem:[#allocation3 + $0x1cd8] sm:$0xff]
    %v979 = vld [vmem:[#allocation3 + $0x1ce0] sm:$0xff]
    %v980 = vld [vmem:[#allocation3 + $0x1ce8] sm:$0xff]
    %v981 = vld [vmem:[#allocation3 + $0x1cf0] sm:$0xff]
    %v982 = vld [vmem:[#allocation3 + $0x1cf8] sm:$0xff]
    %v983 = vld [vmem:[#allocation3 + $0x1d00] sm:$0xff]
    %v984 = vld [vmem:[#allocation3 + $0x1d08] sm:$0xff]
    %v985 = vld [vmem:[#allocation3 + $0x1d10] sm:$0xff]
    %v986 = vld [vmem:[#allocation3 + $0x1d18] sm:$0xff]
    %v987 = vld [vmem:[#allocation3 + $0x1d20] sm:$0xff]
    %v988 = vld [vmem:[#allocation3 + $0x1d28] sm:$0xff]
    %v989 = vld [vmem:[#allocation3 + $0x1d30] sm:$0xff]
    %v990 = vld [vmem:[#allocation3 + $0x1d38] sm:$0xff]
    %v991 = vld [vmem:[#allocation3 + $0x1d40] sm:$0xff]
    %v992 = vld [vmem:[#allocation3 + $0x1d48] sm:$0xff]
    %v993 = vld [vmem:[#allocation3 + $0x1d50] sm:$0xff]
    %v994 = vld [vmem:[#allocation3 + $0x1d58] sm:$0xff]
    %v995 = vld [vmem:[#allocation3 + $0x1d60] sm:$0xff]
    %v996 = vld [vmem:[#allocation3 + $0x1d68] sm:$0xff]
    %v997 = vld [vmem:[#allocation3 + $0x1d70] sm:$0xff]
    %v998 = vld [vmem:[#allocation3 + $0x1d78] sm:$0xff]
    %v999 = vld [vmem:[#allocation3 + $0x1d80] sm:$0xff]
    %v1000 = vld [vmem:[#allocation3 + $0x1d88] sm:$0xff]
    %v1001 = vld [vmem:[#allocation3 + $0x1d90] sm:$0xff]
    %v1002 = vld [vmem:[#allocation3 + $0x1d98] sm:$0xff]
    %v1003 = vld [vmem:[#allocation3 + $0x1da0] sm:$0xff]
    %v1004 = vld [vmem:[#allocation3 + $0x1da8] sm:$0xff]
    %v1005 = vld [vmem:[#allocation3 + $0x1db0] sm:$0xff]
    %v1006 = vld [vmem:[#allocation3 + $0x1db8] sm:$0xff]
    %v1007 = vld [vmem:[#allocation3 + $0x1dc0] sm:$0xff]
    %v1008 = vld [vmem:[#allocation3 + $0x1dc8] sm:$0xff]
    %v1009 = vld [vmem:[#allocation3 + $0x1dd0] sm:$0xff]
    %v1010 = vld [vmem:[#allocation3 + $0x1dd8] sm:$0xff]
    %v1011 = vld [vmem:[#allocation3 + $0x1de0] sm:$0xff]
    %v1012 = vld [vmem:[#allocation3 + $0x1de8] sm:$0xff]
    %v1013 = vld [vmem:[#allocation3 + $0x1df0] sm:$0xff]
    %v1014 = vld [vmem:[#allocation3 + $0x1df8] sm:$0xff]
    %v1015 = vld [vmem:[#allocation3 + $0x1e00] sm:$0xff]
    %v1016 = vld [vmem:[#allocation3 + $0x1e08] sm:$0xff]
    %v1017 = vld [vmem:[#allocation3 + $0x1e10] sm:$0xff]
    %v1018 = vld [vmem:[#allocation3 + $0x1e18] sm:$0xff]
    %v1019 = vld [vmem:[#allocation3 + $0x1e20] sm:$0xff]
    %v1020 = vld [vmem:[#allocation3 + $0x1e28] sm:$0xff]
    %v1021 = vld [vmem:[#allocation3 + $0x1e30] sm:$0xff]
    %v1022 = vld [vmem:[#allocation3 + $0x1e38] sm:$0xff]
    %v1023 = vld [vmem:[#allocation3 + $0x1e40] sm:$0xff]
    %v1024 = vld [vmem:[#allocation3 + $0x1e48] sm:$0xff]
    %v1025 = vld [vmem:[#allocation3 + $0x1e50] sm:$0xff]
    %v1026 = vld [vmem:[#allocation3 + $0x1e58] sm:$0xff]
    %v1027 = vld [vmem:[#allocation3 + $0x1e60] sm:$0xff]
    %v1028 = vld [vmem:[#allocation3 + $0x1e68] sm:$0xff]
    %v1029 = vld [vmem:[#allocation3 + $0x1e70] sm:$0xff]
    %v1030 = vld [vmem:[#allocation3 + $0x1e78] sm:$0xff]
    %v1031 = vld [vmem:[#allocation3 + $0x1e80] sm:$0xff]
    %v1032 = vld [vmem:[#allocation3 + $0x1e88] sm:$0xff]
    %v1033 = vld [vmem:[#allocation3 + $0x1e90] sm:$0xff]
    %v1034 = vld [vmem:[#allocation3 + $0x1e98] sm:$0xff]
    %v1035 = vld [vmem:[#allocation3 + $0x1ea0] sm:$0xff]
    %v1036 = vld [vmem:[#allocation3 + $0x1ea8] sm:$0xff]
    %v1037 = vld [vmem:[#allocation3 + $0x1eb0] sm:$0xff]
    %v1038 = vld [vmem:[#allocation3 + $0x1eb8] sm:$0xff]
    %v1039 = vld [vmem:[#allocation3 + $0x1ec0] sm:$0xff]
    %v1040 = vld [vmem:[#allocation3 + $0x1ec8] sm:$0xff]
    %v1041 = vld [vmem:[#allocation3 + $0x1ed0] sm:$0xff]
    %v1042 = vld [vmem:[#allocation3 + $0x1ed8] sm:$0xff]
    %v1043 = vld [vmem:[#allocation3 + $0x1ee0] sm:$0xff]
    %v1044 = vld [vmem:[#allocation3 + $0x1ee8] sm:$0xff]
    %v1045 = vld [vmem:[#allocation3 + $0x1ef0] sm:$0xff]
    %v1046 = vld [vmem:[#allocation3 + $0x1ef8] sm:$0xff]
    %v1047 = vld [vmem:[#allocation3 + $0x1f00] sm:$0xff]
    %v1048 = vld [vmem:[#allocation3 + $0x1f08] sm:$0xff]
    %v1049 = vld [vmem:[#allocation3 + $0x1f10] sm:$0xff]
    %v1050 = vld [vmem:[#allocation3 + $0x1f18] sm:$0xff]
    %v1051 = vld [vmem:[#allocation3 + $0x1f20] sm:$0xff]
    %v1052 = vld [vmem:[#allocation3 + $0x1f28] sm:$0xff]
    %v1053 = vld [vmem:[#allocation3 + $0x1f30] sm:$0xff]
    %v1054 = vld [vmem:[#allocation3 + $0x1f38] sm:$0xff]
    %v1055 = vld [vmem:[#allocation3 + $0x1f40] sm:$0xff]
    %v1056 = vld [vmem:[#allocation3 + $0x1f48] sm:$0xff]
    %v1057 = vld [vmem:[#allocation3 + $0x1f50] sm:$0xff]
    %v1058 = vld [vmem:[#allocation3 + $0x1f58] sm:$0xff]
    %v1059 = vld [vmem:[#allocation3 + $0x1f60] sm:$0xff]
    %v1060 = vld [vmem:[#allocation3 + $0x1f68] sm:$0xff]
    %v1061 = vld [vmem:[#allocation3 + $0x1f70] sm:$0xff]
    %v1062 = vld [vmem:[#allocation3 + $0x1f78] sm:$0xff]
    %v1063 = vld [vmem:[#allocation3 + $0x1f80] sm:$0xff]
    %v1064 = vld [vmem:[#allocation3 + $0x1f88] sm:$0xff]
    %v1065 = vld [vmem:[#allocation3 + $0x1f90] sm:$0xff]
    %v1066 = vld [vmem:[#allocation3 + $0x1f98] sm:$0xff]
    %v1067 = vld [vmem:[#allocation3 + $0x1fa0] sm:$0xff]
    %v1068 = vld [vmem:[#allocation3 + $0x1fa8] sm:$0xff]
    %v1069 = vld [vmem:[#allocation3 + $0x1fb0] sm:$0xff]
    %v1070 = vld [vmem:[#allocation3 + $0x1fb8] sm:$0xff]
    %v1071 = vld [vmem:[#allocation3 + $0x1fc0] sm:$0xff]
    %v1072 = vld [vmem:[#allocation3 + $0x1fc8] sm:$0xff]
    %v1073 = vld [vmem:[#allocation3 + $0x1fd0] sm:$0xff]
    %v1074 = vld [vmem:[#allocation3 + $0x1fd8] sm:$0xff]
    %v1075 = vld [vmem:[#allocation3 + $0x1fe0] sm:$0xff]
    %v1076 = vld [vmem:[#allocation3 + $0x1fe8] sm:$0xff]
    %v1077 = vld [vmem:[#allocation3 + $0x1ff0] sm:$0xff]
    %v1078 = vld [vmem:[#allocation3 + $0x1ff8] sm:$0xff]
    %v1079 = vld [vmem:[#allocation3 + $0x2000] sm:$0xff]
    %v1080 = vld [vmem:[#allocation3 + $0x2008] sm:$0xff]
    %v1081 = vld [vmem:[#allocation3 + $0x2010] sm:$0xff]
    %v1082 = vld [vmem:[#allocation3 + $0x2018] sm:$0xff]
    %v1083 = vld [vmem:[#allocation3 + $0x2020] sm:$0xff]
    %v1084 = vld [vmem:[#allocation3 + $0x2028] sm:$0xff]
    %v1085 = vld [vmem:[#allocation3 + $0x2030] sm:$0xff]
    %v1086 = vld [vmem:[#allocation3 + $0x2038] sm:$0xff]
    %v1087 = vld [vmem:[#allocation3 + $0x2040] sm:$0xff]
    %v1088 = vld [vmem:[#allocation3 + $0x2048] sm:$0xff]
    %v1089 = vld [vmem:[#allocation3 + $0x2050] sm:$0xff]
    %v1090 = vld [vmem:[#allocation3 + $0x2058] sm:$0xff]
    %v1091 = vld [vmem:[#allocation3 + $0x2060] sm:$0xff]
    %v1092 = vld [vmem:[#allocation3 + $0x2068] sm:$0xff]
    %v1093 = vld [vmem:[#allocation3 + $0x2070] sm:$0xff]
    %v1094 = vld [vmem:[#allocation3 + $0x2078] sm:$0xff]
    %v1095 = vld [vmem:[#allocation3 + $0x2080] sm:$0xff]
    %v1096 = vld [vmem:[#allocation3 + $0x2088] sm:$0xff]
    %v1097 = vld [vmem:[#allocation3 + $0x2090] sm:$0xff]
    %v1098 = vld [vmem:[#allocation3 + $0x2098] sm:$0xff]
    %v1099 = vld [vmem:[#allocation3 + $0x20a0] sm:$0xff]
    %v1100 = vld [vmem:[#allocation3 + $0x20a8] sm:$0xff]
    %v1101 = vld [vmem:[#allocation3 + $0x20b0] sm:$0xff]
    %v1102 = vld [vmem:[#allocation3 + $0x20b8] sm:$0xff]
    %v1103 = vld [vmem:[#allocation3 + $0x20c0] sm:$0xff]
    %v1104 = vld [vmem:[#allocation3 + $0x20c8] sm:$0xff]
    %v1105 = vld [vmem:[#allocation3 + $0x20d0] sm:$0xff]
    %v1106 = vld [vmem:[#allocation3 + $0x20d8] sm:$0xff]
    %v1107 = vld [vmem:[#allocation3 + $0x20e0] sm:$0xff]
    %v1108 = vld [vmem:[#allocation3 + $0x20e8] sm:$0xff]
    %v1109 = vld [vmem:[#allocation3 + $0x20f0] sm:$0xff]
    %v1110 = vld [vmem:[#allocation3 + $0x20f8] sm:$0xff]
    %v1111 = vld [vmem:[#allocation7] sm:$0xff]
    %v1112 = vld [vmem:[#allocation7 + $0x8] sm:$0xff]
    %v1113 = vld [vmem:[#allocation7 + $0x10] sm:$0x3f]
    %v1117 = vlaneseq
    %v1118 = vshrl.u32 %v1117, 7
    %v1119 = vsub.s32 0, %v1118
    %v1120 = vrot.slane %v1111, %v1119
    %v1121 = vlaneseq
    %v1122 = vshrl.u32 %v1121, 7
    %v1123 = vsub.s32 1, %v1122
    %v1124 = vrot.slane %v1111, %v1123
    %v1125 = vlaneseq
    %v1126 = vshrl.u32 %v1125, 7
    %v1127 = vsub.s32 2, %v1126
    %v1128 = vrot.slane %v1111, %v1127
    %v1129 = vlaneseq
    %v1130 = vshrl.u32 %v1129, 7
    %v1131 = vsub.s32 3, %v1130
    %v1132 = vrot.slane %v1111, %v1131
    %v1133 = vlaneseq
    %v1134 = vshrl.u32 %v1133, 7
    %v1135 = vsub.s32 4, %v1134
    %v1136 = vrot.slane %v1111, %v1135
    %v1137 = vlaneseq
    %v1138 = vshrl.u32 %v1137, 7
    %v1139 = vsub.s32 5, %v1138
    %v1140 = vrot.slane %v1111, %v1139
    %v1141 = vlaneseq
    %v1142 = vshrl.u32 %v1141, 7
    %v1143 = vsub.s32 6, %v1142
    %v1144 = vrot.slane %v1111, %v1143
    %v1145 = vlaneseq
    %v1146 = vshrl.u32 %v1145, 7
    %v1147 = vsub.s32 7, %v1146
    %v1148 = vrot.slane %v1111, %v1147
    %v1149 = vlaneseq
    %v1150 = vshrl.u32 %v1149, 7
    %v1151 = vsub.s32 0, %v1150
    %v1152 = vrot.slane %v1112, %v1151
    %v1153 = vlaneseq
    %v1154 = vshrl.u32 %v1153, 7
    %v1155 = vsub.s32 1, %v1154
    %v1156 = vrot.slane %v1112, %v1155
    %v1157 = vlaneseq
    %v1158 = vshrl.u32 %v1157, 7
    %v1159 = vsub.s32 2, %v1158
    %v1160 = vrot.slane %v1112, %v1159
    %v1161 = vlaneseq
    %v1162 = vshrl.u32 %v1161, 7
    %v1163 = vsub.s32 3, %v1162
    %v1164 = vrot.slane %v1112, %v1163
    %v1165 = vlaneseq
    %v1166 = vshrl.u32 %v1165, 7
    %v1167 = vsub.s32 4, %v1166
    %v1168 = vrot.slane %v1112, %v1167
    %v1169 = vlaneseq
    %v1170 = vshrl.u32 %v1169, 7
    %v1171 = vsub.s32 5, %v1170
    %v1172 = vrot.slane %v1112, %v1171
    %v1173 = vlaneseq
    %v1174 = vshrl.u32 %v1173, 7
    %v1175 = vsub.s32 6, %v1174
    %v1176 = vrot.slane %v1112, %v1175
    %v1177 = vlaneseq
    %v1178 = vshrl.u32 %v1177, 7
    %v1179 = vsub.s32 7, %v1178
    %v1180 = vrot.slane %v1112, %v1179
    %v1181 = vlaneseq
    %v1182 = vshrl.u32 %v1181, 7
    %v1183 = vsub.s32 0, %v1182
    %v1184 = vrot.slane %v1113, %v1183
    %v1185 = vlaneseq
    %v1186 = vshrl.u32 %v1185, 7
    %v1187 = vsub.s32 1, %v1186
    %v1188 = vrot.slane %v1113, %v1187
    %v1189 = vlaneseq
    %v1190 = vshrl.u32 %v1189, 7
    %v1191 = vsub.s32 2, %v1190
    %v1192 = vrot.slane %v1113, %v1191
    %v1193 = vlaneseq
    %v1194 = vshrl.u32 %v1193, 7
    %v1195 = vsub.s32 3, %v1194
    %v1196 = vrot.slane %v1113, %v1195
    %v1197 = vlaneseq
    %v1198 = vshrl.u32 %v1197, 7
    %v1199 = vsub.s32 4, %v1198
    %v1200 = vrot.slane %v1113, %v1199
    %v1201 = vlaneseq
    %v1202 = vshrl.u32 %v1201, 7
    %v1203 = vsub.s32 5, %v1202
    %v1204 = vrot.slane %v1113, %v1203
    %v1227 = vmul.f32 %v55, %v1120
    %v1228 = vmul.f32 %v56, %v1124
    %v1229 = vmul.f32 %v57, %v1128
    %v1230 = vmul.f32 %v58, %v1132
    %v1231 = vmul.f32 %v59, %v1136
    %v1232 = vmul.f32 %v60, %v1140
    %v1233 = vmul.f32 %v61, %v1144
    %v1234 = vmul.f32 %v62, %v1148
    %v1235 = vmul.f32 %v63, %v1152
    %v1236 = vmul.f32 %v64, %v1156
    %v1237 = vmul.f32 %v65, %v1160
    %v1238 = vmul.f32 %v66, %v1164
    %v1239 = vmul.f32 %v67, %v1168
    %v1240 = vmul.f32 %v68, %v1172
    %v1241 = vmul.f32 %v69, %v1176
    %v1242 = vmul.f32 %v70, %v1180
    %v1243 = vmul.f32 %v71, %v1184
    %v1244 = vmul.f32 %v72, %v1188
    %v1245 = vmul.f32 %v73, %v1192
    %v1246 = vmul.f32 %v74, %v1196
    %v1247 = vmul.f32 %v75, %v1200
    %v1248 = vmul.f32 %v76, %v1204
    %v1249 = vmul.f32 %v77, %v1120
    %v1250 = vmul.f32 %v78, %v1124
    %v1251 = vmul.f32 %v79, %v1128
    %v1252 = vmul.f32 %v80, %v1132
    %v1253 = vmul.f32 %v81, %v1136
    %v1254 = vmul.f32 %v82, %v1140
    %v1255 = vmul.f32 %v83, %v1144
    %v1256 = vmul.f32 %v84, %v1148
    %v1257 = vmul.f32 %v85, %v1152
    %v1258 = vmul.f32 %v86, %v1156
    %v1259 = vmul.f32 %v87, %v1160
    %v1260 = vmul.f32 %v88, %v1164
    %v1261 = vmul.f32 %v89, %v1168
    %v1262 = vmul.f32 %v90, %v1172
    %v1263 = vmul.f32 %v91, %v1176
    %v1264 = vmul.f32 %v92, %v1180
    %v1265 = vmul.f32 %v93, %v1184
    %v1266 = vmul.f32 %v94, %v1188
    %v1267 = vmul.f32 %v95, %v1192
    %v1268 = vmul.f32 %v96, %v1196
    %v1269 = vmul.f32 %v97, %v1200
    %v1270 = vmul.f32 %v98, %v1204
    %v1271 = vmul.f32 %v99, %v1120
    %v1272 = vmul.f32 %v100, %v1124
    %v1273 = vmul.f32 %v101, %v1128
    %v1274 = vmul.f32 %v102, %v1132
    %v1275 = vmul.f32 %v103, %v1136
    %v1276 = vmul.f32 %v104, %v1140
    %v1277 = vmul.f32 %v105, %v1144
    %v1278 = vmul.f32 %v106, %v1148
    %v1279 = vmul.f32 %v107, %v1152
    %v1280 = vmul.f32 %v108, %v1156
    %v1281 = vmul.f32 %v109, %v1160
    %v1282 = vmul.f32 %v110, %v1164
    %v1283 = vmul.f32 %v111, %v1168
    %v1284 = vmul.f32 %v112, %v1172
    %v1285 = vmul.f32 %v113, %v1176
    %v1286 = vmul.f32 %v114, %v1180
    %v1287 = vmul.f32 %v115, %v1184
    %v1288 = vmul.f32 %v116, %v1188
    %v1289 = vmul.f32 %v117, %v1192
    %v1290 = vmul.f32 %v118, %v1196
    %v1291 = vmul.f32 %v119, %v1200
    %v1292 = vmul.f32 %v120, %v1204
    %v1293 = vmul.f32 %v121, %v1120
    %v1294 = vmul.f32 %v122, %v1124
    %v1295 = vmul.f32 %v123, %v1128
    %v1296 = vmul.f32 %v124, %v1132
    %v1297 = vmul.f32 %v125, %v1136
    %v1298 = vmul.f32 %v126, %v1140
    %v1299 = vmul.f32 %v127, %v1144
    %v1300 = vmul.f32 %v128, %v1148
    %v1301 = vmul.f32 %v129, %v1152
    %v1302 = vmul.f32 %v130, %v1156
    %v1303 = vmul.f32 %v131, %v1160
    %v1304 = vmul.f32 %v132, %v1164
    %v1305 = vmul.f32 %v133, %v1168
    %v1306 = vmul.f32 %v134, %v1172
    %v1307 = vmul.f32 %v135, %v1176
    %v1308 = vmul.f32 %v136, %v1180
    %v1309 = vmul.f32 %v137, %v1184
    %v1310 = vmul.f32 %v138, %v1188
    %v1311 = vmul.f32 %v139, %v1192
    %v1312 = vmul.f32 %v140, %v1196
    %v1313 = vmul.f32 %v141, %v1200
    %v1314 = vmul.f32 %v142, %v1204
    %v1315 = vmul.f32 %v143, %v1120
    %v1316 = vmul.f32 %v144, %v1124
    %v1317 = vmul.f32 %v145, %v1128
    %v1318 = vmul.f32 %v146, %v1132
    %v1319 = vmul.f32 %v147, %v1136
    %v1320 = vmul.f32 %v148, %v1140
    %v1321 = vmul.f32 %v149, %v1144
    %v1322 = vmul.f32 %v150, %v1148
    %v1323 = vmul.f32 %v151, %v1152
    %v1324 = vmul.f32 %v152, %v1156
    %v1325 = vmul.f32 %v153, %v1160
    %v1326 = vmul.f32 %v154, %v1164
    %v1327 = vmul.f32 %v155, %v1168
    %v1328 = vmul.f32 %v156, %v1172
    %v1329 = vmul.f32 %v157, %v1176
    %v1330 = vmul.f32 %v158, %v1180
    %v1331 = vmul.f32 %v159, %v1184
    %v1332 = vmul.f32 %v160, %v1188
    %v1333 = vmul.f32 %v161, %v1192
    %v1334 = vmul.f32 %v162, %v1196
    %v1335 = vmul.f32 %v163, %v1200
    %v1336 = vmul.f32 %v164, %v1204
    %v1337 = vmul.f32 %v165, %v1120
    %v1338 = vmul.f32 %v166, %v1124
    %v1339 = vmul.f32 %v167, %v1128
    %v1340 = vmul.f32 %v168, %v1132
    %v1341 = vmul.f32 %v169, %v1136
    %v1342 = vmul.f32 %v170, %v1140
    %v1343 = vmul.f32 %v171, %v1144
    %v1344 = vmul.f32 %v172, %v1148
    %v1345 = vmul.f32 %v173, %v1152
    %v1346 = vmul.f32 %v174, %v1156
    %v1347 = vmul.f32 %v175, %v1160
    %v1348 = vmul.f32 %v176, %v1164
    %v1349 = vmul.f32 %v177, %v1168
    %v1350 = vmul.f32 %v178, %v1172
    %v1351 = vmul.f32 %v179, %v1176
    %v1352 = vmul.f32 %v180, %v1180
    %v1353 = vmul.f32 %v181, %v1184
    %v1354 = vmul.f32 %v182, %v1188
    %v1355 = vmul.f32 %v183, %v1192
    %v1356 = vmul.f32 %v184, %v1196
    %v1357 = vmul.f32 %v185, %v1200
    %v1358 = vmul.f32 %v186, %v1204
    %v1359 = vmul.f32 %v187, %v1120
    %v1360 = vmul.f32 %v188, %v1124
    %v1361 = vmul.f32 %v189, %v1128
    %v1362 = vmul.f32 %v190, %v1132
    %v1363 = vmul.f32 %v191, %v1136
    %v1364 = vmul.f32 %v192, %v1140
    %v1365 = vmul.f32 %v193, %v1144
    %v1366 = vmul.f32 %v194, %v1148
    %v1367 = vmul.f32 %v195, %v1152
    %v1368 = vmul.f32 %v196, %v1156
    %v1369 = vmul.f32 %v197, %v1160
    %v1370 = vmul.f32 %v198, %v1164
    %v1371 = vmul.f32 %v199, %v1168
    %v1372 = vmul.f32 %v200, %v1172
    %v1373 = vmul.f32 %v201, %v1176
    %v1374 = vmul.f32 %v202, %v1180
    %v1375 = vmul.f32 %v203, %v1184
    %v1376 = vmul.f32 %v204, %v1188
    %v1377 = vmul.f32 %v205, %v1192
    %v1378 = vmul.f32 %v206, %v1196
    %v1379 = vmul.f32 %v207, %v1200
    %v1380 = vmul.f32 %v208, %v1204
    %v1381 = vmul.f32 %v209, %v1120
    %v1382 = vmul.f32 %v210, %v1124
    %v1383 = vmul.f32 %v211, %v1128
    %v1384 = vmul.f32 %v212, %v1132
    %v1385 = vmul.f32 %v213, %v1136
    %v1386 = vmul.f32 %v214, %v1140
    %v1387 = vmul.f32 %v215, %v1144
    %v1388 = vmul.f32 %v216, %v1148
    %v1389 = vmul.f32 %v217, %v1152
    %v1390 = vmul.f32 %v218, %v1156
    %v1391 = vmul.f32 %v219, %v1160
    %v1392 = vmul.f32 %v220, %v1164
    %v1393 = vmul.f32 %v221, %v1168
    %v1394 = vmul.f32 %v222, %v1172
    %v1395 = vmul.f32 %v223, %v1176
    %v1396 = vmul.f32 %v224, %v1180
    %v1397 = vmul.f32 %v225, %v1184
    %v1398 = vmul.f32 %v226, %v1188
    %v1399 = vmul.f32 %v227, %v1192
    %v1400 = vmul.f32 %v228, %v1196
    %v1401 = vmul.f32 %v229, %v1200
    %v1402 = vmul.f32 %v230, %v1204
    %v1403 = vmul.f32 %v231, %v1120
    %v1404 = vmul.f32 %v232, %v1124
    %v1405 = vmul.f32 %v233, %v1128
    %v1406 = vmul.f32 %v234, %v1132
    %v1407 = vmul.f32 %v235, %v1136
    %v1408 = vmul.f32 %v236, %v1140
    %v1409 = vmul.f32 %v237, %v1144
    %v1410 = vmul.f32 %v238, %v1148
    %v1411 = vmul.f32 %v239, %v1152
    %v1412 = vmul.f32 %v240, %v1156
    %v1413 = vmul.f32 %v241, %v1160
    %v1414 = vmul.f32 %v242, %v1164
    %v1415 = vmul.f32 %v243, %v1168
    %v1416 = vmul.f32 %v244, %v1172
    %v1417 = vmul.f32 %v245, %v1176
    %v1418 = vmul.f32 %v246, %v1180
    %v1419 = vmul.f32 %v247, %v1184
    %v1420 = vmul.f32 %v248, %v1188
    %v1421 = vmul.f32 %v249, %v1192
    %v1422 = vmul.f32 %v250, %v1196
    %v1423 = vmul.f32 %v251, %v1200
    %v1424 = vmul.f32 %v252, %v1204
    %v1425 = vmul.f32 %v253, %v1120
    %v1426 = vmul.f32 %v254, %v1124
    %v1427 = vmul.f32 %v255, %v1128
    %v1428 = vmul.f32 %v256, %v1132
    %v1429 = vmul.f32 %v257, %v1136
    %v1430 = vmul.f32 %v258, %v1140
    %v1431 = vmul.f32 %v259, %v1144
    %v1432 = vmul.f32 %v260, %v1148
    %v1433 = vmul.f32 %v261, %v1152
    %v1434 = vmul.f32 %v262, %v1156
    %v1435 = vmul.f32 %v263, %v1160
    %v1436 = vmul.f32 %v264, %v1164
    %v1437 = vmul.f32 %v265, %v1168
    %v1438 = vmul.f32 %v266, %v1172
    %v1439 = vmul.f32 %v267, %v1176
    %v1440 = vmul.f32 %v268, %v1180
    %v1441 = vmul.f32 %v269, %v1184
    %v1442 = vmul.f32 %v270, %v1188
    %v1443 = vmul.f32 %v271, %v1192
    %v1444 = vmul.f32 %v272, %v1196
    %v1445 = vmul.f32 %v273, %v1200
    %v1446 = vmul.f32 %v274, %v1204
    %v1447 = vmul.f32 %v275, %v1120
    %v1448 = vmul.f32 %v276, %v1124
    %v1449 = vmul.f32 %v277, %v1128
    %v1450 = vmul.f32 %v278, %v1132
    %v1451 = vmul.f32 %v279, %v1136
    %v1452 = vmul.f32 %v280, %v1140
    %v1453 = vmul.f32 %v281, %v1144
    %v1454 = vmul.f32 %v282, %v1148
    %v1455 = vmul.f32 %v283, %v1152
    %v1456 = vmul.f32 %v284, %v1156
    %v1457 = vmul.f32 %v285, %v1160
    %v1458 = vmul.f32 %v286, %v1164
    %v1459 = vmul.f32 %v287, %v1168
    %v1460 = vmul.f32 %v288, %v1172
    %v1461 = vmul.f32 %v289, %v1176
    %v1462 = vmul.f32 %v290, %v1180
    %v1463 = vmul.f32 %v291, %v1184
    %v1464 = vmul.f32 %v292, %v1188
    %v1465 = vmul.f32 %v293, %v1192
    %v1466 = vmul.f32 %v294, %v1196
    %v1467 = vmul.f32 %v295, %v1200
    %v1468 = vmul.f32 %v296, %v1204
    %v1469 = vmul.f32 %v297, %v1120
    %v1470 = vmul.f32 %v298, %v1124
    %v1471 = vmul.f32 %v299, %v1128
    %v1472 = vmul.f32 %v300, %v1132
    %v1473 = vmul.f32 %v301, %v1136
    %v1474 = vmul.f32 %v302, %v1140
    %v1475 = vmul.f32 %v303, %v1144
    %v1476 = vmul.f32 %v304, %v1148
    %v1477 = vmul.f32 %v305, %v1152
    %v1478 = vmul.f32 %v306, %v1156
    %v1479 = vmul.f32 %v307, %v1160
    %v1480 = vmul.f32 %v308, %v1164
    %v1481 = vmul.f32 %v309, %v1168
    %v1482 = vmul.f32 %v310, %v1172
    %v1483 = vmul.f32 %v311, %v1176
    %v1484 = vmul.f32 %v312, %v1180
    %v1485 = vmul.f32 %v313, %v1184
    %v1486 = vmul.f32 %v314, %v1188
    %v1487 = vmul.f32 %v315, %v1192
    %v1488 = vmul.f32 %v316, %v1196
    %v1489 = vmul.f32 %v317, %v1200
    %v1490 = vmul.f32 %v318, %v1204
    %v1491 = vmul.f32 %v319, %v1120
    %v1492 = vmul.f32 %v320, %v1124
    %v1493 = vmul.f32 %v321, %v1128
    %v1494 = vmul.f32 %v322, %v1132
    %v1495 = vmul.f32 %v323, %v1136
    %v1496 = vmul.f32 %v324, %v1140
    %v1497 = vmul.f32 %v325, %v1144
    %v1498 = vmul.f32 %v326, %v1148
    %v1499 = vmul.f32 %v327, %v1152
    %v1500 = vmul.f32 %v328, %v1156
    %v1501 = vmul.f32 %v329, %v1160
    %v1502 = vmul.f32 %v330, %v1164
    %v1503 = vmul.f32 %v331, %v1168
    %v1504 = vmul.f32 %v332, %v1172
    %v1505 = vmul.f32 %v333, %v1176
    %v1506 = vmul.f32 %v334, %v1180
    %v1507 = vmul.f32 %v335, %v1184
    %v1508 = vmul.f32 %v336, %v1188
    %v1509 = vmul.f32 %v337, %v1192
    %v1510 = vmul.f32 %v338, %v1196
    %v1511 = vmul.f32 %v339, %v1200
    %v1512 = vmul.f32 %v340, %v1204
    %v1513 = vmul.f32 %v341, %v1120
    %v1514 = vmul.f32 %v342, %v1124
    %v1515 = vmul.f32 %v343, %v1128
    %v1516 = vmul.f32 %v344, %v1132
    %v1517 = vmul.f32 %v345, %v1136
    %v1518 = vmul.f32 %v346, %v1140
    %v1519 = vmul.f32 %v347, %v1144
    %v1520 = vmul.f32 %v348, %v1148
    %v1521 = vmul.f32 %v349, %v1152
    %v1522 = vmul.f32 %v350, %v1156
    %v1523 = vmul.f32 %v351, %v1160
    %v1524 = vmul.f32 %v352, %v1164
    %v1525 = vmul.f32 %v353, %v1168
    %v1526 = vmul.f32 %v354, %v1172
    %v1527 = vmul.f32 %v355, %v1176
    %v1528 = vmul.f32 %v356, %v1180
    %v1529 = vmul.f32 %v357, %v1184
    %v1530 = vmul.f32 %v358, %v1188
    %v1531 = vmul.f32 %v359, %v1192
    %v1532 = vmul.f32 %v360, %v1196
    %v1533 = vmul.f32 %v361, %v1200
    %v1534 = vmul.f32 %v362, %v1204
    %v1535 = vmul.f32 %v363, %v1120
    %v1536 = vmul.f32 %v364, %v1124
    %v1537 = vmul.f32 %v365, %v1128
    %v1538 = vmul.f32 %v366, %v1132
    %v1539 = vmul.f32 %v367, %v1136
    %v1540 = vmul.f32 %v368, %v1140
    %v1541 = vmul.f32 %v369, %v1144
    %v1542 = vmul.f32 %v370, %v1148
    %v1543 = vmul.f32 %v371, %v1152
    %v1544 = vmul.f32 %v372, %v1156
    %v1545 = vmul.f32 %v373, %v1160
    %v1546 = vmul.f32 %v374, %v1164
    %v1547 = vmul.f32 %v375, %v1168
    %v1548 = vmul.f32 %v376, %v1172
    %v1549 = vmul.f32 %v377, %v1176
    %v1550 = vmul.f32 %v378, %v1180
    %v1551 = vmul.f32 %v379, %v1184
    %v1552 = vmul.f32 %v380, %v1188
    %v1553 = vmul.f32 %v381, %v1192
    %v1554 = vmul.f32 %v382, %v1196
    %v1555 = vmul.f32 %v383, %v1200
    %v1556 = vmul.f32 %v384, %v1204
    %v1557 = vmul.f32 %v385, %v1120
    %v1558 = vmul.f32 %v386, %v1124
    %v1559 = vmul.f32 %v387, %v1128
    %v1560 = vmul.f32 %v388, %v1132
    %v1561 = vmul.f32 %v389, %v1136
    %v1562 = vmul.f32 %v390, %v1140
    %v1563 = vmul.f32 %v391, %v1144
    %v1564 = vmul.f32 %v392, %v1148
    %v1565 = vmul.f32 %v393, %v1152
    %v1566 = vmul.f32 %v394, %v1156
    %v1567 = vmul.f32 %v395, %v1160
    %v1568 = vmul.f32 %v396, %v1164
    %v1569 = vmul.f32 %v397, %v1168
    %v1570 = vmul.f32 %v398, %v1172
    %v1571 = vmul.f32 %v399, %v1176
    %v1572 = vmul.f32 %v400, %v1180
    %v1573 = vmul.f32 %v401, %v1184
    %v1574 = vmul.f32 %v402, %v1188
    %v1575 = vmul.f32 %v403, %v1192
    %v1576 = vmul.f32 %v404, %v1196
    %v1577 = vmul.f32 %v405, %v1200
    %v1578 = vmul.f32 %v406, %v1204
    %v1579 = vmul.f32 %v407, %v1120
    %v1580 = vmul.f32 %v408, %v1124
    %v1581 = vmul.f32 %v409, %v1128
    %v1582 = vmul.f32 %v410, %v1132
    %v1583 = vmul.f32 %v411, %v1136
    %v1584 = vmul.f32 %v412, %v1140
    %v1585 = vmul.f32 %v413, %v1144
    %v1586 = vmul.f32 %v414, %v1148
    %v1587 = vmul.f32 %v415, %v1152
    %v1588 = vmul.f32 %v416, %v1156
    %v1589 = vmul.f32 %v417, %v1160
    %v1590 = vmul.f32 %v418, %v1164
    %v1591 = vmul.f32 %v419, %v1168
    %v1592 = vmul.f32 %v420, %v1172
    %v1593 = vmul.f32 %v421, %v1176
    %v1594 = vmul.f32 %v422, %v1180
    %v1595 = vmul.f32 %v423, %v1184
    %v1596 = vmul.f32 %v424, %v1188
    %v1597 = vmul.f32 %v425, %v1192
    %v1598 = vmul.f32 %v426, %v1196
    %v1599 = vmul.f32 %v427, %v1200
    %v1600 = vmul.f32 %v428, %v1204
    %v1601 = vmul.f32 %v429, %v1120
    %v1602 = vmul.f32 %v430, %v1124
    %v1603 = vmul.f32 %v431, %v1128
    %v1604 = vmul.f32 %v432, %v1132
    %v1605 = vmul.f32 %v433, %v1136
    %v1606 = vmul.f32 %v434, %v1140
    %v1607 = vmul.f32 %v435, %v1144
    %v1608 = vmul.f32 %v436, %v1148
    %v1609 = vmul.f32 %v437, %v1152
    %v1610 = vmul.f32 %v438, %v1156
    %v1611 = vmul.f32 %v439, %v1160
    %v1612 = vmul.f32 %v440, %v1164
    %v1613 = vmul.f32 %v441, %v1168
    %v1614 = vmul.f32 %v442, %v1172
    %v1615 = vmul.f32 %v443, %v1176
    %v1616 = vmul.f32 %v444, %v1180
    %v1617 = vmul.f32 %v445, %v1184
    %v1618 = vmul.f32 %v446, %v1188
    %v1619 = vmul.f32 %v447, %v1192
    %v1620 = vmul.f32 %v448, %v1196
    %v1621 = vmul.f32 %v449, %v1200
    %v1622 = vmul.f32 %v450, %v1204
    %v1623 = vmul.f32 %v451, %v1120
    %v1624 = vmul.f32 %v452, %v1124
    %v1625 = vmul.f32 %v453, %v1128
    %v1626 = vmul.f32 %v454, %v1132
    %v1627 = vmul.f32 %v455, %v1136
    %v1628 = vmul.f32 %v456, %v1140
    %v1629 = vmul.f32 %v457, %v1144
    %v1630 = vmul.f32 %v458, %v1148
    %v1631 = vmul.f32 %v459, %v1152
    %v1632 = vmul.f32 %v460, %v1156
    %v1633 = vmul.f32 %v461, %v1160
    %v1634 = vmul.f32 %v462, %v1164
    %v1635 = vmul.f32 %v463, %v1168
    %v1636 = vmul.f32 %v464, %v1172
    %v1637 = vmul.f32 %v465, %v1176
    %v1638 = vmul.f32 %v466, %v1180
    %v1639 = vmul.f32 %v467, %v1184
    %v1640 = vmul.f32 %v468, %v1188
    %v1641 = vmul.f32 %v469, %v1192
    %v1642 = vmul.f32 %v470, %v1196
    %v1643 = vmul.f32 %v471, %v1200
    %v1644 = vmul.f32 %v472, %v1204
    %v1645 = vmul.f32 %v473, %v1120
    %v1646 = vmul.f32 %v474, %v1124
    %v1647 = vmul.f32 %v475, %v1128
    %v1648 = vmul.f32 %v476, %v1132
    %v1649 = vmul.f32 %v477, %v1136
    %v1650 = vmul.f32 %v478, %v1140
    %v1651 = vmul.f32 %v479, %v1144
    %v1652 = vmul.f32 %v480, %v1148
    %v1653 = vmul.f32 %v481, %v1152
    %v1654 = vmul.f32 %v482, %v1156
    %v1655 = vmul.f32 %v483, %v1160
    %v1656 = vmul.f32 %v484, %v1164
    %v1657 = vmul.f32 %v485, %v1168
    %v1658 = vmul.f32 %v486, %v1172
    %v1659 = vmul.f32 %v487, %v1176
    %v1660 = vmul.f32 %v488, %v1180
    %v1661 = vmul.f32 %v489, %v1184
    %v1662 = vmul.f32 %v490, %v1188
    %v1663 = vmul.f32 %v491, %v1192
    %v1664 = vmul.f32 %v492, %v1196
    %v1665 = vmul.f32 %v493, %v1200
    %v1666 = vmul.f32 %v494, %v1204
    %v1667 = vmul.f32 %v495, %v1120
    %v1668 = vmul.f32 %v496, %v1124
    %v1669 = vmul.f32 %v497, %v1128
    %v1670 = vmul.f32 %v498, %v1132
    %v1671 = vmul.f32 %v499, %v1136
    %v1672 = vmul.f32 %v500, %v1140
    %v1673 = vmul.f32 %v501, %v1144
    %v1674 = vmul.f32 %v502, %v1148
    %v1675 = vmul.f32 %v503, %v1152
    %v1676 = vmul.f32 %v504, %v1156
    %v1677 = vmul.f32 %v505, %v1160
    %v1678 = vmul.f32 %v506, %v1164
    %v1679 = vmul.f32 %v507, %v1168
    %v1680 = vmul.f32 %v508, %v1172
    %v1681 = vmul.f32 %v509, %v1176
    %v1682 = vmul.f32 %v510, %v1180
    %v1683 = vmul.f32 %v511, %v1184
    %v1684 = vmul.f32 %v512, %v1188
    %v1685 = vmul.f32 %v513, %v1192
    %v1686 = vmul.f32 %v514, %v1196
    %v1687 = vmul.f32 %v515, %v1200
    %v1688 = vmul.f32 %v516, %v1204
    %v1689 = vmul.f32 %v517, %v1120
    %v1690 = vmul.f32 %v518, %v1124
    %v1691 = vmul.f32 %v519, %v1128
    %v1692 = vmul.f32 %v520, %v1132
    %v1693 = vmul.f32 %v521, %v1136
    %v1694 = vmul.f32 %v522, %v1140
    %v1695 = vmul.f32 %v523, %v1144
    %v1696 = vmul.f32 %v524, %v1148
    %v1697 = vmul.f32 %v525, %v1152
    %v1698 = vmul.f32 %v526, %v1156
    %v1699 = vmul.f32 %v527, %v1160
    %v1700 = vmul.f32 %v528, %v1164
    %v1701 = vmul.f32 %v529, %v1168
    %v1702 = vmul.f32 %v530, %v1172
    %v1703 = vmul.f32 %v531, %v1176
    %v1704 = vmul.f32 %v532, %v1180
    %v1705 = vmul.f32 %v533, %v1184
    %v1706 = vmul.f32 %v534, %v1188
    %v1707 = vmul.f32 %v535, %v1192
    %v1708 = vmul.f32 %v536, %v1196
    %v1709 = vmul.f32 %v537, %v1200
    %v1710 = vmul.f32 %v538, %v1204
    %v1711 = vmul.f32 %v539, %v1120
    %v1712 = vmul.f32 %v540, %v1124
    %v1713 = vmul.f32 %v541, %v1128
    %v1714 = vmul.f32 %v542, %v1132
    %v1715 = vmul.f32 %v543, %v1136
    %v1716 = vmul.f32 %v544, %v1140
    %v1717 = vmul.f32 %v545, %v1144
    %v1718 = vmul.f32 %v546, %v1148
    %v1719 = vmul.f32 %v547, %v1152
    %v1720 = vmul.f32 %v548, %v1156
    %v1721 = vmul.f32 %v549, %v1160
    %v1722 = vmul.f32 %v550, %v1164
    %v1723 = vmul.f32 %v551, %v1168
    %v1724 = vmul.f32 %v552, %v1172
    %v1725 = vmul.f32 %v553, %v1176
    %v1726 = vmul.f32 %v554, %v1180
    %v1727 = vmul.f32 %v555, %v1184
    %v1728 = vmul.f32 %v556, %v1188
    %v1729 = vmul.f32 %v557, %v1192
    %v1730 = vmul.f32 %v558, %v1196
    %v1731 = vmul.f32 %v559, %v1200
    %v1732 = vmul.f32 %v560, %v1204
    %v1733 = vmul.f32 %v561, %v1120
    %v1734 = vmul.f32 %v562, %v1124
    %v1735 = vmul.f32 %v563, %v1128
    %v1736 = vmul.f32 %v564, %v1132
    %v1737 = vmul.f32 %v565, %v1136
    %v1738 = vmul.f32 %v566, %v1140
    %v1739 = vmul.f32 %v567, %v1144
    %v1740 = vmul.f32 %v568, %v1148
    %v1741 = vmul.f32 %v569, %v1152
    %v1742 = vmul.f32 %v570, %v1156
    %v1743 = vmul.f32 %v571, %v1160
    %v1744 = vmul.f32 %v572, %v1164
    %v1745 = vmul.f32 %v573, %v1168
    %v1746 = vmul.f32 %v574, %v1172
    %v1747 = vmul.f32 %v575, %v1176
    %v1748 = vmul.f32 %v576, %v1180
    %v1749 = vmul.f32 %v577, %v1184
    %v1750 = vmul.f32 %v578, %v1188
    %v1751 = vmul.f32 %v579, %v1192
    %v1752 = vmul.f32 %v580, %v1196
    %v1753 = vmul.f32 %v581, %v1200
    %v1754 = vmul.f32 %v582, %v1204
    %v1755 = vmul.f32 %v583, %v1120
    %v1756 = vmul.f32 %v584, %v1124
    %v1757 = vmul.f32 %v585, %v1128
    %v1758 = vmul.f32 %v586, %v1132
    %v1759 = vmul.f32 %v587, %v1136
    %v1760 = vmul.f32 %v588, %v1140
    %v1761 = vmul.f32 %v589, %v1144
    %v1762 = vmul.f32 %v590, %v1148
    %v1763 = vmul.f32 %v591, %v1152
    %v1764 = vmul.f32 %v592, %v1156
    %v1765 = vmul.f32 %v593, %v1160
    %v1766 = vmul.f32 %v594, %v1164
    %v1767 = vmul.f32 %v595, %v1168
    %v1768 = vmul.f32 %v596, %v1172
    %v1769 = vmul.f32 %v597, %v1176
    %v1770 = vmul.f32 %v598, %v1180
    %v1771 = vmul.f32 %v599, %v1184
    %v1772 = vmul.f32 %v600, %v1188
    %v1773 = vmul.f32 %v601, %v1192
    %v1774 = vmul.f32 %v602, %v1196
    %v1775 = vmul.f32 %v603, %v1200
    %v1776 = vmul.f32 %v604, %v1204
    %v1777 = vmul.f32 %v605, %v1120
    %v1778 = vmul.f32 %v606, %v1124
    %v1779 = vmul.f32 %v607, %v1128
    %v1780 = vmul.f32 %v608, %v1132
    %v1781 = vmul.f32 %v609, %v1136
    %v1782 = vmul.f32 %v610, %v1140
    %v1783 = vmul.f32 %v611, %v1144
    %v1784 = vmul.f32 %v612, %v1148
    %v1785 = vmul.f32 %v613, %v1152
    %v1786 = vmul.f32 %v614, %v1156
    %v1787 = vmul.f32 %v615, %v1160
    %v1788 = vmul.f32 %v616, %v1164
    %v1789 = vmul.f32 %v617, %v1168
    %v1790 = vmul.f32 %v618, %v1172
    %v1791 = vmul.f32 %v619, %v1176
    %v1792 = vmul.f32 %v620, %v1180
    %v1793 = vmul.f32 %v621, %v1184
    %v1794 = vmul.f32 %v622, %v1188
    %v1795 = vmul.f32 %v623, %v1192
    %v1796 = vmul.f32 %v624, %v1196
    %v1797 = vmul.f32 %v625, %v1200
    %v1798 = vmul.f32 %v626, %v1204
    %v1799 = vmul.f32 %v627, %v1120
    %v1800 = vmul.f32 %v628, %v1124
    %v1801 = vmul.f32 %v629, %v1128
    %v1802 = vmul.f32 %v630, %v1132
    %v1803 = vmul.f32 %v631, %v1136
    %v1804 = vmul.f32 %v632, %v1140
    %v1805 = vmul.f32 %v633, %v1144
    %v1806 = vmul.f32 %v634, %v1148
    %v1807 = vmul.f32 %v635, %v1152
    %v1808 = vmul.f32 %v636, %v1156
    %v1809 = vmul.f32 %v637, %v1160
    %v1810 = vmul.f32 %v638, %v1164
    %v1811 = vmul.f32 %v639, %v1168
    %v1812 = vmul.f32 %v640, %v1172
    %v1813 = vmul.f32 %v641, %v1176
    %v1814 = vmul.f32 %v642, %v1180
    %v1815 = vmul.f32 %v643, %v1184
    %v1816 = vmul.f32 %v644, %v1188
    %v1817 = vmul.f32 %v645, %v1192
    %v1818 = vmul.f32 %v646, %v1196
    %v1819 = vmul.f32 %v647, %v1200
    %v1820 = vmul.f32 %v648, %v1204
    %v1821 = vmul.f32 %v649, %v1120
    %v1822 = vmul.f32 %v650, %v1124
    %v1823 = vmul.f32 %v651, %v1128
    %v1824 = vmul.f32 %v652, %v1132
    %v1825 = vmul.f32 %v653, %v1136
    %v1826 = vmul.f32 %v654, %v1140
    %v1827 = vmul.f32 %v655, %v1144
    %v1828 = vmul.f32 %v656, %v1148
    %v1829 = vmul.f32 %v657, %v1152
    %v1830 = vmul.f32 %v658, %v1156
    %v1831 = vmul.f32 %v659, %v1160
    %v1832 = vmul.f32 %v660, %v1164
    %v1833 = vmul.f32 %v661, %v1168
    %v1834 = vmul.f32 %v662, %v1172
    %v1835 = vmul.f32 %v663, %v1176
    %v1836 = vmul.f32 %v664, %v1180
    %v1837 = vmul.f32 %v665, %v1184
    %v1838 = vmul.f32 %v666, %v1188
    %v1839 = vmul.f32 %v667, %v1192
    %v1840 = vmul.f32 %v668, %v1196
    %v1841 = vmul.f32 %v669, %v1200
    %v1842 = vmul.f32 %v670, %v1204
    %v1843 = vmul.f32 %v671, %v1120
    %v1844 = vmul.f32 %v672, %v1124
    %v1845 = vmul.f32 %v673, %v1128
    %v1846 = vmul.f32 %v674, %v1132
    %v1847 = vmul.f32 %v675, %v1136
    %v1848 = vmul.f32 %v676, %v1140
    %v1849 = vmul.f32 %v677, %v1144
    %v1850 = vmul.f32 %v678, %v1148
    %v1851 = vmul.f32 %v679, %v1152
    %v1852 = vmul.f32 %v680, %v1156
    %v1853 = vmul.f32 %v681, %v1160
    %v1854 = vmul.f32 %v682, %v1164
    %v1855 = vmul.f32 %v683, %v1168
    %v1856 = vmul.f32 %v684, %v1172
    %v1857 = vmul.f32 %v685, %v1176
    %v1858 = vmul.f32 %v686, %v1180
    %v1859 = vmul.f32 %v687, %v1184
    %v1860 = vmul.f32 %v688, %v1188
    %v1861 = vmul.f32 %v689, %v1192
    %v1862 = vmul.f32 %v690, %v1196
    %v1863 = vmul.f32 %v691, %v1200
    %v1864 = vmul.f32 %v692, %v1204
    %v1865 = vmul.f32 %v693, %v1120
    %v1866 = vmul.f32 %v694, %v1124
    %v1867 = vmul.f32 %v695, %v1128
    %v1868 = vmul.f32 %v696, %v1132
    %v1869 = vmul.f32 %v697, %v1136
    %v1870 = vmul.f32 %v698, %v1140
    %v1871 = vmul.f32 %v699, %v1144
    %v1872 = vmul.f32 %v700, %v1148
    %v1873 = vmul.f32 %v701, %v1152
    %v1874 = vmul.f32 %v702, %v1156
    %v1875 = vmul.f32 %v703, %v1160
    %v1876 = vmul.f32 %v704, %v1164
    %v1877 = vmul.f32 %v705, %v1168
    %v1878 = vmul.f32 %v706, %v1172
    %v1879 = vmul.f32 %v707, %v1176
    %v1880 = vmul.f32 %v708, %v1180
    %v1881 = vmul.f32 %v709, %v1184
    %v1882 = vmul.f32 %v710, %v1188
    %v1883 = vmul.f32 %v711, %v1192
    %v1884 = vmul.f32 %v712, %v1196
    %v1885 = vmul.f32 %v713, %v1200
    %v1886 = vmul.f32 %v714, %v1204
    %v1887 = vmul.f32 %v715, %v1120
    %v1888 = vmul.f32 %v716, %v1124
    %v1889 = vmul.f32 %v717, %v1128
    %v1890 = vmul.f32 %v718, %v1132
    %v1891 = vmul.f32 %v719, %v1136
    %v1892 = vmul.f32 %v720, %v1140
    %v1893 = vmul.f32 %v721, %v1144
    %v1894 = vmul.f32 %v722, %v1148
    %v1895 = vmul.f32 %v723, %v1152
    %v1896 = vmul.f32 %v724, %v1156
    %v1897 = vmul.f32 %v725, %v1160
    %v1898 = vmul.f32 %v726, %v1164
    %v1899 = vmul.f32 %v727, %v1168
    %v1900 = vmul.f32 %v728, %v1172
    %v1901 = vmul.f32 %v729, %v1176
    %v1902 = vmul.f32 %v730, %v1180
    %v1903 = vmul.f32 %v731, %v1184
    %v1904 = vmul.f32 %v732, %v1188
    %v1905 = vmul.f32 %v733, %v1192
    %v1906 = vmul.f32 %v734, %v1196
    %v1907 = vmul.f32 %v735, %v1200
    %v1908 = vmul.f32 %v736, %v1204
    %v1909 = vmul.f32 %v737, %v1120
    %v1910 = vmul.f32 %v738, %v1124
    %v1911 = vmul.f32 %v739, %v1128
    %v1912 = vmul.f32 %v740, %v1132
    %v1913 = vmul.f32 %v741, %v1136
    %v1914 = vmul.f32 %v742, %v1140
    %v1915 = vmul.f32 %v743, %v1144
    %v1916 = vmul.f32 %v744, %v1148
    %v1917 = vmul.f32 %v745, %v1152
    %v1918 = vmul.f32 %v746, %v1156
    %v1919 = vmul.f32 %v747, %v1160
    %v1920 = vmul.f32 %v748, %v1164
    %v1921 = vmul.f32 %v749, %v1168
    %v1922 = vmul.f32 %v750, %v1172
    %v1923 = vmul.f32 %v751, %v1176
    %v1924 = vmul.f32 %v752, %v1180
    %v1925 = vmul.f32 %v753, %v1184
    %v1926 = vmul.f32 %v754, %v1188
    %v1927 = vmul.f32 %v755, %v1192
    %v1928 = vmul.f32 %v756, %v1196
    %v1929 = vmul.f32 %v757, %v1200
    %v1930 = vmul.f32 %v758, %v1204
    %v1931 = vmul.f32 %v759, %v1120
    %v1932 = vmul.f32 %v760, %v1124
    %v1933 = vmul.f32 %v761, %v1128
    %v1934 = vmul.f32 %v762, %v1132
    %v1935 = vmul.f32 %v763, %v1136
    %v1936 = vmul.f32 %v764, %v1140
    %v1937 = vmul.f32 %v765, %v1144
    %v1938 = vmul.f32 %v766, %v1148
    %v1939 = vmul.f32 %v767, %v1152
    %v1940 = vmul.f32 %v768, %v1156
    %v1941 = vmul.f32 %v769, %v1160
    %v1942 = vmul.f32 %v770, %v1164
    %v1943 = vmul.f32 %v771, %v1168
    %v1944 = vmul.f32 %v772, %v1172
    %v1945 = vmul.f32 %v773, %v1176
    %v1946 = vmul.f32 %v774, %v1180
    %v1947 = vmul.f32 %v775, %v1184
    %v1948 = vmul.f32 %v776, %v1188
    %v1949 = vmul.f32 %v777, %v1192
    %v1950 = vmul.f32 %v778, %v1196
    %v1951 = vmul.f32 %v779, %v1200
    %v1952 = vmul.f32 %v780, %v1204
    %v1953 = vmul.f32 %v781, %v1120
    %v1954 = vmul.f32 %v782, %v1124
    %v1955 = vmul.f32 %v783, %v1128
    %v1956 = vmul.f32 %v784, %v1132
    %v1957 = vmul.f32 %v785, %v1136
    %v1958 = vmul.f32 %v786, %v1140
    %v1959 = vmul.f32 %v787, %v1144
    %v1960 = vmul.f32 %v788, %v1148
    %v1961 = vmul.f32 %v789, %v1152
    %v1962 = vmul.f32 %v790, %v1156
    %v1963 = vmul.f32 %v791, %v1160
    %v1964 = vmul.f32 %v792, %v1164
    %v1965 = vmul.f32 %v793, %v1168
    %v1966 = vmul.f32 %v794, %v1172
    %v1967 = vmul.f32 %v795, %v1176
    %v1968 = vmul.f32 %v796, %v1180
    %v1969 = vmul.f32 %v797, %v1184
    %v1970 = vmul.f32 %v798, %v1188
    %v1971 = vmul.f32 %v799, %v1192
    %v1972 = vmul.f32 %v800, %v1196
    %v1973 = vmul.f32 %v801, %v1200
    %v1974 = vmul.f32 %v802, %v1204
    %v1975 = vmul.f32 %v803, %v1120
    %v1976 = vmul.f32 %v804, %v1124
    %v1977 = vmul.f32 %v805, %v1128
    %v1978 = vmul.f32 %v806, %v1132
    %v1979 = vmul.f32 %v807, %v1136
    %v1980 = vmul.f32 %v808, %v1140
    %v1981 = vmul.f32 %v809, %v1144
    %v1982 = vmul.f32 %v810, %v1148
    %v1983 = vmul.f32 %v811, %v1152
    %v1984 = vmul.f32 %v812, %v1156
    %v1985 = vmul.f32 %v813, %v1160
    %v1986 = vmul.f32 %v814, %v1164
    %v1987 = vmul.f32 %v815, %v1168
    %v1988 = vmul.f32 %v816, %v1172
    %v1989 = vmul.f32 %v817, %v1176
    %v1990 = vmul.f32 %v818, %v1180
    %v1991 = vmul.f32 %v819, %v1184
    %v1992 = vmul.f32 %v820, %v1188
    %v1993 = vmul.f32 %v821, %v1192
    %v1994 = vmul.f32 %v822, %v1196
    %v1995 = vmul.f32 %v823, %v1200
    %v1996 = vmul.f32 %v824, %v1204
    %v1997 = vmul.f32 %v825, %v1120
    %v1998 = vmul.f32 %v826, %v1124
    %v1999 = vmul.f32 %v827, %v1128
    %v2000 = vmul.f32 %v828, %v1132
    %v2001 = vmul.f32 %v829, %v1136
    %v2002 = vmul.f32 %v830, %v1140
    %v2003 = vmul.f32 %v831, %v1144
    %v2004 = vmul.f32 %v832, %v1148
    %v2005 = vmul.f32 %v833, %v1152
    %v2006 = vmul.f32 %v834, %v1156
    %v2007 = vmul.f32 %v835, %v1160
    %v2008 = vmul.f32 %v836, %v1164
    %v2009 = vmul.f32 %v837, %v1168
    %v2010 = vmul.f32 %v838, %v1172
    %v2011 = vmul.f32 %v839, %v1176
    %v2012 = vmul.f32 %v840, %v1180
    %v2013 = vmul.f32 %v841, %v1184
    %v2014 = vmul.f32 %v842, %v1188
    %v2015 = vmul.f32 %v843, %v1192
    %v2016 = vmul.f32 %v844, %v1196
    %v2017 = vmul.f32 %v845, %v1200
    %v2018 = vmul.f32 %v846, %v1204
    %v2019 = vmul.f32 %v847, %v1120
    %v2020 = vmul.f32 %v848, %v1124
    %v2021 = vmul.f32 %v849, %v1128
    %v2022 = vmul.f32 %v850, %v1132
    %v2023 = vmul.f32 %v851, %v1136
    %v2024 = vmul.f32 %v852, %v1140
    %v2025 = vmul.f32 %v853, %v1144
    %v2026 = vmul.f32 %v854, %v1148
    %v2027 = vmul.f32 %v855, %v1152
    %v2028 = vmul.f32 %v856, %v1156
    %v2029 = vmul.f32 %v857, %v1160
    %v2030 = vmul.f32 %v858, %v1164
    %v2031 = vmul.f32 %v859, %v1168
    %v2032 = vmul.f32 %v860, %v1172
    %v2033 = vmul.f32 %v861, %v1176
    %v2034 = vmul.f32 %v862, %v1180
    %v2035 = vmul.f32 %v863, %v1184
    %v2036 = vmul.f32 %v864, %v1188
    %v2037 = vmul.f32 %v865, %v1192
    %v2038 = vmul.f32 %v866, %v1196
    %v2039 = vmul.f32 %v867, %v1200
    %v2040 = vmul.f32 %v868, %v1204
    %v2041 = vmul.f32 %v869, %v1120
    %v2042 = vmul.f32 %v870, %v1124
    %v2043 = vmul.f32 %v871, %v1128
    %v2044 = vmul.f32 %v872, %v1132
    %v2045 = vmul.f32 %v873, %v1136
    %v2046 = vmul.f32 %v874, %v1140
    %v2047 = vmul.f32 %v875, %v1144
    %v2048 = vmul.f32 %v876, %v1148
    %v2049 = vmul.f32 %v877, %v1152
    %v2050 = vmul.f32 %v878, %v1156
    %v2051 = vmul.f32 %v879, %v1160
    %v2052 = vmul.f32 %v880, %v1164
    %v2053 = vmul.f32 %v881, %v1168
    %v2054 = vmul.f32 %v882, %v1172
    %v2055 = vmul.f32 %v883, %v1176
    %v2056 = vmul.f32 %v884, %v1180
    %v2057 = vmul.f32 %v885, %v1184
    %v2058 = vmul.f32 %v886, %v1188
    %v2059 = vmul.f32 %v887, %v1192
    %v2060 = vmul.f32 %v888, %v1196
    %v2061 = vmul.f32 %v889, %v1200
    %v2062 = vmul.f32 %v890, %v1204
    %v2063 = vmul.f32 %v891, %v1120
    %v2064 = vmul.f32 %v892, %v1124
    %v2065 = vmul.f32 %v893, %v1128
    %v2066 = vmul.f32 %v894, %v1132
    %v2067 = vmul.f32 %v895, %v1136
    %v2068 = vmul.f32 %v896, %v1140
    %v2069 = vmul.f32 %v897, %v1144
    %v2070 = vmul.f32 %v898, %v1148
    %v2071 = vmul.f32 %v899, %v1152
    %v2072 = vmul.f32 %v900, %v1156
    %v2073 = vmul.f32 %v901, %v1160
    %v2074 = vmul.f32 %v902, %v1164
    %v2075 = vmul.f32 %v903, %v1168
    %v2076 = vmul.f32 %v904, %v1172
    %v2077 = vmul.f32 %v905, %v1176
    %v2078 = vmul.f32 %v906, %v1180
    %v2079 = vmul.f32 %v907, %v1184
    %v2080 = vmul.f32 %v908, %v1188
    %v2081 = vmul.f32 %v909, %v1192
    %v2082 = vmul.f32 %v910, %v1196
    %v2083 = vmul.f32 %v911, %v1200
    %v2084 = vmul.f32 %v912, %v1204
    %v2085 = vmul.f32 %v913, %v1120
    %v2086 = vmul.f32 %v914, %v1124
    %v2087 = vmul.f32 %v915, %v1128
    %v2088 = vmul.f32 %v916, %v1132
    %v2089 = vmul.f32 %v917, %v1136
    %v2090 = vmul.f32 %v918, %v1140
    %v2091 = vmul.f32 %v919, %v1144
    %v2092 = vmul.f32 %v920, %v1148
    %v2093 = vmul.f32 %v921, %v1152
    %v2094 = vmul.f32 %v922, %v1156
    %v2095 = vmul.f32 %v923, %v1160
    %v2096 = vmul.f32 %v924, %v1164
    %v2097 = vmul.f32 %v925, %v1168
    %v2098 = vmul.f32 %v926, %v1172
    %v2099 = vmul.f32 %v927, %v1176
    %v2100 = vmul.f32 %v928, %v1180
    %v2101 = vmul.f32 %v929, %v1184
    %v2102 = vmul.f32 %v930, %v1188
    %v2103 = vmul.f32 %v931, %v1192
    %v2104 = vmul.f32 %v932, %v1196
    %v2105 = vmul.f32 %v933, %v1200
    %v2106 = vmul.f32 %v934, %v1204
    %v2107 = vmul.f32 %v935, %v1120
    %v2108 = vmul.f32 %v936, %v1124
    %v2109 = vmul.f32 %v937, %v1128
    %v2110 = vmul.f32 %v938, %v1132
    %v2111 = vmul.f32 %v939, %v1136
    %v2112 = vmul.f32 %v940, %v1140
    %v2113 = vmul.f32 %v941, %v1144
    %v2114 = vmul.f32 %v942, %v1148
    %v2115 = vmul.f32 %v943, %v1152
    %v2116 = vmul.f32 %v944, %v1156
    %v2117 = vmul.f32 %v945, %v1160
    %v2118 = vmul.f32 %v946, %v1164
    %v2119 = vmul.f32 %v947, %v1168
    %v2120 = vmul.f32 %v948, %v1172
    %v2121 = vmul.f32 %v949, %v1176
    %v2122 = vmul.f32 %v950, %v1180
    %v2123 = vmul.f32 %v951, %v1184
    %v2124 = vmul.f32 %v952, %v1188
    %v2125 = vmul.f32 %v953, %v1192
    %v2126 = vmul.f32 %v954, %v1196
    %v2127 = vmul.f32 %v955, %v1200
    %v2128 = vmul.f32 %v956, %v1204
    %v2129 = vmul.f32 %v957, %v1120
    %v2130 = vmul.f32 %v958, %v1124
    %v2131 = vmul.f32 %v959, %v1128
    %v2132 = vmul.f32 %v960, %v1132
    %v2133 = vmul.f32 %v961, %v1136
    %v2134 = vmul.f32 %v962, %v1140
    %v2135 = vmul.f32 %v963, %v1144
    %v2136 = vmul.f32 %v964, %v1148
    %v2137 = vmul.f32 %v965, %v1152
    %v2138 = vmul.f32 %v966, %v1156
    %v2139 = vmul.f32 %v967, %v1160
    %v2140 = vmul.f32 %v968, %v1164
    %v2141 = vmul.f32 %v969, %v1168
    %v2142 = vmul.f32 %v970, %v1172
    %v2143 = vmul.f32 %v971, %v1176
    %v2144 = vmul.f32 %v972, %v1180
    %v2145 = vmul.f32 %v973, %v1184
    %v2146 = vmul.f32 %v974, %v1188
    %v2147 = vmul.f32 %v975, %v1192
    %v2148 = vmul.f32 %v976, %v1196
    %v2149 = vmul.f32 %v977, %v1200
    %v2150 = vmul.f32 %v978, %v1204
    %v2151 = vmul.f32 %v979, %v1120
    %v2152 = vmul.f32 %v980, %v1124
    %v2153 = vmul.f32 %v981, %v1128
    %v2154 = vmul.f32 %v982, %v1132
    %v2155 = vmul.f32 %v983, %v1136
    %v2156 = vmul.f32 %v984, %v1140
    %v2157 = vmul.f32 %v985, %v1144
    %v2158 = vmul.f32 %v986, %v1148
    %v2159 = vmul.f32 %v987, %v1152
    %v2160 = vmul.f32 %v988, %v1156
    %v2161 = vmul.f32 %v989, %v1160
    %v2162 = vmul.f32 %v990, %v1164
    %v2163 = vmul.f32 %v991, %v1168
    %v2164 = vmul.f32 %v992, %v1172
    %v2165 = vmul.f32 %v993, %v1176
    %v2166 = vmul.f32 %v994, %v1180
    %v2167 = vmul.f32 %v995, %v1184
    %v2168 = vmul.f32 %v996, %v1188
    %v2169 = vmul.f32 %v997, %v1192
    %v2170 = vmul.f32 %v998, %v1196
    %v2171 = vmul.f32 %v999, %v1200
    %v2172 = vmul.f32 %v1000, %v1204
    %v2173 = vmul.f32 %v1001, %v1120
    %v2174 = vmul.f32 %v1002, %v1124
    %v2175 = vmul.f32 %v1003, %v1128
    %v2176 = vmul.f32 %v1004, %v1132
    %v2177 = vmul.f32 %v1005, %v1136
    %v2178 = vmul.f32 %v1006, %v1140
    %v2179 = vmul.f32 %v1007, %v1144
    %v2180 = vmul.f32 %v1008, %v1148
    %v2181 = vmul.f32 %v1009, %v1152
    %v2182 = vmul.f32 %v1010, %v1156
    %v2183 = vmul.f32 %v1011, %v1160
    %v2184 = vmul.f32 %v1012, %v1164
    %v2185 = vmul.f32 %v1013, %v1168
    %v2186 = vmul.f32 %v1014, %v1172
    %v2187 = vmul.f32 %v1015, %v1176
    %v2188 = vmul.f32 %v1016, %v1180
    %v2189 = vmul.f32 %v1017, %v1184
    %v2190 = vmul.f32 %v1018, %v1188
    %v2191 = vmul.f32 %v1019, %v1192
    %v2192 = vmul.f32 %v1020, %v1196
    %v2193 = vmul.f32 %v1021, %v1200
    %v2194 = vmul.f32 %v1022, %v1204
    %v2195 = vmul.f32 %v1023, %v1120
    %v2196 = vmul.f32 %v1024, %v1124
    %v2197 = vmul.f32 %v1025, %v1128
    %v2198 = vmul.f32 %v1026, %v1132
    %v2199 = vmul.f32 %v1027, %v1136
    %v2200 = vmul.f32 %v1028, %v1140
    %v2201 = vmul.f32 %v1029, %v1144
    %v2202 = vmul.f32 %v1030, %v1148
    %v2203 = vmul.f32 %v1031, %v1152
    %v2204 = vmul.f32 %v1032, %v1156
    %v2205 = vmul.f32 %v1033, %v1160
    %v2206 = vmul.f32 %v1034, %v1164
    %v2207 = vmul.f32 %v1035, %v1168
    %v2208 = vmul.f32 %v1036, %v1172
    %v2209 = vmul.f32 %v1037, %v1176
    %v2210 = vmul.f32 %v1038, %v1180
    %v2211 = vmul.f32 %v1039, %v1184
    %v2212 = vmul.f32 %v1040, %v1188
    %v2213 = vmul.f32 %v1041, %v1192
    %v2214 = vmul.f32 %v1042, %v1196
    %v2215 = vmul.f32 %v1043, %v1200
    %v2216 = vmul.f32 %v1044, %v1204
    %v2217 = vmul.f32 %v1045, %v1120
    %v2218 = vmul.f32 %v1046, %v1124
    %v2219 = vmul.f32 %v1047, %v1128
    %v2220 = vmul.f32 %v1048, %v1132
    %v2221 = vmul.f32 %v1049, %v1136
    %v2222 = vmul.f32 %v1050, %v1140
    %v2223 = vmul.f32 %v1051, %v1144
    %v2224 = vmul.f32 %v1052, %v1148
    %v2225 = vmul.f32 %v1053, %v1152
    %v2226 = vmul.f32 %v1054, %v1156
    %v2227 = vmul.f32 %v1055, %v1160
    %v2228 = vmul.f32 %v1056, %v1164
    %v2229 = vmul.f32 %v1057, %v1168
    %v2230 = vmul.f32 %v1058, %v1172
    %v2231 = vmul.f32 %v1059, %v1176
    %v2232 = vmul.f32 %v1060, %v1180
    %v2233 = vmul.f32 %v1061, %v1184
    %v2234 = vmul.f32 %v1062, %v1188
    %v2235 = vmul.f32 %v1063, %v1192
    %v2236 = vmul.f32 %v1064, %v1196
    %v2237 = vmul.f32 %v1065, %v1200
    %v2238 = vmul.f32 %v1066, %v1204
    %v2239 = vmul.f32 %v1067, %v1120
    %v2240 = vmul.f32 %v1068, %v1124
    %v2241 = vmul.f32 %v1069, %v1128
    %v2242 = vmul.f32 %v1070, %v1132
    %v2243 = vmul.f32 %v1071, %v1136
    %v2244 = vmul.f32 %v1072, %v1140
    %v2245 = vmul.f32 %v1073, %v1144
    %v2246 = vmul.f32 %v1074, %v1148
    %v2247 = vmul.f32 %v1075, %v1152
    %v2248 = vmul.f32 %v1076, %v1156
    %v2249 = vmul.f32 %v1077, %v1160
    %v2250 = vmul.f32 %v1078, %v1164
    %v2251 = vmul.f32 %v1079, %v1168
    %v2252 = vmul.f32 %v1080, %v1172
    %v2253 = vmul.f32 %v1081, %v1176
    %v2254 = vmul.f32 %v1082, %v1180
    %v2255 = vmul.f32 %v1083, %v1184
    %v2256 = vmul.f32 %v1084, %v1188
    %v2257 = vmul.f32 %v1085, %v1192
    %v2258 = vmul.f32 %v1086, %v1196
    %v2259 = vmul.f32 %v1087, %v1200
    %v2260 = vmul.f32 %v1088, %v1204
    %v2261 = vmul.f32 %v1089, %v1120
    %v2262 = vmul.f32 %v1090, %v1124
    %v2263 = vmul.f32 %v1091, %v1128
    %v2264 = vmul.f32 %v1092, %v1132
    %v2265 = vmul.f32 %v1093, %v1136
    %v2266 = vmul.f32 %v1094, %v1140
    %v2267 = vmul.f32 %v1095, %v1144
    %v2268 = vmul.f32 %v1096, %v1148
    %v2269 = vmul.f32 %v1097, %v1152
    %v2270 = vmul.f32 %v1098, %v1156
    %v2271 = vmul.f32 %v1099, %v1160
    %v2272 = vmul.f32 %v1100, %v1164
    %v2273 = vmul.f32 %v1101, %v1168
    %v2274 = vmul.f32 %v1102, %v1172
    %v2275 = vmul.f32 %v1103, %v1176
    %v2276 = vmul.f32 %v1104, %v1180
    %v2277 = vmul.f32 %v1105, %v1184
    %v2278 = vmul.f32 %v1106, %v1188
    %v2279 = vmul.f32 %v1107, %v1192
    %v2280 = vmul.f32 %v1108, %v1196
    %v2281 = vmul.f32 %v1109, %v1200
    %v2282 = vmul.f32 %v1110, %v1204
    %v2283 = vadd.f32 %v1227, %v1228
    %v2284 = vadd.f32 %v2283, %v1229
    %v2285 = vadd.f32 %v2284, %v1230
    %v2286 = vadd.f32 %v2285, %v1231
    %v2287 = vadd.f32 %v2286, %v1232
    %v2288 = vadd.f32 %v2287, %v1233
    %v2289 = vadd.f32 %v2288, %v1234
    %v2290 = vadd.f32 %v2289, %v1235
    %v2291 = vadd.f32 %v2290, %v1236
    %v2292 = vadd.f32 %v2291, %v1237
    %v2293 = vadd.f32 %v2292, %v1238
    %v2294 = vadd.f32 %v2293, %v1239
    %v2295 = vadd.f32 %v2294, %v1240
    %v2296 = vadd.f32 %v2295, %v1241
    %v2297 = vadd.f32 %v2296, %v1242
    %v2298 = vadd.f32 %v2297, %v1243
    %v2299 = vadd.f32 %v2298, %v1244
    %v2300 = vadd.f32 %v2299, %v1245
    %v2301 = vadd.f32 %v2300, %v1246
    %v2302 = vadd.f32 %v2301, %v1247
    %vm2303 = vcmask 130048
    %v2304 = vsel %vm2303, %v1248, 0.0
    %v2305 = vadd.f32 %v2302, %v2304
    %2306 = vadd.xlane.f32.xlu0 %v2305
    %v2307 = vpop.xlane.xlu0 %2306
    %v2308 = vadd.f32 %v1249, %v1250
    %v2309 = vadd.f32 %v2308, %v1251
    %v2310 = vadd.f32 %v2309, %v1252
    %v2311 = vadd.f32 %v2310, %v1253
    %v2312 = vadd.f32 %v2311, %v1254
    %v2313 = vadd.f32 %v2312, %v1255
    %v2314 = vadd.f32 %v2313, %v1256
    %v2315 = vadd.f32 %v2314, %v1257
    %v2316 = vadd.f32 %v2315, %v1258
    %v2317 = vadd.f32 %v2316, %v1259
    %v2318 = vadd.f32 %v2317, %v1260
    %v2319 = vadd.f32 %v2318, %v1261
    %v2320 = vadd.f32 %v2319, %v1262
    %v2321 = vadd.f32 %v2320, %v1263
    %v2322 = vadd.f32 %v2321, %v1264
    %v2323 = vadd.f32 %v2322, %v1265
    %v2324 = vadd.f32 %v2323, %v1266
    %v2325 = vadd.f32 %v2324, %v1267
    %v2326 = vadd.f32 %v2325, %v1268
    %v2327 = vadd.f32 %v2326, %v1269
    %v2328 = vsel %vm2303, %v1270, 0.0
    %v2329 = vadd.f32 %v2327, %v2328
    %2330 = vadd.xlane.f32.xlu0 %v2329
    %v2331 = vpop.xlane.xlu0 %2330
    %v2332 = vadd.f32 %v1271, %v1272
    %v2333 = vadd.f32 %v2332, %v1273
    %v2334 = vadd.f32 %v2333, %v1274
    %v2335 = vadd.f32 %v2334, %v1275
    %v2336 = vadd.f32 %v2335, %v1276
    %v2337 = vadd.f32 %v2336, %v1277
    %v2338 = vadd.f32 %v2337, %v1278
    %v2339 = vadd.f32 %v2338, %v1279
    %v2340 = vadd.f32 %v2339, %v1280
    %v2341 = vadd.f32 %v2340, %v1281
    %v2342 = vadd.f32 %v2341, %v1282
    %v2343 = vadd.f32 %v2342, %v1283
    %v2344 = vadd.f32 %v2343, %v1284
    %v2345 = vadd.f32 %v2344, %v1285
    %v2346 = vadd.f32 %v2345, %v1286
    %v2347 = vadd.f32 %v2346, %v1287
    %v2348 = vadd.f32 %v2347, %v1288
    %v2349 = vadd.f32 %v2348, %v1289
    %v2350 = vadd.f32 %v2349, %v1290
    %v2351 = vadd.f32 %v2350, %v1291
    %v2352 = vsel %vm2303, %v1292, 0.0
    %v2353 = vadd.f32 %v2351, %v2352
    %2354 = vadd.xlane.f32.xlu0 %v2353
    %v2355 = vpop.xlane.xlu0 %2354
    %v2356 = vadd.f32 %v1293, %v1294
    %v2357 = vadd.f32 %v2356, %v1295
    %v2358 = vadd.f32 %v2357, %v1296
    %v2359 = vadd.f32 %v2358, %v1297
    %v2360 = vadd.f32 %v2359, %v1298
    %v2361 = vadd.f32 %v2360, %v1299
    %v2362 = vadd.f32 %v2361, %v1300
    %v2363 = vadd.f32 %v2362, %v1301
    %v2364 = vadd.f32 %v2363, %v1302
    %v2365 = vadd.f32 %v2364, %v1303
    %v2366 = vadd.f32 %v2365, %v1304
    %v2367 = vadd.f32 %v2366, %v1305
    %v2368 = vadd.f32 %v2367, %v1306
    %v2369 = vadd.f32 %v2368, %v1307
    %v2370 = vadd.f32 %v2369, %v1308
    %v2371 = vadd.f32 %v2370, %v1309
    %v2372 = vadd.f32 %v2371, %v1310
    %v2373 = vadd.f32 %v2372, %v1311
    %v2374 = vadd.f32 %v2373, %v1312
    %v2375 = vadd.f32 %v2374, %v1313
    %v2376 = vsel %vm2303, %v1314, 0.0
    %v2377 = vadd.f32 %v2375, %v2376
    %2378 = vadd.xlane.f32.xlu0 %v2377
    %v2379 = vpop.xlane.xlu0 %2378
    %v2380 = vadd.f32 %v1315, %v1316
    %v2381 = vadd.f32 %v2380, %v1317
    %v2382 = vadd.f32 %v2381, %v1318
    %v2383 = vadd.f32 %v2382, %v1319
    %v2384 = vadd.f32 %v2383, %v1320
    %v2385 = vadd.f32 %v2384, %v1321
    %v2386 = vadd.f32 %v2385, %v1322
    %v2387 = vadd.f32 %v2386, %v1323
    %v2388 = vadd.f32 %v2387, %v1324
    %v2389 = vadd.f32 %v2388, %v1325
    %v2390 = vadd.f32 %v2389, %v1326
    %v2391 = vadd.f32 %v2390, %v1327
    %v2392 = vadd.f32 %v2391, %v1328
    %v2393 = vadd.f32 %v2392, %v1329
    %v2394 = vadd.f32 %v2393, %v1330
    %v2395 = vadd.f32 %v2394, %v1331
    %v2396 = vadd.f32 %v2395, %v1332
    %v2397 = vadd.f32 %v2396, %v1333
    %v2398 = vadd.f32 %v2397, %v1334
    %v2399 = vadd.f32 %v2398, %v1335
    %v2400 = vsel %vm2303, %v1336, 0.0
    %v2401 = vadd.f32 %v2399, %v2400
    %2402 = vadd.xlane.f32.xlu0 %v2401
    %v2403 = vpop.xlane.xlu0 %2402
    %v2404 = vadd.f32 %v1337, %v1338
    %v2405 = vadd.f32 %v2404, %v1339
    %v2406 = vadd.f32 %v2405, %v1340
    %v2407 = vadd.f32 %v2406, %v1341
    %v2408 = vadd.f32 %v2407, %v1342
    %v2409 = vadd.f32 %v2408, %v1343
    %v2410 = vadd.f32 %v2409, %v1344
    %v2411 = vadd.f32 %v2410, %v1345
    %v2412 = vadd.f32 %v2411, %v1346
    %v2413 = vadd.f32 %v2412, %v1347
    %v2414 = vadd.f32 %v2413, %v1348
    %v2415 = vadd.f32 %v2414, %v1349
    %v2416 = vadd.f32 %v2415, %v1350
    %v2417 = vadd.f32 %v2416, %v1351
    %v2418 = vadd.f32 %v2417, %v1352
    %v2419 = vadd.f32 %v2418, %v1353
    %v2420 = vadd.f32 %v2419, %v1354
    %v2421 = vadd.f32 %v2420, %v1355
    %v2422 = vadd.f32 %v2421, %v1356
    %v2423 = vadd.f32 %v2422, %v1357
    %v2424 = vsel %vm2303, %v1358, 0.0
    %v2425 = vadd.f32 %v2423, %v2424
    %2426 = vadd.xlane.f32.xlu0 %v2425
    %v2427 = vpop.xlane.xlu0 %2426
    %v2428 = vadd.f32 %v1359, %v1360
    %v2429 = vadd.f32 %v2428, %v1361
    %v2430 = vadd.f32 %v2429, %v1362
    %v2431 = vadd.f32 %v2430, %v1363
    %v2432 = vadd.f32 %v2431, %v1364
    %v2433 = vadd.f32 %v2432, %v1365
    %v2434 = vadd.f32 %v2433, %v1366
    %v2435 = vadd.f32 %v2434, %v1367
    %v2436 = vadd.f32 %v2435, %v1368
    %v2437 = vadd.f32 %v2436, %v1369
    %v2438 = vadd.f32 %v2437, %v1370
    %v2439 = vadd.f32 %v2438, %v1371
    %v2440 = vadd.f32 %v2439, %v1372
    %v2441 = vadd.f32 %v2440, %v1373
    %v2442 = vadd.f32 %v2441, %v1374
    %v2443 = vadd.f32 %v2442, %v1375
    %v2444 = vadd.f32 %v2443, %v1376
    %v2445 = vadd.f32 %v2444, %v1377
    %v2446 = vadd.f32 %v2445, %v1378
    %v2447 = vadd.f32 %v2446, %v1379
    %v2448 = vsel %vm2303, %v1380, 0.0
    %v2449 = vadd.f32 %v2447, %v2448
    %2450 = vadd.xlane.f32.xlu0 %v2449
    %v2451 = vpop.xlane.xlu0 %2450
    %v2452 = vadd.f32 %v1381, %v1382
    %v2453 = vadd.f32 %v2452, %v1383
    %v2454 = vadd.f32 %v2453, %v1384
    %v2455 = vadd.f32 %v2454, %v1385
    %v2456 = vadd.f32 %v2455, %v1386
    %v2457 = vadd.f32 %v2456, %v1387
    %v2458 = vadd.f32 %v2457, %v1388
    %v2459 = vadd.f32 %v2458, %v1389
    %v2460 = vadd.f32 %v2459, %v1390
    %v2461 = vadd.f32 %v2460, %v1391
    %v2462 = vadd.f32 %v2461, %v1392
    %v2463 = vadd.f32 %v2462, %v1393
    %v2464 = vadd.f32 %v2463, %v1394
    %v2465 = vadd.f32 %v2464, %v1395
    %v2466 = vadd.f32 %v2465, %v1396
    %v2467 = vadd.f32 %v2466, %v1397
    %v2468 = vadd.f32 %v2467, %v1398
    %v2469 = vadd.f32 %v2468, %v1399
    %v2470 = vadd.f32 %v2469, %v1400
    %v2471 = vadd.f32 %v2470, %v1401
    %v2472 = vsel %vm2303, %v1402, 0.0
    %v2473 = vadd.f32 %v2471, %v2472
    %2474 = vadd.xlane.f32.xlu0 %v2473
    %v2475 = vpop.xlane.xlu0 %2474
    %v2476 = vadd.f32 %v1403, %v1404
    %v2477 = vadd.f32 %v2476, %v1405
    %v2478 = vadd.f32 %v2477, %v1406
    %v2479 = vadd.f32 %v2478, %v1407
    %v2480 = vadd.f32 %v2479, %v1408
    %v2481 = vadd.f32 %v2480, %v1409
    %v2482 = vadd.f32 %v2481, %v1410
    %v2483 = vadd.f32 %v2482, %v1411
    %v2484 = vadd.f32 %v2483, %v1412
    %v2485 = vadd.f32 %v2484, %v1413
    %v2486 = vadd.f32 %v2485, %v1414
    %v2487 = vadd.f32 %v2486, %v1415
    %v2488 = vadd.f32 %v2487, %v1416
    %v2489 = vadd.f32 %v2488, %v1417
    %v2490 = vadd.f32 %v2489, %v1418
    %v2491 = vadd.f32 %v2490, %v1419
    %v2492 = vadd.f32 %v2491, %v1420
    %v2493 = vadd.f32 %v2492, %v1421
    %v2494 = vadd.f32 %v2493, %v1422
    %v2495 = vadd.f32 %v2494, %v1423
    %v2496 = vsel %vm2303, %v1424, 0.0
    %v2497 = vadd.f32 %v2495, %v2496
    %2498 = vadd.xlane.f32.xlu0 %v2497
    %v2499 = vpop.xlane.xlu0 %2498
    %v2500 = vadd.f32 %v1425, %v1426
    %v2501 = vadd.f32 %v2500, %v1427
    %v2502 = vadd.f32 %v2501, %v1428
    %v2503 = vadd.f32 %v2502, %v1429
    %v2504 = vadd.f32 %v2503, %v1430
    %v2505 = vadd.f32 %v2504, %v1431
    %v2506 = vadd.f32 %v2505, %v1432
    %v2507 = vadd.f32 %v2506, %v1433
    %v2508 = vadd.f32 %v2507, %v1434
    %v2509 = vadd.f32 %v2508, %v1435
    %v2510 = vadd.f32 %v2509, %v1436
    %v2511 = vadd.f32 %v2510, %v1437
    %v2512 = vadd.f32 %v2511, %v1438
    %v2513 = vadd.f32 %v2512, %v1439
    %v2514 = vadd.f32 %v2513, %v1440
    %v2515 = vadd.f32 %v2514, %v1441
    %v2516 = vadd.f32 %v2515, %v1442
    %v2517 = vadd.f32 %v2516, %v1443
    %v2518 = vadd.f32 %v2517, %v1444
    %v2519 = vadd.f32 %v2518, %v1445
    %v2520 = vsel %vm2303, %v1446, 0.0
    %v2521 = vadd.f32 %v2519, %v2520
    %2522 = vadd.xlane.f32.xlu0 %v2521
    %v2523 = vpop.xlane.xlu0 %2522
    %v2524 = vadd.f32 %v1447, %v1448
    %v2525 = vadd.f32 %v2524, %v1449
    %v2526 = vadd.f32 %v2525, %v1450
    %v2527 = vadd.f32 %v2526, %v1451
    %v2528 = vadd.f32 %v2527, %v1452
    %v2529 = vadd.f32 %v2528, %v1453
    %v2530 = vadd.f32 %v2529, %v1454
    %v2531 = vadd.f32 %v2530, %v1455
    %v2532 = vadd.f32 %v2531, %v1456
    %v2533 = vadd.f32 %v2532, %v1457
    %v2534 = vadd.f32 %v2533, %v1458
    %v2535 = vadd.f32 %v2534, %v1459
    %v2536 = vadd.f32 %v2535, %v1460
    %v2537 = vadd.f32 %v2536, %v1461
    %v2538 = vadd.f32 %v2537, %v1462
    %v2539 = vadd.f32 %v2538, %v1463
    %v2540 = vadd.f32 %v2539, %v1464
    %v2541 = vadd.f32 %v2540, %v1465
    %v2542 = vadd.f32 %v2541, %v1466
    %v2543 = vadd.f32 %v2542, %v1467
    %v2544 = vsel %vm2303, %v1468, 0.0
    %v2545 = vadd.f32 %v2543, %v2544
    %2546 = vadd.xlane.f32.xlu0 %v2545
    %v2547 = vpop.xlane.xlu0 %2546
    %v2548 = vadd.f32 %v1469, %v1470
    %v2549 = vadd.f32 %v2548, %v1471
    %v2550 = vadd.f32 %v2549, %v1472
    %v2551 = vadd.f32 %v2550, %v1473
    %v2552 = vadd.f32 %v2551, %v1474
    %v2553 = vadd.f32 %v2552, %v1475
    %v2554 = vadd.f32 %v2553, %v1476
    %v2555 = vadd.f32 %v2554, %v1477
    %v2556 = vadd.f32 %v2555, %v1478
    %v2557 = vadd.f32 %v2556, %v1479
    %v2558 = vadd.f32 %v2557, %v1480
    %v2559 = vadd.f32 %v2558, %v1481
    %v2560 = vadd.f32 %v2559, %v1482
    %v2561 = vadd.f32 %v2560, %v1483
    %v2562 = vadd.f32 %v2561, %v1484
    %v2563 = vadd.f32 %v2562, %v1485
    %v2564 = vadd.f32 %v2563, %v1486
    %v2565 = vadd.f32 %v2564, %v1487
    %v2566 = vadd.f32 %v2565, %v1488
    %v2567 = vadd.f32 %v2566, %v1489
    %v2568 = vsel %vm2303, %v1490, 0.0
    %v2569 = vadd.f32 %v2567, %v2568
    %2570 = vadd.xlane.f32.xlu0 %v2569
    %v2571 = vpop.xlane.xlu0 %2570
    %v2572 = vadd.f32 %v1491, %v1492
    %v2573 = vadd.f32 %v2572, %v1493
    %v2574 = vadd.f32 %v2573, %v1494
    %v2575 = vadd.f32 %v2574, %v1495
    %v2576 = vadd.f32 %v2575, %v1496
    %v2577 = vadd.f32 %v2576, %v1497
    %v2578 = vadd.f32 %v2577, %v1498
    %v2579 = vadd.f32 %v2578, %v1499
    %v2580 = vadd.f32 %v2579, %v1500
    %v2581 = vadd.f32 %v2580, %v1501
    %v2582 = vadd.f32 %v2581, %v1502
    %v2583 = vadd.f32 %v2582, %v1503
    %v2584 = vadd.f32 %v2583, %v1504
    %v2585 = vadd.f32 %v2584, %v1505
    %v2586 = vadd.f32 %v2585, %v1506
    %v2587 = vadd.f32 %v2586, %v1507
    %v2588 = vadd.f32 %v2587, %v1508
    %v2589 = vadd.f32 %v2588, %v1509
    %v2590 = vadd.f32 %v2589, %v1510
    %v2591 = vadd.f32 %v2590, %v1511
    %v2592 = vsel %vm2303, %v1512, 0.0
    %v2593 = vadd.f32 %v2591, %v2592
    %2594 = vadd.xlane.f32.xlu0 %v2593
    %v2595 = vpop.xlane.xlu0 %2594
    %v2596 = vadd.f32 %v1513, %v1514
    %v2597 = vadd.f32 %v2596, %v1515
    %v2598 = vadd.f32 %v2597, %v1516
    %v2599 = vadd.f32 %v2598, %v1517
    %v2600 = vadd.f32 %v2599, %v1518
    %v2601 = vadd.f32 %v2600, %v1519
    %v2602 = vadd.f32 %v2601, %v1520
    %v2603 = vadd.f32 %v2602, %v1521
    %v2604 = vadd.f32 %v2603, %v1522
    %v2605 = vadd.f32 %v2604, %v1523
    %v2606 = vadd.f32 %v2605, %v1524
    %v2607 = vadd.f32 %v2606, %v1525
    %v2608 = vadd.f32 %v2607, %v1526
    %v2609 = vadd.f32 %v2608, %v1527
    %v2610 = vadd.f32 %v2609, %v1528
    %v2611 = vadd.f32 %v2610, %v1529
    %v2612 = vadd.f32 %v2611, %v1530
    %v2613 = vadd.f32 %v2612, %v1531
    %v2614 = vadd.f32 %v2613, %v1532
    %v2615 = vadd.f32 %v2614, %v1533
    %v2616 = vsel %vm2303, %v1534, 0.0
    %v2617 = vadd.f32 %v2615, %v2616
    %2618 = vadd.xlane.f32.xlu0 %v2617
    %v2619 = vpop.xlane.xlu0 %2618
    %v2620 = vadd.f32 %v1535, %v1536
    %v2621 = vadd.f32 %v2620, %v1537
    %v2622 = vadd.f32 %v2621, %v1538
    %v2623 = vadd.f32 %v2622, %v1539
    %v2624 = vadd.f32 %v2623, %v1540
    %v2625 = vadd.f32 %v2624, %v1541
    %v2626 = vadd.f32 %v2625, %v1542
    %v2627 = vadd.f32 %v2626, %v1543
    %v2628 = vadd.f32 %v2627, %v1544
    %v2629 = vadd.f32 %v2628, %v1545
    %v2630 = vadd.f32 %v2629, %v1546
    %v2631 = vadd.f32 %v2630, %v1547
    %v2632 = vadd.f32 %v2631, %v1548
    %v2633 = vadd.f32 %v2632, %v1549
    %v2634 = vadd.f32 %v2633, %v1550
    %v2635 = vadd.f32 %v2634, %v1551
    %v2636 = vadd.f32 %v2635, %v1552
    %v2637 = vadd.f32 %v2636, %v1553
    %v2638 = vadd.f32 %v2637, %v1554
    %v2639 = vadd.f32 %v2638, %v1555
    %v2640 = vsel %vm2303, %v1556, 0.0
    %v2641 = vadd.f32 %v2639, %v2640
    %2642 = vadd.xlane.f32.xlu0 %v2641
    %v2643 = vpop.xlane.xlu0 %2642
    %v2644 = vadd.f32 %v1557, %v1558
    %v2645 = vadd.f32 %v2644, %v1559
    %v2646 = vadd.f32 %v2645, %v1560
    %v2647 = vadd.f32 %v2646, %v1561
    %v2648 = vadd.f32 %v2647, %v1562
    %v2649 = vadd.f32 %v2648, %v1563
    %v2650 = vadd.f32 %v2649, %v1564
    %v2651 = vadd.f32 %v2650, %v1565
    %v2652 = vadd.f32 %v2651, %v1566
    %v2653 = vadd.f32 %v2652, %v1567
    %v2654 = vadd.f32 %v2653, %v1568
    %v2655 = vadd.f32 %v2654, %v1569
    %v2656 = vadd.f32 %v2655, %v1570
    %v2657 = vadd.f32 %v2656, %v1571
    %v2658 = vadd.f32 %v2657, %v1572
    %v2659 = vadd.f32 %v2658, %v1573
    %v2660 = vadd.f32 %v2659, %v1574
    %v2661 = vadd.f32 %v2660, %v1575
    %v2662 = vadd.f32 %v2661, %v1576
    %v2663 = vadd.f32 %v2662, %v1577
    %v2664 = vsel %vm2303, %v1578, 0.0
    %v2665 = vadd.f32 %v2663, %v2664
    %2666 = vadd.xlane.f32.xlu0 %v2665
    %v2667 = vpop.xlane.xlu0 %2666
    %v2668 = vadd.f32 %v1579, %v1580
    %v2669 = vadd.f32 %v2668, %v1581
    %v2670 = vadd.f32 %v2669, %v1582
    %v2671 = vadd.f32 %v2670, %v1583
    %v2672 = vadd.f32 %v2671, %v1584
    %v2673 = vadd.f32 %v2672, %v1585
    %v2674 = vadd.f32 %v2673, %v1586
    %v2675 = vadd.f32 %v2674, %v1587
    %v2676 = vadd.f32 %v2675, %v1588
    %v2677 = vadd.f32 %v2676, %v1589
    %v2678 = vadd.f32 %v2677, %v1590
    %v2679 = vadd.f32 %v2678, %v1591
    %v2680 = vadd.f32 %v2679, %v1592
    %v2681 = vadd.f32 %v2680, %v1593
    %v2682 = vadd.f32 %v2681, %v1594
    %v2683 = vadd.f32 %v2682, %v1595
    %v2684 = vadd.f32 %v2683, %v1596
    %v2685 = vadd.f32 %v2684, %v1597
    %v2686 = vadd.f32 %v2685, %v1598
    %v2687 = vadd.f32 %v2686, %v1599
    %v2688 = vsel %vm2303, %v1600, 0.0
    %v2689 = vadd.f32 %v2687, %v2688
    %2690 = vadd.xlane.f32.xlu0 %v2689
    %v2691 = vpop.xlane.xlu0 %2690
    %v2692 = vadd.f32 %v1601, %v1602
    %v2693 = vadd.f32 %v2692, %v1603
    %v2694 = vadd.f32 %v2693, %v1604
    %v2695 = vadd.f32 %v2694, %v1605
    %v2696 = vadd.f32 %v2695, %v1606
    %v2697 = vadd.f32 %v2696, %v1607
    %v2698 = vadd.f32 %v2697, %v1608
    %v2699 = vadd.f32 %v2698, %v1609
    %v2700 = vadd.f32 %v2699, %v1610
    %v2701 = vadd.f32 %v2700, %v1611
    %v2702 = vadd.f32 %v2701, %v1612
    %v2703 = vadd.f32 %v2702, %v1613
    %v2704 = vadd.f32 %v2703, %v1614
    %v2705 = vadd.f32 %v2704, %v1615
    %v2706 = vadd.f32 %v2705, %v1616
    %v2707 = vadd.f32 %v2706, %v1617
    %v2708 = vadd.f32 %v2707, %v1618
    %v2709 = vadd.f32 %v2708, %v1619
    %v2710 = vadd.f32 %v2709, %v1620
    %v2711 = vadd.f32 %v2710, %v1621
    %v2712 = vsel %vm2303, %v1622, 0.0
    %v2713 = vadd.f32 %v2711, %v2712
    %2714 = vadd.xlane.f32.xlu0 %v2713
    %v2715 = vpop.xlane.xlu0 %2714
    %v2716 = vadd.f32 %v1623, %v1624
    %v2717 = vadd.f32 %v2716, %v1625
    %v2718 = vadd.f32 %v2717, %v1626
    %v2719 = vadd.f32 %v2718, %v1627
    %v2720 = vadd.f32 %v2719, %v1628
    %v2721 = vadd.f32 %v2720, %v1629
    %v2722 = vadd.f32 %v2721, %v1630
    %v2723 = vadd.f32 %v2722, %v1631
    %v2724 = vadd.f32 %v2723, %v1632
    %v2725 = vadd.f32 %v2724, %v1633
    %v2726 = vadd.f32 %v2725, %v1634
    %v2727 = vadd.f32 %v2726, %v1635
    %v2728 = vadd.f32 %v2727, %v1636
    %v2729 = vadd.f32 %v2728, %v1637
    %v2730 = vadd.f32 %v2729, %v1638
    %v2731 = vadd.f32 %v2730, %v1639
    %v2732 = vadd.f32 %v2731, %v1640
    %v2733 = vadd.f32 %v2732, %v1641
    %v2734 = vadd.f32 %v2733, %v1642
    %v2735 = vadd.f32 %v2734, %v1643
    %v2736 = vsel %vm2303, %v1644, 0.0
    %v2737 = vadd.f32 %v2735, %v2736
    %2738 = vadd.xlane.f32.xlu0 %v2737
    %v2739 = vpop.xlane.xlu0 %2738
    %v2740 = vadd.f32 %v1645, %v1646
    %v2741 = vadd.f32 %v2740, %v1647
    %v2742 = vadd.f32 %v2741, %v1648
    %v2743 = vadd.f32 %v2742, %v1649
    %v2744 = vadd.f32 %v2743, %v1650
    %v2745 = vadd.f32 %v2744, %v1651
    %v2746 = vadd.f32 %v2745, %v1652
    %v2747 = vadd.f32 %v2746, %v1653
    %v2748 = vadd.f32 %v2747, %v1654
    %v2749 = vadd.f32 %v2748, %v1655
    %v2750 = vadd.f32 %v2749, %v1656
    %v2751 = vadd.f32 %v2750, %v1657
    %v2752 = vadd.f32 %v2751, %v1658
    %v2753 = vadd.f32 %v2752, %v1659
    %v2754 = vadd.f32 %v2753, %v1660
    %v2755 = vadd.f32 %v2754, %v1661
    %v2756 = vadd.f32 %v2755, %v1662
    %v2757 = vadd.f32 %v2756, %v1663
    %v2758 = vadd.f32 %v2757, %v1664
    %v2759 = vadd.f32 %v2758, %v1665
    %v2760 = vsel %vm2303, %v1666, 0.0
    %v2761 = vadd.f32 %v2759, %v2760
    %2762 = vadd.xlane.f32.xlu0 %v2761
    %v2763 = vpop.xlane.xlu0 %2762
    %v2764 = vadd.f32 %v1667, %v1668
    %v2765 = vadd.f32 %v2764, %v1669
    %v2766 = vadd.f32 %v2765, %v1670
    %v2767 = vadd.f32 %v2766, %v1671
    %v2768 = vadd.f32 %v2767, %v1672
    %v2769 = vadd.f32 %v2768, %v1673
    %v2770 = vadd.f32 %v2769, %v1674
    %v2771 = vadd.f32 %v2770, %v1675
    %v2772 = vadd.f32 %v2771, %v1676
    %v2773 = vadd.f32 %v2772, %v1677
    %v2774 = vadd.f32 %v2773, %v1678
    %v2775 = vadd.f32 %v2774, %v1679
    %v2776 = vadd.f32 %v2775, %v1680
    %v2777 = vadd.f32 %v2776, %v1681
    %v2778 = vadd.f32 %v2777, %v1682
    %v2779 = vadd.f32 %v2778, %v1683
    %v2780 = vadd.f32 %v2779, %v1684
    %v2781 = vadd.f32 %v2780, %v1685
    %v2782 = vadd.f32 %v2781, %v1686
    %v2783 = vadd.f32 %v2782, %v1687
    %v2784 = vsel %vm2303, %v1688, 0.0
    %v2785 = vadd.f32 %v2783, %v2784
    %2786 = vadd.xlane.f32.xlu0 %v2785
    %v2787 = vpop.xlane.xlu0 %2786
    %v2788 = vadd.f32 %v1689, %v1690
    %v2789 = vadd.f32 %v2788, %v1691
    %v2790 = vadd.f32 %v2789, %v1692
    %v2791 = vadd.f32 %v2790, %v1693
    %v2792 = vadd.f32 %v2791, %v1694
    %v2793 = vadd.f32 %v2792, %v1695
    %v2794 = vadd.f32 %v2793, %v1696
    %v2795 = vadd.f32 %v2794, %v1697
    %v2796 = vadd.f32 %v2795, %v1698
    %v2797 = vadd.f32 %v2796, %v1699
    %v2798 = vadd.f32 %v2797, %v1700
    %v2799 = vadd.f32 %v2798, %v1701
    %v2800 = vadd.f32 %v2799, %v1702
    %v2801 = vadd.f32 %v2800, %v1703
    %v2802 = vadd.f32 %v2801, %v1704
    %v2803 = vadd.f32 %v2802, %v1705
    %v2804 = vadd.f32 %v2803, %v1706
    %v2805 = vadd.f32 %v2804, %v1707
    %v2806 = vadd.f32 %v2805, %v1708
    %v2807 = vadd.f32 %v2806, %v1709
    %v2808 = vsel %vm2303, %v1710, 0.0
    %v2809 = vadd.f32 %v2807, %v2808
    %2810 = vadd.xlane.f32.xlu0 %v2809
    %v2811 = vpop.xlane.xlu0 %2810
    %v2812 = vadd.f32 %v1711, %v1712
    %v2813 = vadd.f32 %v2812, %v1713
    %v2814 = vadd.f32 %v2813, %v1714
    %v2815 = vadd.f32 %v2814, %v1715
    %v2816 = vadd.f32 %v2815, %v1716
    %v2817 = vadd.f32 %v2816, %v1717
    %v2818 = vadd.f32 %v2817, %v1718
    %v2819 = vadd.f32 %v2818, %v1719
    %v2820 = vadd.f32 %v2819, %v1720
    %v2821 = vadd.f32 %v2820, %v1721
    %v2822 = vadd.f32 %v2821, %v1722
    %v2823 = vadd.f32 %v2822, %v1723
    %v2824 = vadd.f32 %v2823, %v1724
    %v2825 = vadd.f32 %v2824, %v1725
    %v2826 = vadd.f32 %v2825, %v1726
    %v2827 = vadd.f32 %v2826, %v1727
    %v2828 = vadd.f32 %v2827, %v1728
    %v2829 = vadd.f32 %v2828, %v1729
    %v2830 = vadd.f32 %v2829, %v1730
    %v2831 = vadd.f32 %v2830, %v1731
    %v2832 = vsel %vm2303, %v1732, 0.0
    %v2833 = vadd.f32 %v2831, %v2832
    %2834 = vadd.xlane.f32.xlu0 %v2833
    %v2835 = vpop.xlane.xlu0 %2834
    %v2836 = vadd.f32 %v1733, %v1734
    %v2837 = vadd.f32 %v2836, %v1735
    %v2838 = vadd.f32 %v2837, %v1736
    %v2839 = vadd.f32 %v2838, %v1737
    %v2840 = vadd.f32 %v2839, %v1738
    %v2841 = vadd.f32 %v2840, %v1739
    %v2842 = vadd.f32 %v2841, %v1740
    %v2843 = vadd.f32 %v2842, %v1741
    %v2844 = vadd.f32 %v2843, %v1742
    %v2845 = vadd.f32 %v2844, %v1743
    %v2846 = vadd.f32 %v2845, %v1744
    %v2847 = vadd.f32 %v2846, %v1745
    %v2848 = vadd.f32 %v2847, %v1746
    %v2849 = vadd.f32 %v2848, %v1747
    %v2850 = vadd.f32 %v2849, %v1748
    %v2851 = vadd.f32 %v2850, %v1749
    %v2852 = vadd.f32 %v2851, %v1750
    %v2853 = vadd.f32 %v2852, %v1751
    %v2854 = vadd.f32 %v2853, %v1752
    %v2855 = vadd.f32 %v2854, %v1753
    %v2856 = vsel %vm2303, %v1754, 0.0
    %v2857 = vadd.f32 %v2855, %v2856
    %2858 = vadd.xlane.f32.xlu0 %v2857
    %v2859 = vpop.xlane.xlu0 %2858
    %v2860 = vadd.f32 %v1755, %v1756
    %v2861 = vadd.f32 %v2860, %v1757
    %v2862 = vadd.f32 %v2861, %v1758
    %v2863 = vadd.f32 %v2862, %v1759
    %v2864 = vadd.f32 %v2863, %v1760
    %v2865 = vadd.f32 %v2864, %v1761
    %v2866 = vadd.f32 %v2865, %v1762
    %v2867 = vadd.f32 %v2866, %v1763
    %v2868 = vadd.f32 %v2867, %v1764
    %v2869 = vadd.f32 %v2868, %v1765
    %v2870 = vadd.f32 %v2869, %v1766
    %v2871 = vadd.f32 %v2870, %v1767
    %v2872 = vadd.f32 %v2871, %v1768
    %v2873 = vadd.f32 %v2872, %v1769
    %v2874 = vadd.f32 %v2873, %v1770
    %v2875 = vadd.f32 %v2874, %v1771
    %v2876 = vadd.f32 %v2875, %v1772
    %v2877 = vadd.f32 %v2876, %v1773
    %v2878 = vadd.f32 %v2877, %v1774
    %v2879 = vadd.f32 %v2878, %v1775
    %v2880 = vsel %vm2303, %v1776, 0.0
    %v2881 = vadd.f32 %v2879, %v2880
    %2882 = vadd.xlane.f32.xlu0 %v2881
    %v2883 = vpop.xlane.xlu0 %2882
    %v2884 = vadd.f32 %v1777, %v1778
    %v2885 = vadd.f32 %v2884, %v1779
    %v2886 = vadd.f32 %v2885, %v1780
    %v2887 = vadd.f32 %v2886, %v1781
    %v2888 = vadd.f32 %v2887, %v1782
    %v2889 = vadd.f32 %v2888, %v1783
    %v2890 = vadd.f32 %v2889, %v1784
    %v2891 = vadd.f32 %v2890, %v1785
    %v2892 = vadd.f32 %v2891, %v1786
    %v2893 = vadd.f32 %v2892, %v1787
    %v2894 = vadd.f32 %v2893, %v1788
    %v2895 = vadd.f32 %v2894, %v1789
    %v2896 = vadd.f32 %v2895, %v1790
    %v2897 = vadd.f32 %v2896, %v1791
    %v2898 = vadd.f32 %v2897, %v1792
    %v2899 = vadd.f32 %v2898, %v1793
    %v2900 = vadd.f32 %v2899, %v1794
    %v2901 = vadd.f32 %v2900, %v1795
    %v2902 = vadd.f32 %v2901, %v1796
    %v2903 = vadd.f32 %v2902, %v1797
    %v2904 = vsel %vm2303, %v1798, 0.0
    %v2905 = vadd.f32 %v2903, %v2904
    %2906 = vadd.xlane.f32.xlu0 %v2905
    %v2907 = vpop.xlane.xlu0 %2906
    %v2908 = vadd.f32 %v1799, %v1800
    %v2909 = vadd.f32 %v2908, %v1801
    %v2910 = vadd.f32 %v2909, %v1802
    %v2911 = vadd.f32 %v2910, %v1803
    %v2912 = vadd.f32 %v2911, %v1804
    %v2913 = vadd.f32 %v2912, %v1805
    %v2914 = vadd.f32 %v2913, %v1806
    %v2915 = vadd.f32 %v2914, %v1807
    %v2916 = vadd.f32 %v2915, %v1808
    %v2917 = vadd.f32 %v2916, %v1809
    %v2918 = vadd.f32 %v2917, %v1810
    %v2919 = vadd.f32 %v2918, %v1811
    %v2920 = vadd.f32 %v2919, %v1812
    %v2921 = vadd.f32 %v2920, %v1813
    %v2922 = vadd.f32 %v2921, %v1814
    %v2923 = vadd.f32 %v2922, %v1815
    %v2924 = vadd.f32 %v2923, %v1816
    %v2925 = vadd.f32 %v2924, %v1817
    %v2926 = vadd.f32 %v2925, %v1818
    %v2927 = vadd.f32 %v2926, %v1819
    %v2928 = vsel %vm2303, %v1820, 0.0
    %v2929 = vadd.f32 %v2927, %v2928
    %2930 = vadd.xlane.f32.xlu0 %v2929
    %v2931 = vpop.xlane.xlu0 %2930
    %v2932 = vadd.f32 %v1821, %v1822
    %v2933 = vadd.f32 %v2932, %v1823
    %v2934 = vadd.f32 %v2933, %v1824
    %v2935 = vadd.f32 %v2934, %v1825
    %v2936 = vadd.f32 %v2935, %v1826
    %v2937 = vadd.f32 %v2936, %v1827
    %v2938 = vadd.f32 %v2937, %v1828
    %v2939 = vadd.f32 %v2938, %v1829
    %v2940 = vadd.f32 %v2939, %v1830
    %v2941 = vadd.f32 %v2940, %v1831
    %v2942 = vadd.f32 %v2941, %v1832
    %v2943 = vadd.f32 %v2942, %v1833
    %v2944 = vadd.f32 %v2943, %v1834
    %v2945 = vadd.f32 %v2944, %v1835
    %v2946 = vadd.f32 %v2945, %v1836
    %v2947 = vadd.f32 %v2946, %v1837
    %v2948 = vadd.f32 %v2947, %v1838
    %v2949 = vadd.f32 %v2948, %v1839
    %v2950 = vadd.f32 %v2949, %v1840
    %v2951 = vadd.f32 %v2950, %v1841
    %v2952 = vsel %vm2303, %v1842, 0.0
    %v2953 = vadd.f32 %v2951, %v2952
    %2954 = vadd.xlane.f32.xlu0 %v2953
    %v2955 = vpop.xlane.xlu0 %2954
    %v2956 = vadd.f32 %v1843, %v1844
    %v2957 = vadd.f32 %v2956, %v1845
    %v2958 = vadd.f32 %v2957, %v1846
    %v2959 = vadd.f32 %v2958, %v1847
    %v2960 = vadd.f32 %v2959, %v1848
    %v2961 = vadd.f32 %v2960, %v1849
    %v2962 = vadd.f32 %v2961, %v1850
    %v2963 = vadd.f32 %v2962, %v1851
    %v2964 = vadd.f32 %v2963, %v1852
    %v2965 = vadd.f32 %v2964, %v1853
    %v2966 = vadd.f32 %v2965, %v1854
    %v2967 = vadd.f32 %v2966, %v1855
    %v2968 = vadd.f32 %v2967, %v1856
    %v2969 = vadd.f32 %v2968, %v1857
    %v2970 = vadd.f32 %v2969, %v1858
    %v2971 = vadd.f32 %v2970, %v1859
    %v2972 = vadd.f32 %v2971, %v1860
    %v2973 = vadd.f32 %v2972, %v1861
    %v2974 = vadd.f32 %v2973, %v1862
    %v2975 = vadd.f32 %v2974, %v1863
    %v2976 = vsel %vm2303, %v1864, 0.0
    %v2977 = vadd.f32 %v2975, %v2976
    %2978 = vadd.xlane.f32.xlu0 %v2977
    %v2979 = vpop.xlane.xlu0 %2978
    %v2980 = vadd.f32 %v1865, %v1866
    %v2981 = vadd.f32 %v2980, %v1867
    %v2982 = vadd.f32 %v2981, %v1868
    %v2983 = vadd.f32 %v2982, %v1869
    %v2984 = vadd.f32 %v2983, %v1870
    %v2985 = vadd.f32 %v2984, %v1871
    %v2986 = vadd.f32 %v2985, %v1872
    %v2987 = vadd.f32 %v2986, %v1873
    %v2988 = vadd.f32 %v2987, %v1874
    %v2989 = vadd.f32 %v2988, %v1875
    %v2990 = vadd.f32 %v2989, %v1876
    %v2991 = vadd.f32 %v2990, %v1877
    %v2992 = vadd.f32 %v2991, %v1878
    %v2993 = vadd.f32 %v2992, %v1879
    %v2994 = vadd.f32 %v2993, %v1880
    %v2995 = vadd.f32 %v2994, %v1881
    %v2996 = vadd.f32 %v2995, %v1882
    %v2997 = vadd.f32 %v2996, %v1883
    %v2998 = vadd.f32 %v2997, %v1884
    %v2999 = vadd.f32 %v2998, %v1885
    %v3000 = vsel %vm2303, %v1886, 0.0
    %v3001 = vadd.f32 %v2999, %v3000
    %3002 = vadd.xlane.f32.xlu0 %v3001
    %v3003 = vpop.xlane.xlu0 %3002
    %v3004 = vadd.f32 %v1887, %v1888
    %v3005 = vadd.f32 %v3004, %v1889
    %v3006 = vadd.f32 %v3005, %v1890
    %v3007 = vadd.f32 %v3006, %v1891
    %v3008 = vadd.f32 %v3007, %v1892
    %v3009 = vadd.f32 %v3008, %v1893
    %v3010 = vadd.f32 %v3009, %v1894
    %v3011 = vadd.f32 %v3010, %v1895
    %v3012 = vadd.f32 %v3011, %v1896
    %v3013 = vadd.f32 %v3012, %v1897
    %v3014 = vadd.f32 %v3013, %v1898
    %v3015 = vadd.f32 %v3014, %v1899
    %v3016 = vadd.f32 %v3015, %v1900
    %v3017 = vadd.f32 %v3016, %v1901
    %v3018 = vadd.f32 %v3017, %v1902
    %v3019 = vadd.f32 %v3018, %v1903
    %v3020 = vadd.f32 %v3019, %v1904
    %v3021 = vadd.f32 %v3020, %v1905
    %v3022 = vadd.f32 %v3021, %v1906
    %v3023 = vadd.f32 %v3022, %v1907
    %v3024 = vsel %vm2303, %v1908, 0.0
    %v3025 = vadd.f32 %v3023, %v3024
    %3026 = vadd.xlane.f32.xlu0 %v3025
    %v3027 = vpop.xlane.xlu0 %3026
    %v3028 = vadd.f32 %v1909, %v1910
    %v3029 = vadd.f32 %v3028, %v1911
    %v3030 = vadd.f32 %v3029, %v1912
    %v3031 = vadd.f32 %v3030, %v1913
    %v3032 = vadd.f32 %v3031, %v1914
    %v3033 = vadd.f32 %v3032, %v1915
    %v3034 = vadd.f32 %v3033, %v1916
    %v3035 = vadd.f32 %v3034, %v1917
    %v3036 = vadd.f32 %v3035, %v1918
    %v3037 = vadd.f32 %v3036, %v1919
    %v3038 = vadd.f32 %v3037, %v1920
    %v3039 = vadd.f32 %v3038, %v1921
    %v3040 = vadd.f32 %v3039, %v1922
    %v3041 = vadd.f32 %v3040, %v1923
    %v3042 = vadd.f32 %v3041, %v1924
    %v3043 = vadd.f32 %v3042, %v1925
    %v3044 = vadd.f32 %v3043, %v1926
    %v3045 = vadd.f32 %v3044, %v1927
    %v3046 = vadd.f32 %v3045, %v1928
    %v3047 = vadd.f32 %v3046, %v1929
    %v3048 = vsel %vm2303, %v1930, 0.0
    %v3049 = vadd.f32 %v3047, %v3048
    %3050 = vadd.xlane.f32.xlu0 %v3049
    %v3051 = vpop.xlane.xlu0 %3050
    %v3052 = vadd.f32 %v1931, %v1932
    %v3053 = vadd.f32 %v3052, %v1933
    %v3054 = vadd.f32 %v3053, %v1934
    %v3055 = vadd.f32 %v3054, %v1935
    %v3056 = vadd.f32 %v3055, %v1936
    %v3057 = vadd.f32 %v3056, %v1937
    %v3058 = vadd.f32 %v3057, %v1938
    %v3059 = vadd.f32 %v3058, %v1939
    %v3060 = vadd.f32 %v3059, %v1940
    %v3061 = vadd.f32 %v3060, %v1941
    %v3062 = vadd.f32 %v3061, %v1942
    %v3063 = vadd.f32 %v3062, %v1943
    %v3064 = vadd.f32 %v3063, %v1944
    %v3065 = vadd.f32 %v3064, %v1945
    %v3066 = vadd.f32 %v3065, %v1946
    %v3067 = vadd.f32 %v3066, %v1947
    %v3068 = vadd.f32 %v3067, %v1948
    %v3069 = vadd.f32 %v3068, %v1949
    %v3070 = vadd.f32 %v3069, %v1950
    %v3071 = vadd.f32 %v3070, %v1951
    %v3072 = vsel %vm2303, %v1952, 0.0
    %v3073 = vadd.f32 %v3071, %v3072
    %3074 = vadd.xlane.f32.xlu0 %v3073
    %v3075 = vpop.xlane.xlu0 %3074
    %v3076 = vadd.f32 %v1953, %v1954
    %v3077 = vadd.f32 %v3076, %v1955
    %v3078 = vadd.f32 %v3077, %v1956
    %v3079 = vadd.f32 %v3078, %v1957
    %v3080 = vadd.f32 %v3079, %v1958
    %v3081 = vadd.f32 %v3080, %v1959
    %v3082 = vadd.f32 %v3081, %v1960
    %v3083 = vadd.f32 %v3082, %v1961
    %v3084 = vadd.f32 %v3083, %v1962
    %v3085 = vadd.f32 %v3084, %v1963
    %v3086 = vadd.f32 %v3085, %v1964
    %v3087 = vadd.f32 %v3086, %v1965
    %v3088 = vadd.f32 %v3087, %v1966
    %v3089 = vadd.f32 %v3088, %v1967
    %v3090 = vadd.f32 %v3089, %v1968
    %v3091 = vadd.f32 %v3090, %v1969
    %v3092 = vadd.f32 %v3091, %v1970
    %v3093 = vadd.f32 %v3092, %v1971
    %v3094 = vadd.f32 %v3093, %v1972
    %v3095 = vadd.f32 %v3094, %v1973
    %v3096 = vsel %vm2303, %v1974, 0.0
    %v3097 = vadd.f32 %v3095, %v3096
    %3098 = vadd.xlane.f32.xlu0 %v3097
    %v3099 = vpop.xlane.xlu0 %3098
    %v3100 = vadd.f32 %v1975, %v1976
    %v3101 = vadd.f32 %v3100, %v1977
    %v3102 = vadd.f32 %v3101, %v1978
    %v3103 = vadd.f32 %v3102, %v1979
    %v3104 = vadd.f32 %v3103, %v1980
    %v3105 = vadd.f32 %v3104, %v1981
    %v3106 = vadd.f32 %v3105, %v1982
    %v3107 = vadd.f32 %v3106, %v1983
    %v3108 = vadd.f32 %v3107, %v1984
    %v3109 = vadd.f32 %v3108, %v1985
    %v3110 = vadd.f32 %v3109, %v1986
    %v3111 = vadd.f32 %v3110, %v1987
    %v3112 = vadd.f32 %v3111, %v1988
    %v3113 = vadd.f32 %v3112, %v1989
    %v3114 = vadd.f32 %v3113, %v1990
    %v3115 = vadd.f32 %v3114, %v1991
    %v3116 = vadd.f32 %v3115, %v1992
    %v3117 = vadd.f32 %v3116, %v1993
    %v3118 = vadd.f32 %v3117, %v1994
    %v3119 = vadd.f32 %v3118, %v1995
    %v3120 = vsel %vm2303, %v1996, 0.0
    %v3121 = vadd.f32 %v3119, %v3120
    %3122 = vadd.xlane.f32.xlu0 %v3121
    %v3123 = vpop.xlane.xlu0 %3122
    %v3124 = vadd.f32 %v1997, %v1998
    %v3125 = vadd.f32 %v3124, %v1999
    %v3126 = vadd.f32 %v3125, %v2000
    %v3127 = vadd.f32 %v3126, %v2001
    %v3128 = vadd.f32 %v3127, %v2002
    %v3129 = vadd.f32 %v3128, %v2003
    %v3130 = vadd.f32 %v3129, %v2004
    %v3131 = vadd.f32 %v3130, %v2005
    %v3132 = vadd.f32 %v3131, %v2006
    %v3133 = vadd.f32 %v3132, %v2007
    %v3134 = vadd.f32 %v3133, %v2008
    %v3135 = vadd.f32 %v3134, %v2009
    %v3136 = vadd.f32 %v3135, %v2010
    %v3137 = vadd.f32 %v3136, %v2011
    %v3138 = vadd.f32 %v3137, %v2012
    %v3139 = vadd.f32 %v3138, %v2013
    %v3140 = vadd.f32 %v3139, %v2014
    %v3141 = vadd.f32 %v3140, %v2015
    %v3142 = vadd.f32 %v3141, %v2016
    %v3143 = vadd.f32 %v3142, %v2017
    %v3144 = vsel %vm2303, %v2018, 0.0
    %v3145 = vadd.f32 %v3143, %v3144
    %3146 = vadd.xlane.f32.xlu0 %v3145
    %v3147 = vpop.xlane.xlu0 %3146
    %v3148 = vadd.f32 %v2019, %v2020
    %v3149 = vadd.f32 %v3148, %v2021
    %v3150 = vadd.f32 %v3149, %v2022
    %v3151 = vadd.f32 %v3150, %v2023
    %v3152 = vadd.f32 %v3151, %v2024
    %v3153 = vadd.f32 %v3152, %v2025
    %v3154 = vadd.f32 %v3153, %v2026
    %v3155 = vadd.f32 %v3154, %v2027
    %v3156 = vadd.f32 %v3155, %v2028
    %v3157 = vadd.f32 %v3156, %v2029
    %v3158 = vadd.f32 %v3157, %v2030
    %v3159 = vadd.f32 %v3158, %v2031
    %v3160 = vadd.f32 %v3159, %v2032
    %v3161 = vadd.f32 %v3160, %v2033
    %v3162 = vadd.f32 %v3161, %v2034
    %v3163 = vadd.f32 %v3162, %v2035
    %v3164 = vadd.f32 %v3163, %v2036
    %v3165 = vadd.f32 %v3164, %v2037
    %v3166 = vadd.f32 %v3165, %v2038
    %v3167 = vadd.f32 %v3166, %v2039
    %v3168 = vsel %vm2303, %v2040, 0.0
    %v3169 = vadd.f32 %v3167, %v3168
    %3170 = vadd.xlane.f32.xlu0 %v3169
    %v3171 = vpop.xlane.xlu0 %3170
    %v3172 = vadd.f32 %v2041, %v2042
    %v3173 = vadd.f32 %v3172, %v2043
    %v3174 = vadd.f32 %v3173, %v2044
    %v3175 = vadd.f32 %v3174, %v2045
    %v3176 = vadd.f32 %v3175, %v2046
    %v3177 = vadd.f32 %v3176, %v2047
    %v3178 = vadd.f32 %v3177, %v2048
    %v3179 = vadd.f32 %v3178, %v2049
    %v3180 = vadd.f32 %v3179, %v2050
    %v3181 = vadd.f32 %v3180, %v2051
    %v3182 = vadd.f32 %v3181, %v2052
    %v3183 = vadd.f32 %v3182, %v2053
    %v3184 = vadd.f32 %v3183, %v2054
    %v3185 = vadd.f32 %v3184, %v2055
    %v3186 = vadd.f32 %v3185, %v2056
    %v3187 = vadd.f32 %v3186, %v2057
    %v3188 = vadd.f32 %v3187, %v2058
    %v3189 = vadd.f32 %v3188, %v2059
    %v3190 = vadd.f32 %v3189, %v2060
    %v3191 = vadd.f32 %v3190, %v2061
    %v3192 = vsel %vm2303, %v2062, 0.0
    %v3193 = vadd.f32 %v3191, %v3192
    %3194 = vadd.xlane.f32.xlu0 %v3193
    %v3195 = vpop.xlane.xlu0 %3194
    %v3196 = vadd.f32 %v2063, %v2064
    %v3197 = vadd.f32 %v3196, %v2065
    %v3198 = vadd.f32 %v3197, %v2066
    %v3199 = vadd.f32 %v3198, %v2067
    %v3200 = vadd.f32 %v3199, %v2068
    %v3201 = vadd.f32 %v3200, %v2069
    %v3202 = vadd.f32 %v3201, %v2070
    %v3203 = vadd.f32 %v3202, %v2071
    %v3204 = vadd.f32 %v3203, %v2072
    %v3205 = vadd.f32 %v3204, %v2073
    %v3206 = vadd.f32 %v3205, %v2074
    %v3207 = vadd.f32 %v3206, %v2075
    %v3208 = vadd.f32 %v3207, %v2076
    %v3209 = vadd.f32 %v3208, %v2077
    %v3210 = vadd.f32 %v3209, %v2078
    %v3211 = vadd.f32 %v3210, %v2079
    %v3212 = vadd.f32 %v3211, %v2080
    %v3213 = vadd.f32 %v3212, %v2081
    %v3214 = vadd.f32 %v3213, %v2082
    %v3215 = vadd.f32 %v3214, %v2083
    %v3216 = vsel %vm2303, %v2084, 0.0
    %v3217 = vadd.f32 %v3215, %v3216
    %3218 = vadd.xlane.f32.xlu0 %v3217
    %v3219 = vpop.xlane.xlu0 %3218
    %v3220 = vadd.f32 %v2085, %v2086
    %v3221 = vadd.f32 %v3220, %v2087
    %v3222 = vadd.f32 %v3221, %v2088
    %v3223 = vadd.f32 %v3222, %v2089
    %v3224 = vadd.f32 %v3223, %v2090
    %v3225 = vadd.f32 %v3224, %v2091
    %v3226 = vadd.f32 %v3225, %v2092
    %v3227 = vadd.f32 %v3226, %v2093
    %v3228 = vadd.f32 %v3227, %v2094
    %v3229 = vadd.f32 %v3228, %v2095
    %v3230 = vadd.f32 %v3229, %v2096
    %v3231 = vadd.f32 %v3230, %v2097
    %v3232 = vadd.f32 %v3231, %v2098
    %v3233 = vadd.f32 %v3232, %v2099
    %v3234 = vadd.f32 %v3233, %v2100
    %v3235 = vadd.f32 %v3234, %v2101
    %v3236 = vadd.f32 %v3235, %v2102
    %v3237 = vadd.f32 %v3236, %v2103
    %v3238 = vadd.f32 %v3237, %v2104
    %v3239 = vadd.f32 %v3238, %v2105
    %v3240 = vsel %vm2303, %v2106, 0.0
    %v3241 = vadd.f32 %v3239, %v3240
    %3242 = vadd.xlane.f32.xlu0 %v3241
    %v3243 = vpop.xlane.xlu0 %3242
    %v3244 = vadd.f32 %v2107, %v2108
    %v3245 = vadd.f32 %v3244, %v2109
    %v3246 = vadd.f32 %v3245, %v2110
    %v3247 = vadd.f32 %v3246, %v2111
    %v3248 = vadd.f32 %v3247, %v2112
    %v3249 = vadd.f32 %v3248, %v2113
    %v3250 = vadd.f32 %v3249, %v2114
    %v3251 = vadd.f32 %v3250, %v2115
    %v3252 = vadd.f32 %v3251, %v2116
    %v3253 = vadd.f32 %v3252, %v2117
    %v3254 = vadd.f32 %v3253, %v2118
    %v3255 = vadd.f32 %v3254, %v2119
    %v3256 = vadd.f32 %v3255, %v2120
    %v3257 = vadd.f32 %v3256, %v2121
    %v3258 = vadd.f32 %v3257, %v2122
    %v3259 = vadd.f32 %v3258, %v2123
    %v3260 = vadd.f32 %v3259, %v2124
    %v3261 = vadd.f32 %v3260, %v2125
    %v3262 = vadd.f32 %v3261, %v2126
    %v3263 = vadd.f32 %v3262, %v2127
    %v3264 = vsel %vm2303, %v2128, 0.0
    %v3265 = vadd.f32 %v3263, %v3264
    %3266 = vadd.xlane.f32.xlu0 %v3265
    %v3267 = vpop.xlane.xlu0 %3266
    %v3268 = vadd.f32 %v2129, %v2130
    %v3269 = vadd.f32 %v3268, %v2131
    %v3270 = vadd.f32 %v3269, %v2132
    %v3271 = vadd.f32 %v3270, %v2133
    %v3272 = vadd.f32 %v3271, %v2134
    %v3273 = vadd.f32 %v3272, %v2135
    %v3274 = vadd.f32 %v3273, %v2136
    %v3275 = vadd.f32 %v3274, %v2137
    %v3276 = vadd.f32 %v3275, %v2138
    %v3277 = vadd.f32 %v3276, %v2139
    %v3278 = vadd.f32 %v3277, %v2140
    %v3279 = vadd.f32 %v3278, %v2141
    %v3280 = vadd.f32 %v3279, %v2142
    %v3281 = vadd.f32 %v3280, %v2143
    %v3282 = vadd.f32 %v3281, %v2144
    %v3283 = vadd.f32 %v3282, %v2145
    %v3284 = vadd.f32 %v3283, %v2146
    %v3285 = vadd.f32 %v3284, %v2147
    %v3286 = vadd.f32 %v3285, %v2148
    %v3287 = vadd.f32 %v3286, %v2149
    %v3288 = vsel %vm2303, %v2150, 0.0
    %v3289 = vadd.f32 %v3287, %v3288
    %3290 = vadd.xlane.f32.xlu0 %v3289
    %v3291 = vpop.xlane.xlu0 %3290
    %v3292 = vadd.f32 %v2151, %v2152
    %v3293 = vadd.f32 %v3292, %v2153
    %v3294 = vadd.f32 %v3293, %v2154
    %v3295 = vadd.f32 %v3294, %v2155
    %v3296 = vadd.f32 %v3295, %v2156
    %v3297 = vadd.f32 %v3296, %v2157
    %v3298 = vadd.f32 %v3297, %v2158
    %v3299 = vadd.f32 %v3298, %v2159
    %v3300 = vadd.f32 %v3299, %v2160
    %v3301 = vadd.f32 %v3300, %v2161
    %v3302 = vadd.f32 %v3301, %v2162
    %v3303 = vadd.f32 %v3302, %v2163
    %v3304 = vadd.f32 %v3303, %v2164
    %v3305 = vadd.f32 %v3304, %v2165
    %v3306 = vadd.f32 %v3305, %v2166
    %v3307 = vadd.f32 %v3306, %v2167
    %v3308 = vadd.f32 %v3307, %v2168
    %v3309 = vadd.f32 %v3308, %v2169
    %v3310 = vadd.f32 %v3309, %v2170
    %v3311 = vadd.f32 %v3310, %v2171
    %v3312 = vsel %vm2303, %v2172, 0.0
    %v3313 = vadd.f32 %v3311, %v3312
    %3314 = vadd.xlane.f32.xlu0 %v3313
    %v3315 = vpop.xlane.xlu0 %3314
    %v3316 = vadd.f32 %v2173, %v2174
    %v3317 = vadd.f32 %v3316, %v2175
    %v3318 = vadd.f32 %v3317, %v2176
    %v3319 = vadd.f32 %v3318, %v2177
    %v3320 = vadd.f32 %v3319, %v2178
    %v3321 = vadd.f32 %v3320, %v2179
    %v3322 = vadd.f32 %v3321, %v2180
    %v3323 = vadd.f32 %v3322, %v2181
    %v3324 = vadd.f32 %v3323, %v2182
    %v3325 = vadd.f32 %v3324, %v2183
    %v3326 = vadd.f32 %v3325, %v2184
    %v3327 = vadd.f32 %v3326, %v2185
    %v3328 = vadd.f32 %v3327, %v2186
    %v3329 = vadd.f32 %v3328, %v2187
    %v3330 = vadd.f32 %v3329, %v2188
    %v3331 = vadd.f32 %v3330, %v2189
    %v3332 = vadd.f32 %v3331, %v2190
    %v3333 = vadd.f32 %v3332, %v2191
    %v3334 = vadd.f32 %v3333, %v2192
    %v3335 = vadd.f32 %v3334, %v2193
    %v3336 = vsel %vm2303, %v2194, 0.0
    %v3337 = vadd.f32 %v3335, %v3336
    %3338 = vadd.xlane.f32.xlu0 %v3337
    %v3339 = vpop.xlane.xlu0 %3338
    %v3340 = vadd.f32 %v2195, %v2196
    %v3341 = vadd.f32 %v3340, %v2197
    %v3342 = vadd.f32 %v3341, %v2198
    %v3343 = vadd.f32 %v3342, %v2199
    %v3344 = vadd.f32 %v3343, %v2200
    %v3345 = vadd.f32 %v3344, %v2201
    %v3346 = vadd.f32 %v3345, %v2202
    %v3347 = vadd.f32 %v3346, %v2203
    %v3348 = vadd.f32 %v3347, %v2204
    %v3349 = vadd.f32 %v3348, %v2205
    %v3350 = vadd.f32 %v3349, %v2206
    %v3351 = vadd.f32 %v3350, %v2207
    %v3352 = vadd.f32 %v3351, %v2208
    %v3353 = vadd.f32 %v3352, %v2209
    %v3354 = vadd.f32 %v3353, %v2210
    %v3355 = vadd.f32 %v3354, %v2211
    %v3356 = vadd.f32 %v3355, %v2212
    %v3357 = vadd.f32 %v3356, %v2213
    %v3358 = vadd.f32 %v3357, %v2214
    %v3359 = vadd.f32 %v3358, %v2215
    %v3360 = vsel %vm2303, %v2216, 0.0
    %v3361 = vadd.f32 %v3359, %v3360
    %3362 = vadd.xlane.f32.xlu0 %v3361
    %v3363 = vpop.xlane.xlu0 %3362
    %v3364 = vadd.f32 %v2217, %v2218
    %v3365 = vadd.f32 %v3364, %v2219
    %v3366 = vadd.f32 %v3365, %v2220
    %v3367 = vadd.f32 %v3366, %v2221
    %v3368 = vadd.f32 %v3367, %v2222
    %v3369 = vadd.f32 %v3368, %v2223
    %v3370 = vadd.f32 %v3369, %v2224
    %v3371 = vadd.f32 %v3370, %v2225
    %v3372 = vadd.f32 %v3371, %v2226
    %v3373 = vadd.f32 %v3372, %v2227
    %v3374 = vadd.f32 %v3373, %v2228
    %v3375 = vadd.f32 %v3374, %v2229
    %v3376 = vadd.f32 %v3375, %v2230
    %v3377 = vadd.f32 %v3376, %v2231
    %v3378 = vadd.f32 %v3377, %v2232
    %v3379 = vadd.f32 %v3378, %v2233
    %v3380 = vadd.f32 %v3379, %v2234
    %v3381 = vadd.f32 %v3380, %v2235
    %v3382 = vadd.f32 %v3381, %v2236
    %v3383 = vadd.f32 %v3382, %v2237
    %v3384 = vsel %vm2303, %v2238, 0.0
    %v3385 = vadd.f32 %v3383, %v3384
    %3386 = vadd.xlane.f32.xlu0 %v3385
    %v3387 = vpop.xlane.xlu0 %3386
    %v3388 = vadd.f32 %v2239, %v2240
    %v3389 = vadd.f32 %v3388, %v2241
    %v3390 = vadd.f32 %v3389, %v2242
    %v3391 = vadd.f32 %v3390, %v2243
    %v3392 = vadd.f32 %v3391, %v2244
    %v3393 = vadd.f32 %v3392, %v2245
    %v3394 = vadd.f32 %v3393, %v2246
    %v3395 = vadd.f32 %v3394, %v2247
    %v3396 = vadd.f32 %v3395, %v2248
    %v3397 = vadd.f32 %v3396, %v2249
    %v3398 = vadd.f32 %v3397, %v2250
    %v3399 = vadd.f32 %v3398, %v2251
    %v3400 = vadd.f32 %v3399, %v2252
    %v3401 = vadd.f32 %v3400, %v2253
    %v3402 = vadd.f32 %v3401, %v2254
    %v3403 = vadd.f32 %v3402, %v2255
    %v3404 = vadd.f32 %v3403, %v2256
    %v3405 = vadd.f32 %v3404, %v2257
    %v3406 = vadd.f32 %v3405, %v2258
    %v3407 = vadd.f32 %v3406, %v2259
    %v3408 = vsel %vm2303, %v2260, 0.0
    %v3409 = vadd.f32 %v3407, %v3408
    %3410 = vadd.xlane.f32.xlu0 %v3409
    %v3411 = vpop.xlane.xlu0 %3410
    %v3412 = vadd.f32 %v2261, %v2262
    %v3413 = vadd.f32 %v3412, %v2263
    %v3414 = vadd.f32 %v3413, %v2264
    %v3415 = vadd.f32 %v3414, %v2265
    %v3416 = vadd.f32 %v3415, %v2266
    %v3417 = vadd.f32 %v3416, %v2267
    %v3418 = vadd.f32 %v3417, %v2268
    %v3419 = vadd.f32 %v3418, %v2269
    %v3420 = vadd.f32 %v3419, %v2270
    %v3421 = vadd.f32 %v3420, %v2271
    %v3422 = vadd.f32 %v3421, %v2272
    %v3423 = vadd.f32 %v3422, %v2273
    %v3424 = vadd.f32 %v3423, %v2274
    %v3425 = vadd.f32 %v3424, %v2275
    %v3426 = vadd.f32 %v3425, %v2276
    %v3427 = vadd.f32 %v3426, %v2277
    %v3428 = vadd.f32 %v3427, %v2278
    %v3429 = vadd.f32 %v3428, %v2279
    %v3430 = vadd.f32 %v3429, %v2280
    %v3431 = vadd.f32 %v3430, %v2281
    %v3432 = vsel %vm2303, %v2282, 0.0
    %v3433 = vadd.f32 %v3431, %v3432
    %3434 = vadd.xlane.f32.xlu0 %v3433
    %v3435 = vpop.xlane.xlu0 %3434
    %v3436 = vld [vmem:[#allocation5] sm:$0x3]
    %v3438 = vlaneseq
    %v3439 = vshrl.u32 %v3438, 7
    %v3440 = vsub.s32 0, %v3439
    %v3441 = vrot.slane %v3436, %v3440
    %v3442 = vlaneseq
    %v3443 = vshrl.u32 %v3442, 7
    %v3444 = vsub.s32 1, %v3443
    %v3445 = vrot.slane %v3436, %v3444
    %3447 = vbcast.lane.b32.xlu0 %v3441, 256
    %v3448 = vpop.permute.xlu0 %3447
    %s3450 = sor.u32 256, 8
    %3451 = vbcast.lane.b32.xlu0 %v3441, %s3450
    %v3452 = vpop.permute.xlu0 %3451
    %s3454 = sor.u32 256, 16
    %3455 = vbcast.lane.b32.xlu0 %v3441, %s3454
    %v3456 = vpop.permute.xlu0 %3455
    %s3458 = sor.u32 256, 24
    %3459 = vbcast.lane.b32.xlu0 %v3441, %s3458
    %v3460 = vpop.permute.xlu0 %3459
    %s3462 = sor.u32 256, 32
    %3463 = vbcast.lane.b32.xlu0 %v3441, %s3462
    %v3464 = vpop.permute.xlu0 %3463
    %s3466 = sor.u32 256, 40
    %3467 = vbcast.lane.b32.xlu0 %v3441, %s3466
    %v3468 = vpop.permute.xlu0 %3467
    %s3470 = sor.u32 256, 48
    %3471 = vbcast.lane.b32.xlu0 %v3441, %s3470
    %v3472 = vpop.permute.xlu0 %3471
    %s3474 = sor.u32 256, 56
    %3475 = vbcast.lane.b32.xlu0 %v3441, %s3474
    %v3476 = vpop.permute.xlu0 %3475
    %s3478 = sor.u32 256, 64
    %3479 = vbcast.lane.b32.xlu0 %v3441, %s3478
    %v3480 = vpop.permute.xlu0 %3479
    %s3482 = sor.u32 256, 72
    %3483 = vbcast.lane.b32.xlu0 %v3441, %s3482
    %v3484 = vpop.permute.xlu0 %3483
    %s3486 = sor.u32 256, 80
    %3487 = vbcast.lane.b32.xlu0 %v3441, %s3486
    %v3488 = vpop.permute.xlu0 %3487
    %s3490 = sor.u32 256, 88
    %3491 = vbcast.lane.b32.xlu0 %v3441, %s3490
    %v3492 = vpop.permute.xlu0 %3491
    %s3494 = sor.u32 256, 96
    %3495 = vbcast.lane.b32.xlu0 %v3441, %s3494
    %v3496 = vpop.permute.xlu0 %3495
    %s3498 = sor.u32 256, 104
    %3499 = vbcast.lane.b32.xlu0 %v3441, %s3498
    %v3500 = vpop.permute.xlu0 %3499
    %s3502 = sor.u32 256, 112
    %3503 = vbcast.lane.b32.xlu0 %v3441, %s3502
    %v3504 = vpop.permute.xlu0 %3503
    %s3506 = sor.u32 256, 120
    %3507 = vbcast.lane.b32.xlu0 %v3441, %s3506
    %v3508 = vpop.permute.xlu0 %3507
    %3510 = vbcast.lane.b32.xlu0 %v3445, 256
    %v3511 = vpop.permute.xlu0 %3510
    %s3513 = sor.u32 256, 8
    %3514 = vbcast.lane.b32.xlu0 %v3445, %s3513
    %v3515 = vpop.permute.xlu0 %3514
    %s3517 = sor.u32 256, 16
    %3518 = vbcast.lane.b32.xlu0 %v3445, %s3517
    %v3519 = vpop.permute.xlu0 %3518
    %s3521 = sor.u32 256, 24
    %3522 = vbcast.lane.b32.xlu0 %v3445, %s3521
    %v3523 = vpop.permute.xlu0 %3522
    %s3525 = sor.u32 256, 32
    %3526 = vbcast.lane.b32.xlu0 %v3445, %s3525
    %v3527 = vpop.permute.xlu0 %3526
    %s3529 = sor.u32 256, 40
    %3530 = vbcast.lane.b32.xlu0 %v3445, %s3529
    %v3531 = vpop.permute.xlu0 %3530
    %s3533 = sor.u32 256, 48
    %3534 = vbcast.lane.b32.xlu0 %v3445, %s3533
    %v3535 = vpop.permute.xlu0 %3534
    %s3537 = sor.u32 256, 56
    %3538 = vbcast.lane.b32.xlu0 %v3445, %s3537
    %v3539 = vpop.permute.xlu0 %3538
    %v3564 = vmul.f32 %v2307, %v3448
    %v3565 = vmul.f32 %v2331, %v3452
    %v3566 = vmul.f32 %v2355, %v3456
    %v3567 = vmul.f32 %v2379, %v3460
    %v3568 = vmul.f32 %v2403, %v3464
    %v3569 = vmul.f32 %v2427, %v3468
    %v3570 = vmul.f32 %v2451, %v3472
    %v3571 = vmul.f32 %v2475, %v3476
    %v3572 = vmul.f32 %v2499, %v3480
    %v3573 = vmul.f32 %v2523, %v3484
    %v3574 = vmul.f32 %v2547, %v3488
    %v3575 = vmul.f32 %v2571, %v3492
    %v3576 = vmul.f32 %v2595, %v3496
    %v3577 = vmul.f32 %v2619, %v3500
    %v3578 = vmul.f32 %v2643, %v3504
    %v3579 = vmul.f32 %v2667, %v3508
    %v3580 = vmul.f32 %v2691, %v3511
    %v3581 = vmul.f32 %v2715, %v3515
    %v3582 = vmul.f32 %v2739, %v3519
    %v3583 = vmul.f32 %v2763, %v3523
    %v3584 = vmul.f32 %v2787, %v3527
    %v3585 = vmul.f32 %v2811, %v3531
    %v3586 = vmul.f32 %v2835, %v3535
    %v3587 = vmul.f32 %v2859, %v3539
    %v3588 = vmul.f32 %v2883, %v3448
    %v3589 = vmul.f32 %v2907, %v3452
    %v3590 = vmul.f32 %v2931, %v3456
    %v3591 = vmul.f32 %v2955, %v3460
    %v3592 = vmul.f32 %v2979, %v3464
    %v3593 = vmul.f32 %v3003, %v3468
    %v3594 = vmul.f32 %v3027, %v3472
    %v3595 = vmul.f32 %v3051, %v3476
    %v3596 = vmul.f32 %v3075, %v3480
    %v3597 = vmul.f32 %v3099, %v3484
    %v3598 = vmul.f32 %v3123, %v3488
    %v3599 = vmul.f32 %v3147, %v3492
    %v3600 = vmul.f32 %v3171, %v3496
    %v3601 = vmul.f32 %v3195, %v3500
    %v3602 = vmul.f32 %v3219, %v3504
    %v3603 = vmul.f32 %v3243, %v3508
    %v3604 = vmul.f32 %v3267, %v3511
    %v3605 = vmul.f32 %v3291, %v3515
    %v3606 = vmul.f32 %v3315, %v3519
    %v3607 = vmul.f32 %v3339, %v3523
    %v3608 = vmul.f32 %v3363, %v3527
    %v3609 = vmul.f32 %v3387, %v3531
    %v3610 = vmul.f32 %v3411, %v3535
    %v3611 = vmul.f32 %v3435, %v3539
    %3660 = vset.pattern.permute.xlu0 0
    %3661 = vperm.xlu0 %3660, %v3564
    %v3662 = vpop.permute.xlu0 %3661
    %3663 = vset.pattern.permute.xlu0 0
    %3664 = vperm.xlu0 %3663, %v3565
    %v3665 = vpop.permute.xlu0 %3664
    %3666 = vset.pattern.permute.xlu0 0
    %3667 = vperm.xlu0 %3666, %v3566
    %v3668 = vpop.permute.xlu0 %3667
    %3669 = vset.pattern.permute.xlu0 0
    %3670 = vperm.xlu0 %3669, %v3567
    %v3671 = vpop.permute.xlu0 %3670
    %3672 = vset.pattern.permute.xlu0 0
    %3673 = vperm.xlu0 %3672, %v3568
    %v3674 = vpop.permute.xlu0 %3673
    %3675 = vset.pattern.permute.xlu0 0
    %3676 = vperm.xlu0 %3675, %v3569
    %v3677 = vpop.permute.xlu0 %3676
    %3678 = vset.pattern.permute.xlu0 0
    %3679 = vperm.xlu0 %3678, %v3570
    %v3680 = vpop.permute.xlu0 %3679
    %3681 = vset.pattern.permute.xlu0 0
    %3682 = vperm.xlu0 %3681, %v3571
    %v3683 = vpop.permute.xlu0 %3682
    %3684 = vset.pattern.permute.xlu0 0
    %3685 = vperm.xlu0 %3684, %v3572
    %v3686 = vpop.permute.xlu0 %3685
    %3687 = vset.pattern.permute.xlu0 0
    %3688 = vperm.xlu0 %3687, %v3573
    %v3689 = vpop.permute.xlu0 %3688
    %3690 = vset.pattern.permute.xlu0 0
    %3691 = vperm.xlu0 %3690, %v3574
    %v3692 = vpop.permute.xlu0 %3691
    %3693 = vset.pattern.permute.xlu0 0
    %3694 = vperm.xlu0 %3693, %v3575
    %v3695 = vpop.permute.xlu0 %3694
    %3696 = vset.pattern.permute.xlu0 0
    %3697 = vperm.xlu0 %3696, %v3576
    %v3698 = vpop.permute.xlu0 %3697
    %3699 = vset.pattern.permute.xlu0 0
    %3700 = vperm.xlu0 %3699, %v3577
    %v3701 = vpop.permute.xlu0 %3700
    %3702 = vset.pattern.permute.xlu0 0
    %3703 = vperm.xlu0 %3702, %v3578
    %v3704 = vpop.permute.xlu0 %3703
    %3705 = vset.pattern.permute.xlu0 0
    %3706 = vperm.xlu0 %3705, %v3579
    %v3707 = vpop.permute.xlu0 %3706
    %3708 = vset.pattern.permute.xlu0 0
    %3709 = vperm.xlu0 %3708, %v3580
    %v3710 = vpop.permute.xlu0 %3709
    %3711 = vset.pattern.permute.xlu0 0
    %3712 = vperm.xlu0 %3711, %v3581
    %v3713 = vpop.permute.xlu0 %3712
    %3714 = vset.pattern.permute.xlu0 0
    %3715 = vperm.xlu0 %3714, %v3582
    %v3716 = vpop.permute.xlu0 %3715
    %3717 = vset.pattern.permute.xlu0 0
    %3718 = vperm.xlu0 %3717, %v3583
    %v3719 = vpop.permute.xlu0 %3718
    %3720 = vset.pattern.permute.xlu0 0
    %3721 = vperm.xlu0 %3720, %v3584
    %v3722 = vpop.permute.xlu0 %3721
    %3723 = vset.pattern.permute.xlu0 0
    %3724 = vperm.xlu0 %3723, %v3585
    %v3725 = vpop.permute.xlu0 %3724
    %3726 = vset.pattern.permute.xlu0 0
    %3727 = vperm.xlu0 %3726, %v3586
    %v3728 = vpop.permute.xlu0 %3727
    %3729 = vset.pattern.permute.xlu0 0
    %3730 = vperm.xlu0 %3729, %v3587
    %v3731 = vpop.permute.xlu0 %3730
    %3732 = vset.pattern.permute.xlu0 0
    %3733 = vperm.xlu0 %3732, %v3588
    %v3734 = vpop.permute.xlu0 %3733
    %3735 = vset.pattern.permute.xlu0 0
    %3736 = vperm.xlu0 %3735, %v3589
    %v3737 = vpop.permute.xlu0 %3736
    %3738 = vset.pattern.permute.xlu0 0
    %3739 = vperm.xlu0 %3738, %v3590
    %v3740 = vpop.permute.xlu0 %3739
    %3741 = vset.pattern.permute.xlu0 0
    %3742 = vperm.xlu0 %3741, %v3591
    %v3743 = vpop.permute.xlu0 %3742
    %3744 = vset.pattern.permute.xlu0 0
    %3745 = vperm.xlu0 %3744, %v3592
    %v3746 = vpop.permute.xlu0 %3745
    %3747 = vset.pattern.permute.xlu0 0
    %3748 = vperm.xlu0 %3747, %v3593
    %v3749 = vpop.permute.xlu0 %3748
    %3750 = vset.pattern.permute.xlu0 0
    %3751 = vperm.xlu0 %3750, %v3594
    %v3752 = vpop.permute.xlu0 %3751
    %3753 = vset.pattern.permute.xlu0 0
    %3754 = vperm.xlu0 %3753, %v3595
    %v3755 = vpop.permute.xlu0 %3754
    %3756 = vset.pattern.permute.xlu0 0
    %3757 = vperm.xlu0 %3756, %v3596
    %v3758 = vpop.permute.xlu0 %3757
    %3759 = vset.pattern.permute.xlu0 0
    %3760 = vperm.xlu0 %3759, %v3597
    %v3761 = vpop.permute.xlu0 %3760
    %3762 = vset.pattern.permute.xlu0 0
    %3763 = vperm.xlu0 %3762, %v3598
    %v3764 = vpop.permute.xlu0 %3763
    %3765 = vset.pattern.permute.xlu0 0
    %3766 = vperm.xlu0 %3765, %v3599
    %v3767 = vpop.permute.xlu0 %3766
    %3768 = vset.pattern.permute.xlu0 0
    %3769 = vperm.xlu0 %3768, %v3600
    %v3770 = vpop.permute.xlu0 %3769
    %3771 = vset.pattern.permute.xlu0 0
    %3772 = vperm.xlu0 %3771, %v3601
    %v3773 = vpop.permute.xlu0 %3772
    %3774 = vset.pattern.permute.xlu0 0
    %3775 = vperm.xlu0 %3774, %v3602
    %v3776 = vpop.permute.xlu0 %3775
    %3777 = vset.pattern.permute.xlu0 0
    %3778 = vperm.xlu0 %3777, %v3603
    %v3779 = vpop.permute.xlu0 %3778
    %3780 = vset.pattern.permute.xlu0 0
    %3781 = vperm.xlu0 %3780, %v3604
    %v3782 = vpop.permute.xlu0 %3781
    %3783 = vset.pattern.permute.xlu0 0
    %3784 = vperm.xlu0 %3783, %v3605
    %v3785 = vpop.permute.xlu0 %3784
    %3786 = vset.pattern.permute.xlu0 0
    %3787 = vperm.xlu0 %3786, %v3606
    %v3788 = vpop.permute.xlu0 %3787
    %3789 = vset.pattern.permute.xlu0 0
    %3790 = vperm.xlu0 %3789, %v3607
    %v3791 = vpop.permute.xlu0 %3790
    %3792 = vset.pattern.permute.xlu0 0
    %3793 = vperm.xlu0 %3792, %v3608
    %v3794 = vpop.permute.xlu0 %3793
    %3795 = vset.pattern.permute.xlu0 0
    %3796 = vperm.xlu0 %3795, %v3609
    %v3797 = vpop.permute.xlu0 %3796
    %3798 = vset.pattern.permute.xlu0 0
    %3799 = vperm.xlu0 %3798, %v3610
    %v3800 = vpop.permute.xlu0 %3799
    %3801 = vset.pattern.permute.xlu0 0
    %3802 = vperm.xlu0 %3801, %v3611
    %v3803 = vpop.permute.xlu0 %3802
    %v3804 = vlaneseq
    %v3805 = vand.u32 %v3804, 127
    %v3806 = vlaneseq
    %v3807 = vshrl.u32 %v3806, 7
    %v3808 = vsub.s32 %v3805, %v3807
    %v3809 = vrot.slane %v3662, %v3808
    %v3810 = vadd.s32 %v3805, 4294967288
    %v3811 = vlaneseq
    %v3812 = vshrl.u32 %v3811, 7
    %v3813 = vsub.s32 %v3810, %v3812
    %v3814 = vrot.slane %v3665, %v3813
    %vm3815 = vcmask 130112
    %v3816 = vsel %vm3815, %v3814, %v3809
    %v3817 = vadd.s32 %v3805, 4294967280
    %v3818 = vlaneseq
    %v3819 = vshrl.u32 %v3818, 7
    %v3820 = vsub.s32 %v3817, %v3819
    %v3821 = vrot.slane %v3668, %v3820
    %vm3822 = vcmask 195712
    %v3823 = vsel %vm3822, %v3821, %v3816
    %v3824 = vadd.s32 %v3805, 4294967272
    %v3825 = vlaneseq
    %v3826 = vshrl.u32 %v3825, 7
    %v3827 = vsub.s32 %v3824, %v3826
    %v3828 = vrot.slane %v3671, %v3827
    %vm3829 = vcmask 261312
    %v3830 = vsel %vm3829, %v3828, %v3823
    %v3831 = vadd.s32 %v3805, 4294967264
    %v3832 = vlaneseq
    %v3833 = vshrl.u32 %v3832, 7
    %v3834 = vsub.s32 %v3831, %v3833
    %v3835 = vrot.slane %v3674, %v3834
    %vm3836 = vcmask 326912
    %v3837 = vsel %vm3836, %v3835, %v3830
    %v3838 = vadd.s32 %v3805, 4294967256
    %v3839 = vlaneseq
    %v3840 = vshrl.u32 %v3839, 7
    %v3841 = vsub.s32 %v3838, %v3840
    %v3842 = vrot.slane %v3677, %v3841
    %vm3843 = vcmask 392512
    %v3844 = vsel %vm3843, %v3842, %v3837
    %v3845 = vadd.s32 %v3805, 4294967248
    %v3846 = vlaneseq
    %v3847 = vshrl.u32 %v3846, 7
    %v3848 = vsub.s32 %v3845, %v3847
    %v3849 = vrot.slane %v3680, %v3848
    %vm3850 = vcmask 458112
    %v3851 = vsel %vm3850, %v3849, %v3844
    %v3852 = vadd.s32 %v3805, 4294967240
    %v3853 = vlaneseq
    %v3854 = vshrl.u32 %v3853, 7
    %v3855 = vsub.s32 %v3852, %v3854
    %v3856 = vrot.slane %v3683, %v3855
    %vm3857 = vcmask 523712
    %v3858 = vsel %vm3857, %v3856, %v3851
    %v3859 = vadd.s32 %v3805, 4294967232
    %v3860 = vlaneseq
    %v3861 = vshrl.u32 %v3860, 7
    %v3862 = vsub.s32 %v3859, %v3861
    %v3863 = vrot.slane %v3686, %v3862
    %vm3864 = vcmask 589312
    %v3865 = vsel %vm3864, %v3863, %v3858
    %v3866 = vadd.s32 %v3805, 4294967224
    %v3867 = vlaneseq
    %v3868 = vshrl.u32 %v3867, 7
    %v3869 = vsub.s32 %v3866, %v3868
    %v3870 = vrot.slane %v3689, %v3869
    %vm3871 = vcmask 654912
    %v3872 = vsel %vm3871, %v3870, %v3865
    %v3873 = vadd.s32 %v3805, 4294967216
    %v3874 = vlaneseq
    %v3875 = vshrl.u32 %v3874, 7
    %v3876 = vsub.s32 %v3873, %v3875
    %v3877 = vrot.slane %v3692, %v3876
    %vm3878 = vcmask 720512
    %v3879 = vsel %vm3878, %v3877, %v3872
    %v3880 = vadd.s32 %v3805, 4294967208
    %v3881 = vlaneseq
    %v3882 = vshrl.u32 %v3881, 7
    %v3883 = vsub.s32 %v3880, %v3882
    %v3884 = vrot.slane %v3695, %v3883
    %vm3885 = vcmask 786112
    %v3886 = vsel %vm3885, %v3884, %v3879
    %v3887 = vadd.s32 %v3805, 4294967200
    %v3888 = vlaneseq
    %v3889 = vshrl.u32 %v3888, 7
    %v3890 = vsub.s32 %v3887, %v3889
    %v3891 = vrot.slane %v3698, %v3890
    %vm3892 = vcmask 851712
    %v3893 = vsel %vm3892, %v3891, %v3886
    %v3894 = vadd.s32 %v3805, 4294967192
    %v3895 = vlaneseq
    %v3896 = vshrl.u32 %v3895, 7
    %v3897 = vsub.s32 %v3894, %v3896
    %v3898 = vrot.slane %v3701, %v3897
    %vm3899 = vcmask 917312
    %v3900 = vsel %vm3899, %v3898, %v3893
    %v3901 = vadd.s32 %v3805, 4294967184
    %v3902 = vlaneseq
    %v3903 = vshrl.u32 %v3902, 7
    %v3904 = vsub.s32 %v3901, %v3903
    %v3905 = vrot.slane %v3704, %v3904
    %vm3906 = vcmask 982912
    %v3907 = vsel %vm3906, %v3905, %v3900
    %v3908 = vadd.s32 %v3805, 4294967176
    %v3909 = vlaneseq
    %v3910 = vshrl.u32 %v3909, 7
    %v3911 = vsub.s32 %v3908, %v3910
    %v3912 = vrot.slane %v3707, %v3911
    %vm3913 = vcmask 1048512
    %v3914 = vsel %vm3913, %v3912, %v3907
    %v3915 = vlaneseq
    %v3916 = vshrl.u32 %v3915, 7
    %v3917 = vsub.s32 %v3805, %v3916
    %v3918 = vrot.slane %v3710, %v3917
    %v3919 = vlaneseq
    %v3920 = vshrl.u32 %v3919, 7
    %v3921 = vsub.s32 %v3810, %v3920
    %v3922 = vrot.slane %v3713, %v3921
    %v3923 = vsel %vm3815, %v3922, %v3918
    %v3924 = vlaneseq
    %v3925 = vshrl.u32 %v3924, 7
    %v3926 = vsub.s32 %v3817, %v3925
    %v3927 = vrot.slane %v3716, %v3926
    %v3928 = vsel %vm3822, %v3927, %v3923
    %v3929 = vlaneseq
    %v3930 = vshrl.u32 %v3929, 7
    %v3931 = vsub.s32 %v3824, %v3930
    %v3932 = vrot.slane %v3719, %v3931
    %v3933 = vsel %vm3829, %v3932, %v3928
    %v3934 = vlaneseq
    %v3935 = vshrl.u32 %v3934, 7
    %v3936 = vsub.s32 %v3831, %v3935
    %v3937 = vrot.slane %v3722, %v3936
    %v3938 = vsel %vm3836, %v3937, %v3933
    %v3939 = vlaneseq
    %v3940 = vshrl.u32 %v3939, 7
    %v3941 = vsub.s32 %v3838, %v3940
    %v3942 = vrot.slane %v3725, %v3941
    %v3943 = vsel %vm3843, %v3942, %v3938
    %v3944 = vlaneseq
    %v3945 = vshrl.u32 %v3944, 7
    %v3946 = vsub.s32 %v3845, %v3945
    %v3947 = vrot.slane %v3728, %v3946
    %v3948 = vsel %vm3850, %v3947, %v3943
    %v3949 = vlaneseq
    %v3950 = vshrl.u32 %v3949, 7
    %v3951 = vsub.s32 %v3852, %v3950
    %v3952 = vrot.slane %v3731, %v3951
    %v3953 = vsel %vm3857, %v3952, %v3948
    %v3954 = vlaneseq
    %v3955 = vshrl.u32 %v3954, 7
    %v3956 = vsub.s32 %v3805, %v3955
    %v3957 = vrot.slane %v3734, %v3956
    %v3958 = vlaneseq
    %v3959 = vshrl.u32 %v3958, 7
    %v3960 = vsub.s32 %v3810, %v3959
    %v3961 = vrot.slane %v3737, %v3960
    %v3962 = vsel %vm3815, %v3961, %v3957
    %v3963 = vlaneseq
    %v3964 = vshrl.u32 %v3963, 7
    %v3965 = vsub.s32 %v3817, %v3964
    %v3966 = vrot.slane %v3740, %v3965
    %v3967 = vsel %vm3822, %v3966, %v3962
    %v3968 = vlaneseq
    %v3969 = vshrl.u32 %v3968, 7
    %v3970 = vsub.s32 %v3824, %v3969
    %v3971 = vrot.slane %v3743, %v3970
    %v3972 = vsel %vm3829, %v3971, %v3967
    %v3973 = vlaneseq
    %v3974 = vshrl.u32 %v3973, 7
    %v3975 = vsub.s32 %v3831, %v3974
    %v3976 = vrot.slane %v3746, %v3975
    %v3977 = vsel %vm3836, %v3976, %v3972
    %v3978 = vlaneseq
    %v3979 = vshrl.u32 %v3978, 7
    %v3980 = vsub.s32 %v3838, %v3979
    %v3981 = vrot.slane %v3749, %v3980
    %v3982 = vsel %vm3843, %v3981, %v3977
    %v3983 = vlaneseq
    %v3984 = vshrl.u32 %v3983, 7
    %v3985 = vsub.s32 %v3845, %v3984
    %v3986 = vrot.slane %v3752, %v3985
    %v3987 = vsel %vm3850, %v3986, %v3982
    %v3988 = vlaneseq
    %v3989 = vshrl.u32 %v3988, 7
    %v3990 = vsub.s32 %v3852, %v3989
    %v3991 = vrot.slane %v3755, %v3990
    %v3992 = vsel %vm3857, %v3991, %v3987
    %v3993 = vlaneseq
    %v3994 = vshrl.u32 %v3993, 7
    %v3995 = vsub.s32 %v3859, %v3994
    %v3996 = vrot.slane %v3758, %v3995
    %v3997 = vsel %vm3864, %v3996, %v3992
    %v3998 = vlaneseq
    %v3999 = vshrl.u32 %v3998, 7
    %v4000 = vsub.s32 %v3866, %v3999
    %v4001 = vrot.slane %v3761, %v4000
    %v4002 = vsel %vm3871, %v4001, %v3997
    %v4003 = vlaneseq
    %v4004 = vshrl.u32 %v4003, 7
    %v4005 = vsub.s32 %v3873, %v4004
    %v4006 = vrot.slane %v3764, %v4005
    %v4007 = vsel %vm3878, %v4006, %v4002
    %v4008 = vlaneseq
    %v4009 = vshrl.u32 %v4008, 7
    %v4010 = vsub.s32 %v3880, %v4009
    %v4011 = vrot.slane %v3767, %v4010
    %v4012 = vsel %vm3885, %v4011, %v4007
    %v4013 = vlaneseq
    %v4014 = vshrl.u32 %v4013, 7
    %v4015 = vsub.s32 %v3887, %v4014
    %v4016 = vrot.slane %v3770, %v4015
    %v4017 = vsel %vm3892, %v4016, %v4012
    %v4018 = vlaneseq
    %v4019 = vshrl.u32 %v4018, 7
    %v4020 = vsub.s32 %v3894, %v4019
    %v4021 = vrot.slane %v3773, %v4020
    %v4022 = vsel %vm3899, %v4021, %v4017
    %v4023 = vlaneseq
    %v4024 = vshrl.u32 %v4023, 7
    %v4025 = vsub.s32 %v3901, %v4024
    %v4026 = vrot.slane %v3776, %v4025
    %v4027 = vsel %vm3906, %v4026, %v4022
    %v4028 = vlaneseq
    %v4029 = vshrl.u32 %v4028, 7
    %v4030 = vsub.s32 %v3908, %v4029
    %v4031 = vrot.slane %v3779, %v4030
    %v4032 = vsel %vm3913, %v4031, %v4027
    %v4033 = vlaneseq
    %v4034 = vshrl.u32 %v4033, 7
    %v4035 = vsub.s32 %v3805, %v4034
    %v4036 = vrot.slane %v3782, %v4035
    %v4037 = vlaneseq
    %v4038 = vshrl.u32 %v4037, 7
    %v4039 = vsub.s32 %v3810, %v4038
    %v4040 = vrot.slane %v3785, %v4039
    %v4041 = vsel %vm3815, %v4040, %v4036
    %v4042 = vlaneseq
    %v4043 = vshrl.u32 %v4042, 7
    %v4044 = vsub.s32 %v3817, %v4043
    %v4045 = vrot.slane %v3788, %v4044
    %v4046 = vsel %vm3822, %v4045, %v4041
    %v4047 = vlaneseq
    %v4048 = vshrl.u32 %v4047, 7
    %v4049 = vsub.s32 %v3824, %v4048
    %v4050 = vrot.slane %v3791, %v4049
    %v4051 = vsel %vm3829, %v4050, %v4046
    %v4052 = vlaneseq
    %v4053 = vshrl.u32 %v4052, 7
    %v4054 = vsub.s32 %v3831, %v4053
    %v4055 = vrot.slane %v3794, %v4054
    %v4056 = vsel %vm3836, %v4055, %v4051
    %v4057 = vlaneseq
    %v4058 = vshrl.u32 %v4057, 7
    %v4059 = vsub.s32 %v3838, %v4058
    %v4060 = vrot.slane %v3797, %v4059
    %v4061 = vsel %vm3843, %v4060, %v4056
    %v4062 = vlaneseq
    %v4063 = vshrl.u32 %v4062, 7
    %v4064 = vsub.s32 %v3845, %v4063
    %v4065 = vrot.slane %v3800, %v4064
    %v4066 = vsel %vm3850, %v4065, %v4061
    %v4067 = vlaneseq
    %v4068 = vshrl.u32 %v4067, 7
    %v4069 = vsub.s32 %v3852, %v4068
    %v4070 = vrot.slane %v3803, %v4069
    %v4071 = vsel %vm3857, %v4070, %v4066
    %vm4072 = vcmask 1041409
    %v4073 = vsel %vm4072, %v4032, %v3914
    %v4074 = vsel %vm4072, %v4071, %v3953
    %vm4077 = vcmask 1041408
    %v4078 = vsel %vm4077, %v4073, 0.0
    %vm4079 = vcmask 517120
    %v4080 = vsel %vm4079, %v4074, 0.0
    %v4081 = vadd.f32 %v4078, %v4080
    %4082 = vadd.xlane.f32.xlu0 %v4081
    %v4083 = vpop.xlane.xlu0 %4082
    %s4084 = sld [smem:[#allocation2]]
    %v4085 = vstv %s4084
    %v4086 = vadd.f32 %v4083, %v4085
    %vm4087 = vcmask 1024
    %4088 = vst.msk [vmem:[%s4] sm:$0x3] %vm4087, %v4086
    // Predicated region
    $region30: #{tpu_custom_call.1} parent=1 // pred_check
      _
    $region31: #{tpu_custom_call.1} parent=1 // pred_check_branch
      %4090 = sbr.rel (0) target = $region33
    $region32: #{tpu_custom_call.1} parent=1 // pred_region
      _
    $region33: #{tpu_custom_call.1} parent=1 // pred_fallthru
      _
    // Predicated region
    $region34: #{tpu_custom_call.1} parent=1 // pred_check
      _
    $region35: #{tpu_custom_call.1} parent=1 // pred_check_branch
      %4092 = sbr.rel (0) target = $region37
    $region36: #{tpu_custom_call.1} parent=1 // pred_region
      _
    $region37: #{tpu_custom_call.1} parent=1 // pred_fallthru
      _
    %4093 = vsyncpa [#allocation4], 1
    %4094 = vsyncpa [#allocation6], 1

</llo_original>
